<compile_context>
chip_gen: v5e
topology: v5e:2x2
jax: 0.10.0
libtpu: 0.0.40
codegen_flags: <defaults>
</compile_context>

<pallas_src>
import math

import jax
import jax.numpy as jnp
from jax.experimental import pallas as pl
from jax.experimental.pallas import tpu as pltpu

LATENT_DIM = 100
H1, H2, H3 = 256, 512, 1024
OUT_DIM = 784  # 1 * 28 * 28


def _round_up(x, m):
    return (x + m - 1) // m * m


def _device_kind():
    try:
        return jax.devices()[0].device_kind.lower()
    except Exception:
        return ""


def _default_batch_tile(kind):
    # v6e/v7x: 256-wide MXU and ~1 us/tile at TB=256 -> larger tiles amortize
    # the ~0.35 us per-grid-step cost.  v5e (4x128^2 MXU) is compute-bound at
    # TB=128 already, and its scoped-VMEM default is only 16 MiB.
    if "v6" in kind or "v7" in kind:
        return 512
    if "v5" in kind or "v4" in kind or "v3" in kind or "v2" in kind:
        return 128
    return 256


def _pick_batch_tile(B, batch_tile=None):
    kind = _device_kind()
    if batch_tile is None:
        batch_tile = _default_batch_tile(kind)
    B8 = _round_up(max(B, 1), 8)
    TB = min(_round_up(batch_tile, 8), B8)
    # 2-TensorCore chips (v7x, v4 megacore): make sure the "parallel" batch
    # grid axis has at least two blocks so neither core idles.
    if ("v7" in kind or "v4" in kind) and B8 >= 16:
        TB = min(TB, _round_up(-(-B8 // 2), 8))
    return max(TB, 8)


def _generator_kernel(x_ref,
                      w1_ref, b1_ref,
                      w2_ref, b2_ref,
                      w3_ref, b3_ref,
                      w4_ref, b4_ref,
                      out_ref):
    # Layer 1: Linear(100->256) + ReLU  (bf16 MXU operands, f32 accumulation)
    x = x_ref[...].astype(jnp.bfloat16)
    h = jnp.dot(x, w1_ref[...], preferred_element_type=jnp.float32)
    h = jnp.maximum(h + b1_ref[...], 0.0)
    # Layer 2: Linear(256->512) + ReLU
    h = jnp.dot(h.astype(jnp.bfloat16), w2_ref[...],
                preferred_element_type=jnp.float32)
    h = jnp.maximum(h + b2_ref[...], 0.0)
    # Layer 3: Linear(512->1024) + ReLU
    h = jnp.dot(h.astype(jnp.bfloat16), w3_ref[...],
                preferred_element_type=jnp.float32)
    h = jnp.maximum(h + b3_ref[...], 0.0)
    # Layer 4: Linear(1024->784) + Tanh, stored at the true 784 width.
    h = jnp.dot(h.astype(jnp.bfloat16), w4_ref[...],
                preferred_element_type=jnp.float32)
    out_ref[...] = jnp.tanh(h + b4_ref[...]).astype(out_ref.dtype)


def _resident_spec(shape):
    # Same block for every grid step -> weight/bias stays resident in VMEM.
    return pl.BlockSpec(shape, lambda i: tuple(0 for _ in shape))


def prepare_params(params_f32):
    """Convert f32 (in,out) params into the kernel layout:
    bf16 weights (halves weight HBM traffic), f32 biases. No padding needed."""
    out = []
    for w, b in params_f32:
        out.append(w.astype(jnp.bfloat16))
        out.append(b.astype(jnp.float32))
    return tuple(out)


def generator_forward(x, kparams, *, batch_tile=None):
    """x: (B, LATENT_DIM) float32 -> (B, 1, 28, 28) float32."""
    B = x.shape[0]
    w1, b1, w2, b2, w3, b3, w4, b4 = kparams

    TB = _pick_batch_tile(B, batch_tile)
    n_blocks = pl.cdiv(B, TB)
    B_pad = n_blocks * TB

    # Only the batch dim is padded (often a no-op); latent dim stays 100 and
    # the bf16 cast happens in-kernel, so no standalone pad/cast XLA kernel.
    x_in = x if B_pad == B else jnp.pad(x, ((0, B_pad - B), (0, 0)))

    flops = 2 * B_pad * (LATENT_DIM * H1 + H1 * H2 + H2 * H3 + H3 * OUT_DIM)
    weight_elems = (LATENT_DIM * H1 + H1 * H2 + H2 * H3 + H3 * OUT_DIM)
    bias_elems = H1 + H2 + H3 + OUT_DIM
    bytes_accessed = (
        B_pad * LATENT_DIM * 4       # f32 input
        + weight_elems * 2           # bf16 weights
        + bias_elems * 4             # f32 biases
        + B_pad * OUT_DIM * 4        # f32 output
    )

    out = pl.pallas_call(
        _generator_kernel,
        out_shape=jax.ShapeDtypeStruct((B_pad, OUT_DIM), jnp.float32),
        grid=(n_blocks,),
        in_specs=[
            pl.BlockSpec((TB, LATENT_DIM), lambda i: (i, 0)),
            _resident_spec(w1.shape), _resident_spec(b1.shape),
            _resident_spec(w2.shape), _resident_spec(b2.shape),
            _resident_spec(w3.shape), _resident_spec(b3.shape),
            _resident_spec(w4.shape), _resident_spec(b4.shape),
        ],
        out_specs=pl.BlockSpec((TB, OUT_DIM), lambda i: (i, 0)),
        compiler_params=pltpu.CompilerParams(
            dimension_semantics=("parallel",),
        ),
        cost_estimate=pl.CostEstimate(
            flops=flops,
            transcendentals=B_pad * OUT_DIM,
            bytes_accessed=bytes_accessed,
        ),
    )(x_in, w1, b1, w2, b2, w3, b3, w4, b4)

    if B_pad != B:
        out = out[:B]
    # Same as PyTorch output.view(B, 1, 28, 28); contiguous, so reshape only.
    return out.reshape(B, 1, 28, 28)


def init_params(key):
    """Deterministic init mimicking PyTorch nn.Linear default:
    U(-1/sqrt(fan_in), 1/sqrt(fan_in)). Weights stored as (in, out)."""
    dims = (LATENT_DIM, H1, H2, H3, OUT_DIM)
    params = []
    for i in range(len(dims) - 1):
        fan_in, fan_out = dims[i], dims[i + 1]
        key, kw, kb = jax.random.split(key, 3)
        bound = 1.0 / math.sqrt(fan_in)
        w = jax.random.uniform(kw, (fan_in, fan_out), jnp.float32, -bound, bound)
        b = jax.random.uniform(kb, (1, fan_out), jnp.float32, -bound, bound)
        params.append((w, b))
    return params


def reference_forward_f32(x, params_f32):
    """Pure f32 reference (the PyTorch semantics)."""
    h = x
    for i, (w, b) in enumerate(params_f32):
        h = h @ w + b
        h = jnp.maximum(h, 0.0) if i < len(params_f32) - 1 else jnp.tanh(h)
    return h.reshape(x.shape[0], 1, 28, 28)


def reference_forward_bf16emu(x, params_f32):
    """Emulates the kernel's mixed precision: bf16 matmul operands,
    f32 accumulation / bias / activations."""
    h = x.astype(jnp.bfloat16).astype(jnp.float32)
    for i, (w, b) in enumerate(params_f32):
        w_bf = w.astype(jnp.bfloat16).astype(jnp.float32)
        h = h @ w_bf + b
        if i < len(params_f32) - 1:
            h = jnp.maximum(h, 0.0).astype(jnp.bfloat16).astype(jnp.float32)
        else:
            h = jnp.tanh(h)
    return h.reshape(x.shape[0], 1, 28, 28)


if __name__ == "__main__":
    key = jax.random.PRNGKey(0)
    key, kx = jax.random.split(key)

    B = 32
    x = jax.random.normal(kx, (B, LATENT_DIM), jnp.float32)
    params = init_params(key)
    kparams = prepare_params(params)

    ref_emu = reference_forward_bf16emu(x, params)
    ref_f32 = reference_forward_f32(x, params)

    # 1) Generation-tuned default tile (usually a single grid step at B=32).
    fwd_default = jax.jit(lambda xx: generator_forward(xx, kparams))
    out_default = jax.block_until_ready(fwd_default(x))

    # 2) Small tile to exercise a multi-step, pipelined grid (blocks of 16).
    fwd_tiled = jax.jit(lambda xx: generator_forward(xx, kparams, batch_tile=16))
    out_tiled = jax.block_until_ready(fwd_tiled(x))

    for out in (out_default, out_tiled):
        assert out.shape == (B, 1, 28, 28), out.shape
        assert out.dtype == jnp.float32, out.dtype
        # Tight check vs. a reference emulating the kernel's bf16/f32 mix.
        assert jnp.allclose(out, ref_emu, atol=1e-3, rtol=1e-3), \
            "mismatch vs bf16-emulating reference"
        # Loose check vs. the pure-f32 PyTorch-semantics reference.
        assert jnp.allclose(out, ref_f32, atol=2e-2, rtol=2e-2), \
            "mismatch vs f32 reference"

    print("KERNEL_OK")
</pallas_src>

<mosaic_0001>
module attributes {stable_mosaic.version = 11 : i64} {
  func.func @_generator_kernel(%arg0: i32, %arg1: memref<32x100xf32, #tpu.memory_space<vmem>>, %arg2: memref<100x256xbf16, #tpu.memory_space<vmem>>, %arg3: memref<1x256xf32, #tpu.memory_space<vmem>>, %arg4: memref<256x512xbf16, #tpu.memory_space<vmem>>, %arg5: memref<1x512xf32, #tpu.memory_space<vmem>>, %arg6: memref<512x1024xbf16, #tpu.memory_space<vmem>>, %arg7: memref<1x1024xf32, #tpu.memory_space<vmem>>, %arg8: memref<1024x784xbf16, #tpu.memory_space<vmem>>, %arg9: memref<1x784xf32, #tpu.memory_space<vmem>>, %arg10: memref<32x784xf32, #tpu.memory_space<vmem>>) attributes {dimension_semantics = [#tpu.dimension_semantics<parallel>], iteration_bounds = array<i64: 1>, scalar_prefetch = 0 : i64, scratch_operands = 0 : i64, tpu.core_type = #tpu.core_type<tc>, window_params = [{transform_indices = @transform_0, window_bounds = array<i64: 32, 100>}, {pipeline_mode = #tpu.pipeline_mode<synchronous>, transform_indices = @transform_1, window_bounds = array<i64: 100, 256>}, {pipeline_mode = #tpu.pipeline_mode<synchronous>, transform_indices = @transform_2, window_bounds = array<i64: 1, 256>}, {pipeline_mode = #tpu.pipeline_mode<synchronous>, transform_indices = @transform_3, window_bounds = array<i64: 256, 512>}, {pipeline_mode = #tpu.pipeline_mode<synchronous>, transform_indices = @transform_4, window_bounds = array<i64: 1, 512>}, {pipeline_mode = #tpu.pipeline_mode<synchronous>, transform_indices = @transform_5, window_bounds = array<i64: 512, 1024>}, {pipeline_mode = #tpu.pipeline_mode<synchronous>, transform_indices = @transform_6, window_bounds = array<i64: 1, 1024>}, {pipeline_mode = #tpu.pipeline_mode<synchronous>, transform_indices = @transform_7, window_bounds = array<i64: 1024, 784>}, {pipeline_mode = #tpu.pipeline_mode<synchronous>, transform_indices = @transform_8, window_bounds = array<i64: 1, 784>}, {transform_indices = @transform_9, window_bounds = array<i64: 32, 784>}]} {
    %c0 = arith.constant 0 : index
    %c0_0 = arith.constant 0 : index
    %0 = vector.load %arg1[%c0, %c0_0] : memref<32x100xf32, #tpu.memory_space<vmem>>, vector<32x100xf32>
    %1 = arith.truncf %0 : vector<32x100xf32> to vector<32x100xbf16>
    %c0_1 = arith.constant 0 : index
    %c0_2 = arith.constant 0 : index
    %2 = vector.load %arg2[%c0_1, %c0_2] : memref<100x256xbf16, #tpu.memory_space<vmem>>, vector<100x256xbf16>
    %cst = arith.constant dense<0.000000e+00> : vector<32x256xf32>
    %3 = tpu.matmul %1, %2, %cst {dimension_numbers = #tpu.dot_dimension_numbers<[1], [0], [0], [1], [0, 0, 1, 1], [], []>} : vector<32x100xbf16>, vector<100x256xbf16>, vector<32x256xf32> -> vector<32x256xf32>
    %c0_3 = arith.constant 0 : index
    %c0_4 = arith.constant 0 : index
    %4 = vector.load %arg3[%c0_3, %c0_4] : memref<1x256xf32, #tpu.memory_space<vmem>>, vector<1x256xf32>
    %5 = vector.broadcast %4 : vector<1x256xf32> to vector<32x256xf32>
    %6 = arith.addf %3, %5 : vector<32x256xf32>
    %cst_5 = arith.constant 0.000000e+00 : f32
    %7 = vector.broadcast %cst_5 : f32 to vector<32x256xf32>
    %8 = arith.maximumf %6, %7 : vector<32x256xf32>
    %9 = arith.truncf %8 : vector<32x256xf32> to vector<32x256xbf16>
    %c0_6 = arith.constant 0 : index
    %c0_7 = arith.constant 0 : index
    %10 = vector.load %arg4[%c0_6, %c0_7] : memref<256x512xbf16, #tpu.memory_space<vmem>>, vector<256x512xbf16>
    %cst_8 = arith.constant dense<0.000000e+00> : vector<32x512xf32>
    %11 = tpu.matmul %9, %10, %cst_8 {dimension_numbers = #tpu.dot_dimension_numbers<[1], [0], [0], [1], [0, 0, 1, 1], [], []>} : vector<32x256xbf16>, vector<256x512xbf16>, vector<32x512xf32> -> vector<32x512xf32>
    %c0_9 = arith.constant 0 : index
    %c0_10 = arith.constant 0 : index
    %12 = vector.load %arg5[%c0_9, %c0_10] : memref<1x512xf32, #tpu.memory_space<vmem>>, vector<1x512xf32>
    %13 = vector.broadcast %12 : vector<1x512xf32> to vector<32x512xf32>
    %14 = arith.addf %11, %13 : vector<32x512xf32>
    %cst_11 = arith.constant 0.000000e+00 : f32
    %15 = vector.broadcast %cst_11 : f32 to vector<32x512xf32>
    %16 = arith.maximumf %14, %15 : vector<32x512xf32>
    %17 = arith.truncf %16 : vector<32x512xf32> to vector<32x512xbf16>
    %c0_12 = arith.constant 0 : index
    %c0_13 = arith.constant 0 : index
    %18 = vector.load %arg6[%c0_12, %c0_13] : memref<512x1024xbf16, #tpu.memory_space<vmem>>, vector<512x1024xbf16>
    %cst_14 = arith.constant dense<0.000000e+00> : vector<32x1024xf32>
    %19 = tpu.matmul %17, %18, %cst_14 {dimension_numbers = #tpu.dot_dimension_numbers<[1], [0], [0], [1], [0, 0, 1, 1], [], []>} : vector<32x512xbf16>, vector<512x1024xbf16>, vector<32x1024xf32> -> vector<32x1024xf32>
    %c0_15 = arith.constant 0 : index
    %c0_16 = arith.constant 0 : index
    %20 = vector.load %arg7[%c0_15, %c0_16] : memref<1x1024xf32, #tpu.memory_space<vmem>>, vector<1x1024xf32>
    %21 = vector.broadcast %20 : vector<1x1024xf32> to vector<32x1024xf32>
    %22 = arith.addf %19, %21 : vector<32x1024xf32>
    %cst_17 = arith.constant 0.000000e+00 : f32
    %23 = vector.broadcast %cst_17 : f32 to vector<32x1024xf32>
    %24 = arith.maximumf %22, %23 : vector<32x1024xf32>
    %25 = arith.truncf %24 : vector<32x1024xf32> to vector<32x1024xbf16>
    %c0_18 = arith.constant 0 : index
    %c0_19 = arith.constant 0 : index
    %26 = vector.load %arg8[%c0_18, %c0_19] : memref<1024x784xbf16, #tpu.memory_space<vmem>>, vector<1024x784xbf16>
    %cst_20 = arith.constant dense<0.000000e+00> : vector<32x784xf32>
    %27 = tpu.matmul %25, %26, %cst_20 {dimension_numbers = #tpu.dot_dimension_numbers<[1], [0], [0], [1], [0, 0, 1, 1], [], []>} : vector<32x1024xbf16>, vector<1024x784xbf16>, vector<32x784xf32> -> vector<32x784xf32>
    %c0_21 = arith.constant 0 : index
    %c0_22 = arith.constant 0 : index
    %28 = vector.load %arg9[%c0_21, %c0_22] : memref<1x784xf32, #tpu.memory_space<vmem>>, vector<1x784xf32>
    %29 = vector.broadcast %28 : vector<1x784xf32> to vector<32x784xf32>
    %30 = arith.addf %27, %29 : vector<32x784xf32>
    %31 = math.tanh %30 : vector<32x784xf32>
    %c0_23 = arith.constant 0 : index
    %c0_24 = arith.constant 0 : index
    %32 = vector.load %arg10[%c0_23, %c0_24] : memref<32x784xf32, #tpu.memory_space<vmem>>, vector<32x784xf32>
    tpu.vector_store %arg10[%c0_23, %c0_24], %31 {strides = array<i32>} : memref<32x784xf32, #tpu.memory_space<vmem>>, vector<32x784xf32>,
    return
  }
  func.func @transform_0(%arg0: i32) -> (i32, i32) {
    %c0_i32 = arith.constant 0 : i32
    %c0_i32_0 = arith.constant 0 : i32
    return %arg0, %c0_i32 : i32, i32
  }
  func.func @transform_1(%arg0: i32) -> (i32, i32) {
    %c0_i32 = arith.constant 0 : i32
    %c0_i32_0 = arith.constant 0 : i32
    %c0_i32_1 = arith.constant 0 : i32
    return %c0_i32, %c0_i32_0 : i32, i32
  }
  func.func @transform_2(%arg0: i32) -> (i32, i32) {
    %c0_i32 = arith.constant 0 : i32
    %c0_i32_0 = arith.constant 0 : i32
    %c0_i32_1 = arith.constant 0 : i32
    return %c0_i32, %c0_i32_0 : i32, i32
  }
  func.func @transform_3(%arg0: i32) -> (i32, i32) {
    %c0_i32 = arith.constant 0 : i32
    %c0_i32_0 = arith.constant 0 : i32
    %c0_i32_1 = arith.constant 0 : i32
    return %c0_i32, %c0_i32_0 : i32, i32
  }
  func.func @transform_4(%arg0: i32) -> (i32, i32) {
    %c0_i32 = arith.constant 0 : i32
    %c0_i32_0 = arith.constant 0 : i32
    %c0_i32_1 = arith.constant 0 : i32
    return %c0_i32, %c0_i32_0 : i32, i32
  }
  func.func @transform_5(%arg0: i32) -> (i32, i32) {
    %c0_i32 = arith.constant 0 : i32
    %c0_i32_0 = arith.constant 0 : i32
    %c0_i32_1 = arith.constant 0 : i32
    return %c0_i32, %c0_i32_0 : i32, i32
  }
  func.func @transform_6(%arg0: i32) -> (i32, i32) {
    %c0_i32 = arith.constant 0 : i32
    %c0_i32_0 = arith.constant 0 : i32
    %c0_i32_1 = arith.constant 0 : i32
    return %c0_i32, %c0_i32_0 : i32, i32
  }
  func.func @transform_7(%arg0: i32) -> (i32, i32) {
    %c0_i32 = arith.constant 0 : i32
    %c0_i32_0 = arith.constant 0 : i32
    %c0_i32_1 = arith.constant 0 : i32
    return %c0_i32, %c0_i32_0 : i32, i32
  }
  func.func @transform_8(%arg0: i32) -> (i32, i32) {
    %c0_i32 = arith.constant 0 : i32
    %c0_i32_0 = arith.constant 0 : i32
    %c0_i32_1 = arith.constant 0 : i32
    return %c0_i32, %c0_i32_0 : i32, i32
  }
  func.func @transform_9(%arg0: i32) -> (i32, i32) {
    %c0_i32 = arith.constant 0 : i32
    %c0_i32_0 = arith.constant 0 : i32
    return %arg0, %c0_i32 : i32, i32
  }
}

</mosaic_0001>

<llo_original>
// kernel: _lambda_.1
$region0: #{_lambda_.1}
  #allocation0 [shape = 'u32[]', space=smem, size = 0x4, offset = 0x4, fixed_abs, tag = 'smem constant byte address 0x4 - core index']
  #allocation1 [shape = 'u32[72,128]{1,0:T(1,128)}', space=vmem, size = 0x9000, scoped, tag = 'internal scratch']
  %s0 = inlined_call_operand.hbm [shape: f32[32,100], index: 0, kind: input, shape index: {}]
  %s1 = inlined_call_operand.hbm [shape: bf16[100,256], index: 1, kind: input, shape index: {}]
  %s2 = inlined_call_operand.hbm [shape: f32[1,256], index: 2, kind: input, shape index: {}]
  %s3 = inlined_call_operand.hbm [shape: bf16[256,512], index: 3, kind: input, shape index: {}]
  %s4 = inlined_call_operand.hbm [shape: f32[1,512], index: 4, kind: input, shape index: {}]
  %s5 = inlined_call_operand.hbm [shape: bf16[512,1024], index: 5, kind: input, shape index: {}]
  %s6 = inlined_call_operand.hbm [shape: f32[1,1024], index: 6, kind: input, shape index: {}]
  %s7 = inlined_call_operand.hbm [shape: bf16[1024,784], index: 7, kind: input, shape index: {}]
  %s8 = inlined_call_operand.hbm [shape: f32[1,784], index: 8, kind: input, shape index: {}]
  %s9 = inlined_call_operand.vmem [shape: f32[32,784], index: 9, kind: output, shape index: {}]
  %s10 = sld [smem:[#allocation0]]
  $region82: #{_lambda_.1} parent=0
    _
  %s12 = ssub.s32 1, %s10
  %s13 = scalar_select 0, %s12, %s10
  $region1: #{_lambda_.1} parent=0
    #allocation2 [shape = 'u8[16384]{0}', space=vmem, size = 0x4000, scoped, tag = 'input window, operand 0, single buffered']
    #allocation3 [shape = 's32[1]{0}', space=sflag, size = 0x4, scoped, tag = 'scoped memory for _lambda_.1']
    #allocation4 [shape = 'u8[53248]{0}', space=vmem, size = 0xd000, scoped, tag = 'input window, operand 1, single buffered']
    #allocation5 [shape = 's32[1]{0}', space=sflag, size = 0x4, scoped, tag = 'scoped memory for _lambda_.1']
    #allocation6 [shape = 'u8[1024]{0}', space=vmem, size = 0x400, scoped, tag = 'input window, operand 2, single buffered']
    #allocation7 [shape = 'u8[262144]{0}', space=vmem, size = 0x40000, scoped, tag = 'input window, operand 3, single buffered']
    #allocation8 [shape = 's32[1]{0}', space=sflag, size = 0x4, scoped, tag = 'scoped memory for _lambda_.1']
    #allocation9 [shape = 'u8[2048]{0}', space=vmem, size = 0x800, scoped, tag = 'input window, operand 4, single buffered']
    #allocation10 [shape = 'u8[1048576]{0}', space=vmem, size = 0x100000, scoped, tag = 'input window, operand 5, single buffered']
    #allocation11 [shape = 's32[1]{0}', space=sflag, size = 0x4, scoped, tag = 'scoped memory for _lambda_.1']
    #allocation12 [shape = 'u8[4096]{0}', space=vmem, size = 0x1000, scoped, tag = 'input window, operand 6, single buffered']
    #allocation13 [shape = 'u8[1835008]{0}', space=vmem, size = 0x1c0000, scoped, tag = 'input window, operand 7, single buffered']
    #allocation14 [shape = 's32[1]{0}', space=sflag, size = 0x4, scoped, tag = 'scoped memory for _lambda_.1']
    #allocation15 [shape = 'u8[3584]{0}', space=vmem, size = 0x1000, scoped, tag = 'input window, operand 8, single buffered']
    %14 = vsyncpa [#allocation3], 0
    %15 = vsyncpa [#allocation5], 0
    %16 = vsyncpa [#allocation8], 0
    %17 = vsyncpa [#allocation11], 0
    %18 = vsyncpa [#allocation14], 0
    // Predicated region
    $region2: #{_lambda_.1} parent=1 // pred_check
      _
    $region3: #{_lambda_.1} parent=1 // pred_check_branch
      %20 = sbr.rel (0) target = $region5
    $region4: #{_lambda_.1} parent=1 // pred_region
      %22 = vsyncadd [#allocation3], 0
      %s23 = sshll.u32 %s0, 4
      %s24 = int_to_ptr.hbm [resolvable:$true] %s23
      %s25 = sshll.u32 [#allocation2], 4
      %s26 = int_to_ptr.vmem [resolvable:$true] %s25
      %31 = dma.hbm_to_vmem [thread:$0]  %s24, 512, %s26, [#allocation3], 128, 128, 8
    $region5: #{_lambda_.1} parent=1 // pred_fallthru
      _
    // Predicated region
    $region6: #{_lambda_.1} parent=1 // pred_check
      _
    $region7: #{_lambda_.1} parent=1 // pred_check_branch
      %33 = sbr.rel (0) target = $region9
    $region8: #{_lambda_.1} parent=1 // pred_region
      %35 = vsyncadd [#allocation5], 0
      %s36 = sshll.u32 %s1, 4
      %s37 = int_to_ptr.hbm [resolvable:$true] %s36
      %s38 = sshll.u32 [#allocation4], 4
      %s39 = int_to_ptr.vmem [resolvable:$true] %s38
      %44 = dma.hbm_to_vmem [thread:$0]  %s37, 1664, %s39, [#allocation5], 128, 128, 8
    $region9: #{_lambda_.1} parent=1 // pred_fallthru
      _
    // Predicated region
    $region10: #{_lambda_.1} parent=1 // pred_check
      _
    $region11: #{_lambda_.1} parent=1 // pred_check_branch
      %46 = sbr.rel (0) target = $region13
    $region12: #{_lambda_.1} parent=1 // pred_region
      %48 = vsyncadd [#allocation5], 0
      %s50 = sshll.u32 %s2, 4
      %s51 = int_to_ptr.hbm [resolvable:$true] %s50
      %s52 = sshll.u32 [#allocation6], 4
      %s53 = int_to_ptr.vmem [resolvable:$true] %s52
      %55 = dma.hbm_to_vmem [thread:$0]  %s51, 32, %s53, [#allocation5]
    $region13: #{_lambda_.1} parent=1 // pred_fallthru
      _
    // Predicated region
    $region14: #{_lambda_.1} parent=1 // pred_check
      _
    $region15: #{_lambda_.1} parent=1 // pred_check_branch
      %57 = sbr.rel (0) target = $region17
    $region16: #{_lambda_.1} parent=1 // pred_region
      %59 = vsyncadd [#allocation8], 0
      %s60 = sshll.u32 %s3, 4
      %s61 = int_to_ptr.hbm [resolvable:$true] %s60
      %s62 = sshll.u32 [#allocation7], 4
      %s63 = int_to_ptr.vmem [resolvable:$true] %s62
      %68 = dma.hbm_to_vmem [thread:$0]  %s61, 8192, %s63, [#allocation8], 256, 256, 16
    $region17: #{_lambda_.1} parent=1 // pred_fallthru
      _
    // Predicated region
    $region18: #{_lambda_.1} parent=1 // pred_check
      _
    $region19: #{_lambda_.1} parent=1 // pred_check_branch
      %70 = sbr.rel (0) target = $region21
    $region20: #{_lambda_.1} parent=1 // pred_region
      %72 = vsyncadd [#allocation8], 0
      %s74 = sshll.u32 %s4, 4
      %s75 = int_to_ptr.hbm [resolvable:$true] %s74
      %s76 = sshll.u32 [#allocation9], 4
      %s77 = int_to_ptr.vmem [resolvable:$true] %s76
      %79 = dma.hbm_to_vmem [thread:$0]  %s75, 64, %s77, [#allocation8]
    $region21: #{_lambda_.1} parent=1 // pred_fallthru
      _
    // Predicated region
    $region22: #{_lambda_.1} parent=1 // pred_check
      _
    $region23: #{_lambda_.1} parent=1 // pred_check_branch
      %81 = sbr.rel (0) target = $region25
    $region24: #{_lambda_.1} parent=1 // pred_region
      %83 = vsyncadd [#allocation11], 0
      %s84 = sshll.u32 %s5, 4
      %s85 = int_to_ptr.hbm [resolvable:$true] %s84
      %s86 = sshll.u32 [#allocation10], 4
      %s87 = int_to_ptr.vmem [resolvable:$true] %s86
      %92 = dma.hbm_to_vmem [thread:$0]  %s85, 32768, %s87, [#allocation11], 512, 512, 32
    $region25: #{_lambda_.1} parent=1 // pred_fallthru
      _
    // Predicated region
    $region26: #{_lambda_.1} parent=1 // pred_check
      _
    $region27: #{_lambda_.1} parent=1 // pred_check_branch
      %94 = sbr.rel (0) target = $region29
    $region28: #{_lambda_.1} parent=1 // pred_region
      %96 = vsyncadd [#allocation11], 0
      %s98 = sshll.u32 %s6, 4
      %s99 = int_to_ptr.hbm [resolvable:$true] %s98
      %s100 = sshll.u32 [#allocation12], 4
      %s101 = int_to_ptr.vmem [resolvable:$true] %s100
      %103 = dma.hbm_to_vmem [thread:$0]  %s99, 128, %s101, [#allocation11]
    $region29: #{_lambda_.1} parent=1 // pred_fallthru
      _
    // Predicated region
    $region30: #{_lambda_.1} parent=1 // pred_check
      _
    $region31: #{_lambda_.1} parent=1 // pred_check_branch
      %105 = sbr.rel (0) target = $region33
    $region32: #{_lambda_.1} parent=1 // pred_region
      %107 = vsyncadd [#allocation14], 0
      %s108 = sshll.u32 %s7, 4
      %s109 = int_to_ptr.hbm [resolvable:$true] %s108
      %s110 = sshll.u32 [#allocation13], 4
      %s111 = int_to_ptr.vmem [resolvable:$true] %s110
      %116 = dma.hbm_to_vmem [thread:$0]  %s109, 57344, %s111, [#allocation14], 448, 448, 28
    $region33: #{_lambda_.1} parent=1 // pred_fallthru
      _
    // Predicated region
    $region34: #{_lambda_.1} parent=1 // pred_check
      _
    $region35: #{_lambda_.1} parent=1 // pred_check_branch
      %118 = sbr.rel (0) target = $region37
    $region36: #{_lambda_.1} parent=1 // pred_region
      %120 = vsyncadd [#allocation14], 0
      %s122 = sshll.u32 %s8, 4
      %s123 = int_to_ptr.hbm [resolvable:$true] %s122
      %s124 = sshll.u32 [#allocation15], 4
      %s125 = int_to_ptr.vmem [resolvable:$true] %s124
      %127 = dma.hbm_to_vmem [thread:$0]  %s123, 112, %s125, [#allocation14]
    $region37: #{_lambda_.1} parent=1 // pred_fallthru
      _
    // Predicated region
    $region38: #{_lambda_.1} parent=1 // pred_check
      _
    $region39: #{_lambda_.1} parent=1 // pred_check_branch
      %129 = sbr.rel (0) target = $region41
    $region40: #{_lambda_.1} parent=1 // pred_region
      %131 = dma.done [#allocation3], 512
    $region41: #{_lambda_.1} parent=1 // pred_fallthru
      _
    // Predicated region
    $region42: #{_lambda_.1} parent=1 // pred_check
      _
    $region43: #{_lambda_.1} parent=1 // pred_check_branch
      %133 = sbr.rel (0) target = $region45
    $region44: #{_lambda_.1} parent=1 // pred_region
      %135 = dma.done [#allocation5], 1664
    $region45: #{_lambda_.1} parent=1 // pred_fallthru
      _
    // Predicated region
    $region46: #{_lambda_.1} parent=1 // pred_check
      _
    $region47: #{_lambda_.1} parent=1 // pred_check_branch
      %137 = sbr.rel (0) target = $region49
    $region48: #{_lambda_.1} parent=1 // pred_region
      %139 = dma.done [#allocation5], 32
    $region49: #{_lambda_.1} parent=1 // pred_fallthru
      _
    // Predicated region
    $region50: #{_lambda_.1} parent=1 // pred_check
      _
    $region51: #{_lambda_.1} parent=1 // pred_check_branch
      %141 = sbr.rel (0) target = $region53
    $region52: #{_lambda_.1} parent=1 // pred_region
      %143 = dma.done [#allocation8], 8192
    $region53: #{_lambda_.1} parent=1 // pred_fallthru
      _
    // Predicated region
    $region54: #{_lambda_.1} parent=1 // pred_check
      _
    $region55: #{_lambda_.1} parent=1 // pred_check_branch
      %145 = sbr.rel (0) target = $region57
    $region56: #{_lambda_.1} parent=1 // pred_region
      %147 = dma.done [#allocation8], 64
    $region57: #{_lambda_.1} parent=1 // pred_fallthru
      _
    // Predicated region
    $region58: #{_lambda_.1} parent=1 // pred_check
      _
    $region59: #{_lambda_.1} parent=1 // pred_check_branch
      %149 = sbr.rel (0) target = $region61
    $region60: #{_lambda_.1} parent=1 // pred_region
      %151 = dma.done [#allocation11], 32768
    $region61: #{_lambda_.1} parent=1 // pred_fallthru
      _
    // Predicated region
    $region62: #{_lambda_.1} parent=1 // pred_check
      _
    $region63: #{_lambda_.1} parent=1 // pred_check_branch
      %153 = sbr.rel (0) target = $region65
    $region64: #{_lambda_.1} parent=1 // pred_region
      %155 = dma.done [#allocation11], 128
    $region65: #{_lambda_.1} parent=1 // pred_fallthru
      _
    // Predicated region
    $region66: #{_lambda_.1} parent=1 // pred_check
      _
    $region67: #{_lambda_.1} parent=1 // pred_check_branch
      %157 = sbr.rel (0) target = $region69
    $region68: #{_lambda_.1} parent=1 // pred_region
      %159 = dma.done [#allocation14], 57344
    $region69: #{_lambda_.1} parent=1 // pred_fallthru
      _
    // Predicated region
    $region70: #{_lambda_.1} parent=1 // pred_check
      _
    $region71: #{_lambda_.1} parent=1 // pred_check_branch
      %161 = sbr.rel (0) target = $region73
    $region72: #{_lambda_.1} parent=1 // pred_region
      %163 = dma.done [#allocation14], 112
    $region73: #{_lambda_.1} parent=1 // pred_fallthru
      _
    %v165 = vld [vmem:[#allocation2] sm:$0xff]
    %v166 = vld [vmem:[#allocation2 + $0x8] sm:$0xff]
    %v167 = vld [vmem:[#allocation2 + $0x10] sm:$0xff]
    %v168 = vld [vmem:[#allocation2 + $0x18] sm:$0xff]
    %v169 = vpack.c.bf16 %v166, %v165
    %v170 = vpack.c.bf16 %v168, %v167
    %v171 = vld [vmem:[#allocation4] sm:$0xff]
    %v172 = vld [vmem:[#allocation4 + $0x8] sm:$0xff]
    %v173 = vld [vmem:[#allocation4 + $0x10] sm:$0xff]
    %v174 = vld [vmem:[#allocation4 + $0x18] sm:$0xff]
    %v175 = vld [vmem:[#allocation4 + $0x20] sm:$0xff]
    %v176 = vld [vmem:[#allocation4 + $0x28] sm:$0xff]
    %v177 = vld [vmem:[#allocation4 + $0x30] sm:$0xff]
    %v178 = vld [vmem:[#allocation4 + $0x38] sm:$0xff]
    %v179 = vld [vmem:[#allocation4 + $0x40] sm:$0xff]
    %v180 = vld [vmem:[#allocation4 + $0x48] sm:$0xff]
    %v181 = vld [vmem:[#allocation4 + $0x50] sm:$0xff]
    %v182 = vld [vmem:[#allocation4 + $0x58] sm:$0xff]
    %v183 = vld [vmem:[#allocation4 + $0x60] sm:$0x33]
    %v184 = vld [vmem:[#allocation6] sm:$0x3]
    %v186 = vperm.slane %v184, 0
    %v187 = vperm.slane %v184, 1
    %v203 = vunpack.c.l.b16 %v171
    %v204 = vunpack.c.h.b16 %v171
    %v205 = vunpack.c.l.b16 %v172
    %v206 = vunpack.c.h.b16 %v172
    %v207 = vunpack.c.l.b16 %v173
    %v208 = vunpack.c.h.b16 %v173
    %v209 = vunpack.c.l.b16 %v174
    %v210 = vunpack.c.h.b16 %v174
    %v211 = vunpack.c.l.b16 %v175
    %v212 = vunpack.c.h.b16 %v175
    %v213 = vunpack.c.l.b16 %v176
    %v214 = vunpack.c.h.b16 %v176
    %v215 = vunpack.c.l.b16 %v177
    %v216 = vunpack.c.h.b16 %v177
    %v217 = vunpack.c.l.b16 %v178
    %v218 = vunpack.c.h.b16 %v178
    %v219 = vunpack.c.l.b16 %v179
    %v220 = vunpack.c.h.b16 %v179
    %v221 = vunpack.c.l.b16 %v180
    %v222 = vunpack.c.h.b16 %v180
    %v223 = vunpack.c.l.b16 %v181
    %v224 = vunpack.c.h.b16 %v181
    %v225 = vunpack.c.l.b16 %v182
    %v226 = vunpack.c.h.b16 %v182
    %v227 = vunpack.c.l.b16 %v183
    %v228 = vunpack.c.h.b16 %v183
    %v229 = vpack.c.b16 %v205, %v203
    %v230 = vpack.c.b16 %v206, %v204
    %v231 = vpack.c.b16 %v209, %v207
    %v232 = vpack.c.b16 %v210, %v208
    %v233 = vpack.c.b16 %v213, %v211
    %v234 = vpack.c.b16 %v214, %v212
    %v235 = vpack.c.b16 %v217, %v215
    %v236 = vpack.c.b16 %v218, %v216
    %v237 = vpack.c.b16 %v221, %v219
    %v238 = vpack.c.b16 %v222, %v220
    %v239 = vpack.c.b16 %v225, %v223
    %v240 = vpack.c.b16 %v226, %v224
    %v241 = vpack.c.b16 %v227, %v227
    %v242 = vpack.c.b16 %v228, %v228
    %vm255 = vcmask 818176
    %v257 = vsel %vm255, %v169, 0
    %v260 = vsel %vm255, %v170, 0
    %vm262 = vcmask 1041408
    %v264 = vsel %vm262, %v241, 0
    %v267 = vsel %vm262, %v242, 0
    %269 = vmatpush.bf16.msra.mxu0 0
    %270 = vmatpush.bf16.msra.mxu0 %v264
    %271 = vmatpush.bf16.msra.mxu0 %v239
    %272 = vmatpush.bf16.msra.mxu0 %v237
    %273 = vmatpush.bf16.msra.mxu0 %v235
    %274 = vmatpush.bf16.msra.mxu0 %v233
    %275 = vmatpush.bf16.msra.mxu0 %v231
    %276 = vmatpush.bf16.msra.mxu0 %v229
    %277 = vmatmul.bf16.gmra.mxu0 %v257
    %v278 = vpop.f32.mrf.mxu0
    %v279 = vadd.f32 %v186, %v278
    %v280 = vpop.f32.mrf.mxu0
    %v281 = vadd.f32 %v186, %v280
    %282 = vmatmul.bf16.gmra.mxu0 %v260
    %v283 = vpop.f32.mrf.mxu0
    %v284 = vadd.f32 %v186, %v283
    %v285 = vpop.f32.mrf.mxu0
    %v286 = vadd.f32 %v186, %v285
    %287 = vdwg.mxu0
    %288 = vmatpush.bf16.msra.mxu0 0
    %289 = vmatpush.bf16.msra.mxu0 %v267
    %290 = vmatpush.bf16.msra.mxu0 %v240
    %291 = vmatpush.bf16.msra.mxu0 %v238
    %292 = vmatpush.bf16.msra.mxu0 %v236
    %293 = vmatpush.bf16.msra.mxu0 %v234
    %294 = vmatpush.bf16.msra.mxu0 %v232
    %295 = vmatpush.bf16.msra.mxu0 %v230
    %296 = vmatmul.bf16.gmra.mxu0 %v257
    %v297 = vpop.f32.mrf.mxu0
    %v298 = vadd.f32 %v187, %v297
    %v299 = vpop.f32.mrf.mxu0
    %v300 = vadd.f32 %v187, %v299
    %301 = vmatmul.bf16.gmra.mxu0 %v260
    %v302 = vpop.f32.mrf.mxu0
    %v303 = vadd.f32 %v187, %v302
    %v304 = vpop.f32.mrf.mxu0
    %v305 = vadd.f32 %v187, %v304
    %306 = vdwg.mxu0
    %v307 = vmax.f32 %v279, 0.0
    %v308 = vmax.f32 %v298, 0.0
    %v309 = vmax.f32 %v281, 0.0
    %v310 = vmax.f32 %v300, 0.0
    %v311 = vmax.f32 %v284, 0.0
    %v312 = vmax.f32 %v303, 0.0
    %v313 = vmax.f32 %v286, 0.0
    %v314 = vmax.f32 %v305, 0.0
    %v315 = vpack.c.bf16 %v309, %v307
    %v316 = vpack.c.bf16 %v310, %v308
    %v317 = vpack.c.bf16 %v313, %v311
    %v318 = vpack.c.bf16 %v314, %v312
    %v319 = vld [vmem:[#allocation7] sm:$0xff]
    %v320 = vld [vmem:[#allocation7 + $0x8] sm:$0xff]
    %v321 = vld [vmem:[#allocation7 + $0x10] sm:$0xff]
    %v322 = vld [vmem:[#allocation7 + $0x18] sm:$0xff]
    %v323 = vld [vmem:[#allocation7 + $0x20] sm:$0xff]
    %v324 = vld [vmem:[#allocation7 + $0x28] sm:$0xff]
    %v325 = vld [vmem:[#allocation7 + $0x30] sm:$0xff]
    %v326 = vld [vmem:[#allocation7 + $0x38] sm:$0xff]
    %v327 = vld [vmem:[#allocation7 + $0x40] sm:$0xff]
    %v328 = vld [vmem:[#allocation7 + $0x48] sm:$0xff]
    %v329 = vld [vmem:[#allocation7 + $0x50] sm:$0xff]
    %v330 = vld [vmem:[#allocation7 + $0x58] sm:$0xff]
    %v331 = vld [vmem:[#allocation7 + $0x60] sm:$0xff]
    %v332 = vld [vmem:[#allocation7 + $0x68] sm:$0xff]
    %v333 = vld [vmem:[#allocation7 + $0x70] sm:$0xff]
    %v334 = vld [vmem:[#allocation7 + $0x78] sm:$0xff]
    %v335 = vld [vmem:[#allocation7 + $0x80] sm:$0xff]
    %v336 = vld [vmem:[#allocation7 + $0x88] sm:$0xff]
    %v337 = vld [vmem:[#allocation7 + $0x90] sm:$0xff]
    %v338 = vld [vmem:[#allocation7 + $0x98] sm:$0xff]
    %v339 = vld [vmem:[#allocation7 + $0xa0] sm:$0xff]
    %v340 = vld [vmem:[#allocation7 + $0xa8] sm:$0xff]
    %v341 = vld [vmem:[#allocation7 + $0xb0] sm:$0xff]
    %v342 = vld [vmem:[#allocation7 + $0xb8] sm:$0xff]
    %v343 = vld [vmem:[#allocation7 + $0xc0] sm:$0xff]
    %v344 = vld [vmem:[#allocation7 + $0xc8] sm:$0xff]
    %v345 = vld [vmem:[#allocation7 + $0xd0] sm:$0xff]
    %v346 = vld [vmem:[#allocation7 + $0xd8] sm:$0xff]
    %v347 = vld [vmem:[#allocation7 + $0xe0] sm:$0xff]
    %v348 = vld [vmem:[#allocation7 + $0xe8] sm:$0xff]
    %v349 = vld [vmem:[#allocation7 + $0xf0] sm:$0xff]
    %v350 = vld [vmem:[#allocation7 + $0xf8] sm:$0xff]
    %v351 = vld [vmem:[#allocation7 + $0x100] sm:$0xff]
    %v352 = vld [vmem:[#allocation7 + $0x108] sm:$0xff]
    %v353 = vld [vmem:[#allocation7 + $0x110] sm:$0xff]
    %v354 = vld [vmem:[#allocation7 + $0x118] sm:$0xff]
    %v355 = vld [vmem:[#allocation7 + $0x120] sm:$0xff]
    %v356 = vld [vmem:[#allocation7 + $0x128] sm:$0xff]
    %v357 = vld [vmem:[#allocation7 + $0x130] sm:$0xff]
    %v358 = vld [vmem:[#allocation7 + $0x138] sm:$0xff]
    %v359 = vld [vmem:[#allocation7 + $0x140] sm:$0xff]
    %v360 = vld [vmem:[#allocation7 + $0x148] sm:$0xff]
    %v361 = vld [vmem:[#allocation7 + $0x150] sm:$0xff]
    %v362 = vld [vmem:[#allocation7 + $0x158] sm:$0xff]
    %v363 = vld [vmem:[#allocation7 + $0x160] sm:$0xff]
    %v364 = vld [vmem:[#allocation7 + $0x168] sm:$0xff]
    %v365 = vld [vmem:[#allocation7 + $0x170] sm:$0xff]
    %v366 = vld [vmem:[#allocation7 + $0x178] sm:$0xff]
    %v367 = vld [vmem:[#allocation7 + $0x180] sm:$0xff]
    %v368 = vld [vmem:[#allocation7 + $0x188] sm:$0xff]
    %v369 = vld [vmem:[#allocation7 + $0x190] sm:$0xff]
    %v370 = vld [vmem:[#allocation7 + $0x198] sm:$0xff]
    %v371 = vld [vmem:[#allocation7 + $0x1a0] sm:$0xff]
    %v372 = vld [vmem:[#allocation7 + $0x1a8] sm:$0xff]
    %v373 = vld [vmem:[#allocation7 + $0x1b0] sm:$0xff]
    %v374 = vld [vmem:[#allocation7 + $0x1b8] sm:$0xff]
    %v375 = vld [vmem:[#allocation7 + $0x1c0] sm:$0xff]
    %v376 = vld [vmem:[#allocation7 + $0x1c8] sm:$0xff]
    %v377 = vld [vmem:[#allocation7 + $0x1d0] sm:$0xff]
    %v378 = vld [vmem:[#allocation7 + $0x1d8] sm:$0xff]
    %v379 = vld [vmem:[#allocation7 + $0x1e0] sm:$0xff]
    %v380 = vld [vmem:[#allocation7 + $0x1e8] sm:$0xff]
    %v381 = vld [vmem:[#allocation7 + $0x1f0] sm:$0xff]
    %v382 = vld [vmem:[#allocation7 + $0x1f8] sm:$0xff]
    %v383 = vld [vmem:[#allocation9] sm:$0xf]
    %v385 = vperm.slane %v383, 0
    %v386 = vperm.slane %v383, 1
    %v387 = vperm.slane %v383, 2
    %v388 = vperm.slane %v383, 3
    %v457 = vunpack.c.l.b16 %v319
    %v458 = vunpack.c.h.b16 %v319
    %v459 = vunpack.c.l.b16 %v320
    %v460 = vunpack.c.h.b16 %v320
    %v461 = vunpack.c.l.b16 %v321
    %v462 = vunpack.c.h.b16 %v321
    %v463 = vunpack.c.l.b16 %v322
    %v464 = vunpack.c.h.b16 %v322
    %v465 = vunpack.c.l.b16 %v323
    %v466 = vunpack.c.h.b16 %v323
    %v467 = vunpack.c.l.b16 %v324
    %v468 = vunpack.c.h.b16 %v324
    %v469 = vunpack.c.l.b16 %v325
    %v470 = vunpack.c.h.b16 %v325
    %v471 = vunpack.c.l.b16 %v326
    %v472 = vunpack.c.h.b16 %v326
    %v473 = vunpack.c.l.b16 %v327
    %v474 = vunpack.c.h.b16 %v327
    %v475 = vunpack.c.l.b16 %v328
    %v476 = vunpack.c.h.b16 %v328
    %v477 = vunpack.c.l.b16 %v329
    %v478 = vunpack.c.h.b16 %v329
    %v479 = vunpack.c.l.b16 %v330
    %v480 = vunpack.c.h.b16 %v330
    %v481 = vunpack.c.l.b16 %v331
    %v482 = vunpack.c.h.b16 %v331
    %v483 = vunpack.c.l.b16 %v332
    %v484 = vunpack.c.h.b16 %v332
    %v485 = vunpack.c.l.b16 %v333
    %v486 = vunpack.c.h.b16 %v333
    %v487 = vunpack.c.l.b16 %v334
    %v488 = vunpack.c.h.b16 %v334
    %v489 = vunpack.c.l.b16 %v335
    %v490 = vunpack.c.h.b16 %v335
    %v491 = vunpack.c.l.b16 %v336
    %v492 = vunpack.c.h.b16 %v336
    %v493 = vunpack.c.l.b16 %v337
    %v494 = vunpack.c.h.b16 %v337
    %v495 = vunpack.c.l.b16 %v338
    %v496 = vunpack.c.h.b16 %v338
    %v497 = vunpack.c.l.b16 %v339
    %v498 = vunpack.c.h.b16 %v339
    %v499 = vunpack.c.l.b16 %v340
    %v500 = vunpack.c.h.b16 %v340
    %v501 = vunpack.c.l.b16 %v341
    %v502 = vunpack.c.h.b16 %v341
    %v503 = vunpack.c.l.b16 %v342
    %v504 = vunpack.c.h.b16 %v342
    %v505 = vunpack.c.l.b16 %v343
    %v506 = vunpack.c.h.b16 %v343
    %v507 = vunpack.c.l.b16 %v344
    %v508 = vunpack.c.h.b16 %v344
    %v509 = vunpack.c.l.b16 %v345
    %v510 = vunpack.c.h.b16 %v345
    %v511 = vunpack.c.l.b16 %v346
    %v512 = vunpack.c.h.b16 %v346
    %v513 = vunpack.c.l.b16 %v347
    %v514 = vunpack.c.h.b16 %v347
    %v515 = vunpack.c.l.b16 %v348
    %v516 = vunpack.c.h.b16 %v348
    %v517 = vunpack.c.l.b16 %v349
    %v518 = vunpack.c.h.b16 %v349
    %v519 = vunpack.c.l.b16 %v350
    %v520 = vunpack.c.h.b16 %v350
    %v521 = vunpack.c.l.b16 %v351
    %v522 = vunpack.c.h.b16 %v351
    %v523 = vunpack.c.l.b16 %v352
    %v524 = vunpack.c.h.b16 %v352
    %v525 = vunpack.c.l.b16 %v353
    %v526 = vunpack.c.h.b16 %v353
    %v527 = vunpack.c.l.b16 %v354
    %v528 = vunpack.c.h.b16 %v354
    %v529 = vunpack.c.l.b16 %v355
    %v530 = vunpack.c.h.b16 %v355
    %v531 = vunpack.c.l.b16 %v356
    %v532 = vunpack.c.h.b16 %v356
    %v533 = vunpack.c.l.b16 %v357
    %v534 = vunpack.c.h.b16 %v357
    %v535 = vunpack.c.l.b16 %v358
    %v536 = vunpack.c.h.b16 %v358
    %v537 = vunpack.c.l.b16 %v359
    %v538 = vunpack.c.h.b16 %v359
    %v539 = vunpack.c.l.b16 %v360
    %v540 = vunpack.c.h.b16 %v360
    %v541 = vunpack.c.l.b16 %v361
    %v542 = vunpack.c.h.b16 %v361
    %v543 = vunpack.c.l.b16 %v362
    %v544 = vunpack.c.h.b16 %v362
    %v545 = vunpack.c.l.b16 %v363
    %v546 = vunpack.c.h.b16 %v363
    %v547 = vunpack.c.l.b16 %v364
    %v548 = vunpack.c.h.b16 %v364
    %v549 = vunpack.c.l.b16 %v365
    %v550 = vunpack.c.h.b16 %v365
    %v551 = vunpack.c.l.b16 %v366
    %v552 = vunpack.c.h.b16 %v366
    %v553 = vunpack.c.l.b16 %v367
    %v554 = vunpack.c.h.b16 %v367
    %v555 = vunpack.c.l.b16 %v368
    %v556 = vunpack.c.h.b16 %v368
    %v557 = vunpack.c.l.b16 %v369
    %v558 = vunpack.c.h.b16 %v369
    %v559 = vunpack.c.l.b16 %v370
    %v560 = vunpack.c.h.b16 %v370
    %v561 = vunpack.c.l.b16 %v371
    %v562 = vunpack.c.h.b16 %v371
    %v563 = vunpack.c.l.b16 %v372
    %v564 = vunpack.c.h.b16 %v372
    %v565 = vunpack.c.l.b16 %v373
    %v566 = vunpack.c.h.b16 %v373
    %v567 = vunpack.c.l.b16 %v374
    %v568 = vunpack.c.h.b16 %v374
    %v569 = vunpack.c.l.b16 %v375
    %v570 = vunpack.c.h.b16 %v375
    %v571 = vunpack.c.l.b16 %v376
    %v572 = vunpack.c.h.b16 %v376
    %v573 = vunpack.c.l.b16 %v377
    %v574 = vunpack.c.h.b16 %v377
    %v575 = vunpack.c.l.b16 %v378
    %v576 = vunpack.c.h.b16 %v378
    %v577 = vunpack.c.l.b16 %v379
    %v578 = vunpack.c.h.b16 %v379
    %v579 = vunpack.c.l.b16 %v380
    %v580 = vunpack.c.h.b16 %v380
    %v581 = vunpack.c.l.b16 %v381
    %v582 = vunpack.c.h.b16 %v381
    %v583 = vunpack.c.l.b16 %v382
    %v584 = vunpack.c.h.b16 %v382
    %v585 = vpack.c.b16 %v461, %v457
    %v586 = vpack.c.b16 %v462, %v458
    %v587 = vpack.c.b16 %v463, %v459
    %v588 = vpack.c.b16 %v464, %v460
    %v589 = vpack.c.b16 %v469, %v465
    %v590 = vpack.c.b16 %v470, %v466
    %v591 = vpack.c.b16 %v471, %v467
    %v592 = vpack.c.b16 %v472, %v468
    %v593 = vpack.c.b16 %v477, %v473
    %v594 = vpack.c.b16 %v478, %v474
    %v595 = vpack.c.b16 %v479, %v475
    %v596 = vpack.c.b16 %v480, %v476
    %v597 = vpack.c.b16 %v485, %v481
    %v598 = vpack.c.b16 %v486, %v482
    %v599 = vpack.c.b16 %v487, %v483
    %v600 = vpack.c.b16 %v488, %v484
    %v601 = vpack.c.b16 %v493, %v489
    %v602 = vpack.c.b16 %v494, %v490
    %v603 = vpack.c.b16 %v495, %v491
    %v604 = vpack.c.b16 %v496, %v492
    %v605 = vpack.c.b16 %v501, %v497
    %v606 = vpack.c.b16 %v502, %v498
    %v607 = vpack.c.b16 %v503, %v499
    %v608 = vpack.c.b16 %v504, %v500
    %v609 = vpack.c.b16 %v509, %v505
    %v610 = vpack.c.b16 %v510, %v506
    %v611 = vpack.c.b16 %v511, %v507
    %v612 = vpack.c.b16 %v512, %v508
    %v613 = vpack.c.b16 %v517, %v513
    %v614 = vpack.c.b16 %v518, %v514
    %v615 = vpack.c.b16 %v519, %v515
    %v616 = vpack.c.b16 %v520, %v516
    %v617 = vpack.c.b16 %v525, %v521
    %v618 = vpack.c.b16 %v526, %v522
    %v619 = vpack.c.b16 %v527, %v523
    %v620 = vpack.c.b16 %v528, %v524
    %v621 = vpack.c.b16 %v533, %v529
    %v622 = vpack.c.b16 %v534, %v530
    %v623 = vpack.c.b16 %v535, %v531
    %v624 = vpack.c.b16 %v536, %v532
    %v625 = vpack.c.b16 %v541, %v537
    %v626 = vpack.c.b16 %v542, %v538
    %v627 = vpack.c.b16 %v543, %v539
    %v628 = vpack.c.b16 %v544, %v540
    %v629 = vpack.c.b16 %v549, %v545
    %v630 = vpack.c.b16 %v550, %v546
    %v631 = vpack.c.b16 %v551, %v547
    %v632 = vpack.c.b16 %v552, %v548
    %v633 = vpack.c.b16 %v557, %v553
    %v634 = vpack.c.b16 %v558, %v554
    %v635 = vpack.c.b16 %v559, %v555
    %v636 = vpack.c.b16 %v560, %v556
    %v637 = vpack.c.b16 %v565, %v561
    %v638 = vpack.c.b16 %v566, %v562
    %v639 = vpack.c.b16 %v567, %v563
    %v640 = vpack.c.b16 %v568, %v564
    %v641 = vpack.c.b16 %v573, %v569
    %v642 = vpack.c.b16 %v574, %v570
    %v643 = vpack.c.b16 %v575, %v571
    %v644 = vpack.c.b16 %v576, %v572
    %v645 = vpack.c.b16 %v581, %v577
    %v646 = vpack.c.b16 %v582, %v578
    %v647 = vpack.c.b16 %v583, %v579
    %v648 = vpack.c.b16 %v584, %v580
    %713 = vmatpush.bf16.msra.mxu0 %v613
    %714 = vmatpush.bf16.msra.mxu0 %v609
    %715 = vmatpush.bf16.msra.mxu0 %v605
    %716 = vmatpush.bf16.msra.mxu0 %v601
    %717 = vmatpush.bf16.msra.mxu0 %v597
    %718 = vmatpush.bf16.msra.mxu0 %v593
    %719 = vmatpush.bf16.msra.mxu0 %v589
    %720 = vmatpush.bf16.msra.mxu0 %v585
    %721 = vmatmul.bf16.gmra.mxu0 %v315
    %v722 = vpop.f32.mrf.mxu0
    %v723 = vadd.f32 %v385, %v722
    %v724 = vpop.f32.mrf.mxu0
    %v725 = vadd.f32 %v385, %v724
    %726 = vmatmul.bf16.gmra.mxu0 %v317
    %v727 = vpop.f32.mrf.mxu0
    %v728 = vadd.f32 %v385, %v727
    %v729 = vpop.f32.mrf.mxu0
    %v730 = vadd.f32 %v385, %v729
    %731 = vdwg.mxu0
    %732 = vmatpush.bf16.msra.mxu0 %v645
    %733 = vmatpush.bf16.msra.mxu0 %v641
    %734 = vmatpush.bf16.msra.mxu0 %v637
    %735 = vmatpush.bf16.msra.mxu0 %v633
    %736 = vmatpush.bf16.msra.mxu0 %v629
    %737 = vmatpush.bf16.msra.mxu0 %v625
    %738 = vmatpush.bf16.msra.mxu0 %v621
    %739 = vmatpush.bf16.msra.mxu0 %v617
    %740 = vmatmul.bf16.gmra.mxu0 %v316
    %v741 = vpop.f32.mrf.mxu0
    %v742 = vadd.f32 %v723, %v741
    %v743 = vpop.f32.mrf.mxu0
    %v744 = vadd.f32 %v725, %v743
    %745 = vmatmul.bf16.gmra.mxu0 %v318
    %v746 = vpop.f32.mrf.mxu0
    %v747 = vadd.f32 %v728, %v746
    %v748 = vpop.f32.mrf.mxu0
    %v749 = vadd.f32 %v730, %v748
    %750 = vdwg.mxu0
    %751 = vmatpush.bf16.msra.mxu0 %v614
    %752 = vmatpush.bf16.msra.mxu0 %v610
    %753 = vmatpush.bf16.msra.mxu0 %v606
    %754 = vmatpush.bf16.msra.mxu0 %v602
    %755 = vmatpush.bf16.msra.mxu0 %v598
    %756 = vmatpush.bf16.msra.mxu0 %v594
    %757 = vmatpush.bf16.msra.mxu0 %v590
    %758 = vmatpush.bf16.msra.mxu0 %v586
    %759 = vmatmul.bf16.gmra.mxu0 %v315
    %v760 = vpop.f32.mrf.mxu0
    %v761 = vadd.f32 %v386, %v760
    %v762 = vpop.f32.mrf.mxu0
    %v763 = vadd.f32 %v386, %v762
    %764 = vmatmul.bf16.gmra.mxu0 %v317
    %v765 = vpop.f32.mrf.mxu0
    %v766 = vadd.f32 %v386, %v765
    %v767 = vpop.f32.mrf.mxu0
    %v768 = vadd.f32 %v386, %v767
    %769 = vdwg.mxu0
    %770 = vmatpush.bf16.msra.mxu0 %v646
    %771 = vmatpush.bf16.msra.mxu0 %v642
    %772 = vmatpush.bf16.msra.mxu0 %v638
    %773 = vmatpush.bf16.msra.mxu0 %v634
    %774 = vmatpush.bf16.msra.mxu0 %v630
    %775 = vmatpush.bf16.msra.mxu0 %v626
    %776 = vmatpush.bf16.msra.mxu0 %v622
    %777 = vmatpush.bf16.msra.mxu0 %v618
    %778 = vmatmul.bf16.gmra.mxu0 %v316
    %v779 = vpop.f32.mrf.mxu0
    %v780 = vadd.f32 %v761, %v779
    %v781 = vpop.f32.mrf.mxu0
    %v782 = vadd.f32 %v763, %v781
    %783 = vmatmul.bf16.gmra.mxu0 %v318
    %v784 = vpop.f32.mrf.mxu0
    %v785 = vadd.f32 %v766, %v784
    %v786 = vpop.f32.mrf.mxu0
    %v787 = vadd.f32 %v768, %v786
    %788 = vdwg.mxu0
    %789 = vmatpush.bf16.msra.mxu0 %v615
    %790 = vmatpush.bf16.msra.mxu0 %v611
    %791 = vmatpush.bf16.msra.mxu0 %v607
    %792 = vmatpush.bf16.msra.mxu0 %v603
    %793 = vmatpush.bf16.msra.mxu0 %v599
    %794 = vmatpush.bf16.msra.mxu0 %v595
    %795 = vmatpush.bf16.msra.mxu0 %v591
    %796 = vmatpush.bf16.msra.mxu0 %v587
    %797 = vmatmul.bf16.gmra.mxu0 %v315
    %v798 = vpop.f32.mrf.mxu0
    %v799 = vadd.f32 %v387, %v798
    %v800 = vpop.f32.mrf.mxu0
    %v801 = vadd.f32 %v387, %v800
    %802 = vmatmul.bf16.gmra.mxu0 %v317
    %v803 = vpop.f32.mrf.mxu0
    %v804 = vadd.f32 %v387, %v803
    %v805 = vpop.f32.mrf.mxu0
    %v806 = vadd.f32 %v387, %v805
    %807 = vdwg.mxu0
    %808 = vmatpush.bf16.msra.mxu0 %v647
    %809 = vmatpush.bf16.msra.mxu0 %v643
    %810 = vmatpush.bf16.msra.mxu0 %v639
    %811 = vmatpush.bf16.msra.mxu0 %v635
    %812 = vmatpush.bf16.msra.mxu0 %v631
    %813 = vmatpush.bf16.msra.mxu0 %v627
    %814 = vmatpush.bf16.msra.mxu0 %v623
    %815 = vmatpush.bf16.msra.mxu0 %v619
    %816 = vmatmul.bf16.gmra.mxu0 %v316
    %v817 = vpop.f32.mrf.mxu0
    %v818 = vadd.f32 %v799, %v817
    %v819 = vpop.f32.mrf.mxu0
    %v820 = vadd.f32 %v801, %v819
    %821 = vmatmul.bf16.gmra.mxu0 %v318
    %v822 = vpop.f32.mrf.mxu0
    %v823 = vadd.f32 %v804, %v822
    %v824 = vpop.f32.mrf.mxu0
    %v825 = vadd.f32 %v806, %v824
    %826 = vdwg.mxu0
    %827 = vmatpush.bf16.msra.mxu0 %v616
    %828 = vmatpush.bf16.msra.mxu0 %v612
    %829 = vmatpush.bf16.msra.mxu0 %v608
    %830 = vmatpush.bf16.msra.mxu0 %v604
    %831 = vmatpush.bf16.msra.mxu0 %v600
    %832 = vmatpush.bf16.msra.mxu0 %v596
    %833 = vmatpush.bf16.msra.mxu0 %v592
    %834 = vmatpush.bf16.msra.mxu0 %v588
    %835 = vmatmul.bf16.gmra.mxu0 %v315
    %v836 = vpop.f32.mrf.mxu0
    %v837 = vadd.f32 %v388, %v836
    %v838 = vpop.f32.mrf.mxu0
    %v839 = vadd.f32 %v388, %v838
    %840 = vmatmul.bf16.gmra.mxu0 %v317
    %v841 = vpop.f32.mrf.mxu0
    %v842 = vadd.f32 %v388, %v841
    %v843 = vpop.f32.mrf.mxu0
    %v844 = vadd.f32 %v388, %v843
    %845 = vdwg.mxu0
    %846 = vmatpush.bf16.msra.mxu0 %v648
    %847 = vmatpush.bf16.msra.mxu0 %v644
    %848 = vmatpush.bf16.msra.mxu0 %v640
    %849 = vmatpush.bf16.msra.mxu0 %v636
    %850 = vmatpush.bf16.msra.mxu0 %v632
    %851 = vmatpush.bf16.msra.mxu0 %v628
    %852 = vmatpush.bf16.msra.mxu0 %v624
    %853 = vmatpush.bf16.msra.mxu0 %v620
    %854 = vmatmul.bf16.gmra.mxu0 %v316
    %v855 = vpop.f32.mrf.mxu0
    %v856 = vadd.f32 %v837, %v855
    %v857 = vpop.f32.mrf.mxu0
    %v858 = vadd.f32 %v839, %v857
    %859 = vmatmul.bf16.gmra.mxu0 %v318
    %v860 = vpop.f32.mrf.mxu0
    %v861 = vadd.f32 %v842, %v860
    %v862 = vpop.f32.mrf.mxu0
    %v863 = vadd.f32 %v844, %v862
    %864 = vdwg.mxu0
    %v865 = vmax.f32 %v742, 0.0
    %v866 = vmax.f32 %v780, 0.0
    %v867 = vmax.f32 %v818, 0.0
    %v868 = vmax.f32 %v856, 0.0
    %v869 = vmax.f32 %v744, 0.0
    %v870 = vmax.f32 %v782, 0.0
    %v871 = vmax.f32 %v820, 0.0
    %v872 = vmax.f32 %v858, 0.0
    %v873 = vmax.f32 %v747, 0.0
    %v874 = vmax.f32 %v785, 0.0
    %v875 = vmax.f32 %v823, 0.0
    %v876 = vmax.f32 %v861, 0.0
    %v877 = vmax.f32 %v749, 0.0
    %v878 = vmax.f32 %v787, 0.0
    %v879 = vmax.f32 %v825, 0.0
    %v880 = vmax.f32 %v863, 0.0
    %v881 = vpack.c.bf16 %v869, %v865
    %v882 = vpack.c.bf16 %v870, %v866
    %v883 = vpack.c.bf16 %v871, %v867
    %v884 = vpack.c.bf16 %v872, %v868
    %v885 = vpack.c.bf16 %v877, %v873
    %v886 = vpack.c.bf16 %v878, %v874
    %v887 = vpack.c.bf16 %v879, %v875
    %v888 = vpack.c.bf16 %v880, %v876
    %v889 = vld [vmem:[#allocation10] sm:$0xff]
    %v890 = vld [vmem:[#allocation10 + $0x8] sm:$0xff]
    %v891 = vld [vmem:[#allocation10 + $0x10] sm:$0xff]
    %v892 = vld [vmem:[#allocation10 + $0x18] sm:$0xff]
    %v893 = vld [vmem:[#allocation10 + $0x20] sm:$0xff]
    %v894 = vld [vmem:[#allocation10 + $0x28] sm:$0xff]
    %v895 = vld [vmem:[#allocation10 + $0x30] sm:$0xff]
    %v896 = vld [vmem:[#allocation10 + $0x38] sm:$0xff]
    %v897 = vld [vmem:[#allocation10 + $0x40] sm:$0xff]
    %v898 = vld [vmem:[#allocation10 + $0x48] sm:$0xff]
    %v899 = vld [vmem:[#allocation10 + $0x50] sm:$0xff]
    %v900 = vld [vmem:[#allocation10 + $0x58] sm:$0xff]
    %v901 = vld [vmem:[#allocation10 + $0x60] sm:$0xff]
    %v902 = vld [vmem:[#allocation10 + $0x68] sm:$0xff]
    %v903 = vld [vmem:[#allocation10 + $0x70] sm:$0xff]
    %v904 = vld [vmem:[#allocation10 + $0x78] sm:$0xff]
    %v905 = vld [vmem:[#allocation10 + $0x80] sm:$0xff]
    %v906 = vld [vmem:[#allocation10 + $0x88] sm:$0xff]
    %v907 = vld [vmem:[#allocation10 + $0x90] sm:$0xff]
    %v908 = vld [vmem:[#allocation10 + $0x98] sm:$0xff]
    %v909 = vld [vmem:[#allocation10 + $0xa0] sm:$0xff]
    %v910 = vld [vmem:[#allocation10 + $0xa8] sm:$0xff]
    %v911 = vld [vmem:[#allocation10 + $0xb0] sm:$0xff]
    %v912 = vld [vmem:[#allocation10 + $0xb8] sm:$0xff]
    %v913 = vld [vmem:[#allocation10 + $0xc0] sm:$0xff]
    %v914 = vld [vmem:[#allocation10 + $0xc8] sm:$0xff]
    %v915 = vld [vmem:[#allocation10 + $0xd0] sm:$0xff]
    %v916 = vld [vmem:[#allocation10 + $0xd8] sm:$0xff]
    %v917 = vld [vmem:[#allocation10 + $0xe0] sm:$0xff]
    %v918 = vld [vmem:[#allocation10 + $0xe8] sm:$0xff]
    %v919 = vld [vmem:[#allocation10 + $0xf0] sm:$0xff]
    %v920 = vld [vmem:[#allocation10 + $0xf8] sm:$0xff]
    %v921 = vld [vmem:[#allocation10 + $0x100] sm:$0xff]
    %v922 = vld [vmem:[#allocation10 + $0x108] sm:$0xff]
    %v923 = vld [vmem:[#allocation10 + $0x110] sm:$0xff]
    %v924 = vld [vmem:[#allocation10 + $0x118] sm:$0xff]
    %v925 = vld [vmem:[#allocation10 + $0x120] sm:$0xff]
    %v926 = vld [vmem:[#allocation10 + $0x128] sm:$0xff]
    %v927 = vld [vmem:[#allocation10 + $0x130] sm:$0xff]
    %v928 = vld [vmem:[#allocation10 + $0x138] sm:$0xff]
    %v929 = vld [vmem:[#allocation10 + $0x140] sm:$0xff]
    %v930 = vld [vmem:[#allocation10 + $0x148] sm:$0xff]
    %v931 = vld [vmem:[#allocation10 + $0x150] sm:$0xff]
    %v932 = vld [vmem:[#allocation10 + $0x158] sm:$0xff]
    %v933 = vld [vmem:[#allocation10 + $0x160] sm:$0xff]
    %v934 = vld [vmem:[#allocation10 + $0x168] sm:$0xff]
    %v935 = vld [vmem:[#allocation10 + $0x170] sm:$0xff]
    %v936 = vld [vmem:[#allocation10 + $0x178] sm:$0xff]
    %v937 = vld [vmem:[#allocation10 + $0x180] sm:$0xff]
    %v938 = vld [vmem:[#allocation10 + $0x188] sm:$0xff]
    %v939 = vld [vmem:[#allocation10 + $0x190] sm:$0xff]
    %v940 = vld [vmem:[#allocation10 + $0x198] sm:$0xff]
    %v941 = vld [vmem:[#allocation10 + $0x1a0] sm:$0xff]
    %v942 = vld [vmem:[#allocation10 + $0x1a8] sm:$0xff]
    %v943 = vld [vmem:[#allocation10 + $0x1b0] sm:$0xff]
    %v944 = vld [vmem:[#allocation10 + $0x1b8] sm:$0xff]
    %v945 = vld [vmem:[#allocation10 + $0x1c0] sm:$0xff]
    %v946 = vld [vmem:[#allocation10 + $0x1c8] sm:$0xff]
    %v947 = vld [vmem:[#allocation10 + $0x1d0] sm:$0xff]
    %v948 = vld [vmem:[#allocation10 + $0x1d8] sm:$0xff]
    %v949 = vld [vmem:[#allocation10 + $0x1e0] sm:$0xff]
    %v950 = vld [vmem:[#allocation10 + $0x1e8] sm:$0xff]
    %v951 = vld [vmem:[#allocation10 + $0x1f0] sm:$0xff]
    %v952 = vld [vmem:[#allocation10 + $0x1f8] sm:$0xff]
    %v953 = vld [vmem:[#allocation10 + $0x200] sm:$0xff]
    %v954 = vld [vmem:[#allocation10 + $0x208] sm:$0xff]
    %v955 = vld [vmem:[#allocation10 + $0x210] sm:$0xff]
    %v956 = vld [vmem:[#allocation10 + $0x218] sm:$0xff]
    %v957 = vld [vmem:[#allocation10 + $0x220] sm:$0xff]
    %v958 = vld [vmem:[#allocation10 + $0x228] sm:$0xff]
    %v959 = vld [vmem:[#allocation10 + $0x230] sm:$0xff]
    %v960 = vld [vmem:[#allocation10 + $0x238] sm:$0xff]
    %v961 = vld [vmem:[#allocation10 + $0x240] sm:$0xff]
    %v962 = vld [vmem:[#allocation10 + $0x248] sm:$0xff]
    %v963 = vld [vmem:[#allocation10 + $0x250] sm:$0xff]
    %v964 = vld [vmem:[#allocation10 + $0x258] sm:$0xff]
    %v965 = vld [vmem:[#allocation10 + $0x260] sm:$0xff]
    %v966 = vld [vmem:[#allocation10 + $0x268] sm:$0xff]
    %v967 = vld [vmem:[#allocation10 + $0x270] sm:$0xff]
    %v968 = vld [vmem:[#allocation10 + $0x278] sm:$0xff]
    %v969 = vld [vmem:[#allocation10 + $0x280] sm:$0xff]
    %v970 = vld [vmem:[#allocation10 + $0x288] sm:$0xff]
    %v971 = vld [vmem:[#allocation10 + $0x290] sm:$0xff]
    %v972 = vld [vmem:[#allocation10 + $0x298] sm:$0xff]
    %v973 = vld [vmem:[#allocation10 + $0x2a0] sm:$0xff]
    %v974 = vld [vmem:[#allocation10 + $0x2a8] sm:$0xff]
    %v975 = vld [vmem:[#allocation10 + $0x2b0] sm:$0xff]
    %v976 = vld [vmem:[#allocation10 + $0x2b8] sm:$0xff]
    %v977 = vld [vmem:[#allocation10 + $0x2c0] sm:$0xff]
    %v978 = vld [vmem:[#allocation10 + $0x2c8] sm:$0xff]
    %v979 = vld [vmem:[#allocation10 + $0x2d0] sm:$0xff]
    %v980 = vld [vmem:[#allocation10 + $0x2d8] sm:$0xff]
    %v981 = vld [vmem:[#allocation10 + $0x2e0] sm:$0xff]
    %v982 = vld [vmem:[#allocation10 + $0x2e8] sm:$0xff]
    %v983 = vld [vmem:[#allocation10 + $0x2f0] sm:$0xff]
    %v984 = vld [vmem:[#allocation10 + $0x2f8] sm:$0xff]
    %v985 = vld [vmem:[#allocation10 + $0x300] sm:$0xff]
    %v986 = vld [vmem:[#allocation10 + $0x308] sm:$0xff]
    %v987 = vld [vmem:[#allocation10 + $0x310] sm:$0xff]
    %v988 = vld [vmem:[#allocation10 + $0x318] sm:$0xff]
    %v989 = vld [vmem:[#allocation10 + $0x320] sm:$0xff]
    %v990 = vld [vmem:[#allocation10 + $0x328] sm:$0xff]
    %v991 = vld [vmem:[#allocation10 + $0x330] sm:$0xff]
    %v992 = vld [vmem:[#allocation10 + $0x338] sm:$0xff]
    %v993 = vld [vmem:[#allocation10 + $0x340] sm:$0xff]
    %v994 = vld [vmem:[#allocation10 + $0x348] sm:$0xff]
    %v995 = vld [vmem:[#allocation10 + $0x350] sm:$0xff]
    %v996 = vld [vmem:[#allocation10 + $0x358] sm:$0xff]
    %v997 = vld [vmem:[#allocation10 + $0x360] sm:$0xff]
    %v998 = vld [vmem:[#allocation10 + $0x368] sm:$0xff]
    %v999 = vld [vmem:[#allocation10 + $0x370] sm:$0xff]
    %v1000 = vld [vmem:[#allocation10 + $0x378] sm:$0xff]
    %v1001 = vld [vmem:[#allocation10 + $0x380] sm:$0xff]
    %v1002 = vld [vmem:[#allocation10 + $0x388] sm:$0xff]
    %v1003 = vld [vmem:[#allocation10 + $0x390] sm:$0xff]
    %v1004 = vld [vmem:[#allocation10 + $0x398] sm:$0xff]
    %v1005 = vld [vmem:[#allocation10 + $0x3a0] sm:$0xff]
    %v1006 = vld [vmem:[#allocation10 + $0x3a8] sm:$0xff]
    %v1007 = vld [vmem:[#allocation10 + $0x3b0] sm:$0xff]
    %v1008 = vld [vmem:[#allocation10 + $0x3b8] sm:$0xff]
    %v1009 = vld [vmem:[#allocation10 + $0x3c0] sm:$0xff]
    %v1010 = vld [vmem:[#allocation10 + $0x3c8] sm:$0xff]
    %v1011 = vld [vmem:[#allocation10 + $0x3d0] sm:$0xff]
    %v1012 = vld [vmem:[#allocation10 + $0x3d8] sm:$0xff]
    %v1013 = vld [vmem:[#allocation10 + $0x3e0] sm:$0xff]
    %v1014 = vld [vmem:[#allocation10 + $0x3e8] sm:$0xff]
    %v1015 = vld [vmem:[#allocation10 + $0x3f0] sm:$0xff]
    %v1016 = vld [vmem:[#allocation10 + $0x3f8] sm:$0xff]
    %v1017 = vld [vmem:[#allocation10 + $0x400] sm:$0xff]
    %v1018 = vld [vmem:[#allocation10 + $0x408] sm:$0xff]
    %v1019 = vld [vmem:[#allocation10 + $0x410] sm:$0xff]
    %v1020 = vld [vmem:[#allocation10 + $0x418] sm:$0xff]
    %v1021 = vld [vmem:[#allocation10 + $0x420] sm:$0xff]
    %v1022 = vld [vmem:[#allocation10 + $0x428] sm:$0xff]
    %v1023 = vld [vmem:[#allocation10 + $0x430] sm:$0xff]
    %v1024 = vld [vmem:[#allocation10 + $0x438] sm:$0xff]
    %v1025 = vld [vmem:[#allocation10 + $0x440] sm:$0xff]
    %v1026 = vld [vmem:[#allocation10 + $0x448] sm:$0xff]
    %v1027 = vld [vmem:[#allocation10 + $0x450] sm:$0xff]
    %v1028 = vld [vmem:[#allocation10 + $0x458] sm:$0xff]
    %v1029 = vld [vmem:[#allocation10 + $0x460] sm:$0xff]
    %v1030 = vld [vmem:[#allocation10 + $0x468] sm:$0xff]
    %v1031 = vld [vmem:[#allocation10 + $0x470] sm:$0xff]
    %v1032 = vld [vmem:[#allocation10 + $0x478] sm:$0xff]
    %v1033 = vld [vmem:[#allocation10 + $0x480] sm:$0xff]
    %v1034 = vld [vmem:[#allocation10 + $0x488] sm:$0xff]
    %v1035 = vld [vmem:[#allocation10 + $0x490] sm:$0xff]
    %v1036 = vld [vmem:[#allocation10 + $0x498] sm:$0xff]
    %v1037 = vld [vmem:[#allocation10 + $0x4a0] sm:$0xff]
    %v1038 = vld [vmem:[#allocation10 + $0x4a8] sm:$0xff]
    %v1039 = vld [vmem:[#allocation10 + $0x4b0] sm:$0xff]
    %v1040 = vld [vmem:[#allocation10 + $0x4b8] sm:$0xff]
    %v1041 = vld [vmem:[#allocation10 + $0x4c0] sm:$0xff]
    %v1042 = vld [vmem:[#allocation10 + $0x4c8] sm:$0xff]
    %v1043 = vld [vmem:[#allocation10 + $0x4d0] sm:$0xff]
    %v1044 = vld [vmem:[#allocation10 + $0x4d8] sm:$0xff]
    %v1045 = vld [vmem:[#allocation10 + $0x4e0] sm:$0xff]
    %v1046 = vld [vmem:[#allocation10 + $0x4e8] sm:$0xff]
    %v1047 = vld [vmem:[#allocation10 + $0x4f0] sm:$0xff]
    %v1048 = vld [vmem:[#allocation10 + $0x4f8] sm:$0xff]
    %v1049 = vld [vmem:[#allocation10 + $0x500] sm:$0xff]
    %v1050 = vld [vmem:[#allocation10 + $0x508] sm:$0xff]
    %v1051 = vld [vmem:[#allocation10 + $0x510] sm:$0xff]
    %v1052 = vld [vmem:[#allocation10 + $0x518] sm:$0xff]
    %v1053 = vld [vmem:[#allocation10 + $0x520] sm:$0xff]
    %v1054 = vld [vmem:[#allocation10 + $0x528] sm:$0xff]
    %v1055 = vld [vmem:[#allocation10 + $0x530] sm:$0xff]
    %v1056 = vld [vmem:[#allocation10 + $0x538] sm:$0xff]
    %v1057 = vld [vmem:[#allocation10 + $0x540] sm:$0xff]
    %v1058 = vld [vmem:[#allocation10 + $0x548] sm:$0xff]
    %v1059 = vld [vmem:[#allocation10 + $0x550] sm:$0xff]
    %v1060 = vld [vmem:[#allocation10 + $0x558] sm:$0xff]
    %v1061 = vld [vmem:[#allocation10 + $0x560] sm:$0xff]
    %v1062 = vld [vmem:[#allocation10 + $0x568] sm:$0xff]
    %v1063 = vld [vmem:[#allocation10 + $0x570] sm:$0xff]
    %v1064 = vld [vmem:[#allocation10 + $0x578] sm:$0xff]
    %v1065 = vld [vmem:[#allocation10 + $0x580] sm:$0xff]
    %v1066 = vld [vmem:[#allocation10 + $0x588] sm:$0xff]
    %v1067 = vld [vmem:[#allocation10 + $0x590] sm:$0xff]
    %v1068 = vld [vmem:[#allocation10 + $0x598] sm:$0xff]
    %v1069 = vld [vmem:[#allocation10 + $0x5a0] sm:$0xff]
    %v1070 = vld [vmem:[#allocation10 + $0x5a8] sm:$0xff]
    %v1071 = vld [vmem:[#allocation10 + $0x5b0] sm:$0xff]
    %v1072 = vld [vmem:[#allocation10 + $0x5b8] sm:$0xff]
    %v1073 = vld [vmem:[#allocation10 + $0x5c0] sm:$0xff]
    %v1074 = vld [vmem:[#allocation10 + $0x5c8] sm:$0xff]
    %v1075 = vld [vmem:[#allocation10 + $0x5d0] sm:$0xff]
    %v1076 = vld [vmem:[#allocation10 + $0x5d8] sm:$0xff]
    %v1077 = vld [vmem:[#allocation10 + $0x5e0] sm:$0xff]
    %v1078 = vld [vmem:[#allocation10 + $0x5e8] sm:$0xff]
    %v1079 = vld [vmem:[#allocation10 + $0x5f0] sm:$0xff]
    %v1080 = vld [vmem:[#allocation10 + $0x5f8] sm:$0xff]
    %v1081 = vld [vmem:[#allocation10 + $0x600] sm:$0xff]
    %v1082 = vld [vmem:[#allocation10 + $0x608] sm:$0xff]
    %v1083 = vld [vmem:[#allocation10 + $0x610] sm:$0xff]
    %v1084 = vld [vmem:[#allocation10 + $0x618] sm:$0xff]
    %v1085 = vld [vmem:[#allocation10 + $0x620] sm:$0xff]
    %v1086 = vld [vmem:[#allocation10 + $0x628] sm:$0xff]
    %v1087 = vld [vmem:[#allocation10 + $0x630] sm:$0xff]
    %v1088 = vld [vmem:[#allocation10 + $0x638] sm:$0xff]
    %v1089 = vld [vmem:[#allocation10 + $0x640] sm:$0xff]
    %v1090 = vld [vmem:[#allocation10 + $0x648] sm:$0xff]
    %v1091 = vld [vmem:[#allocation10 + $0x650] sm:$0xff]
    %v1092 = vld [vmem:[#allocation10 + $0x658] sm:$0xff]
    %v1093 = vld [vmem:[#allocation10 + $0x660] sm:$0xff]
    %v1094 = vld [vmem:[#allocation10 + $0x668] sm:$0xff]
    %v1095 = vld [vmem:[#allocation10 + $0x670] sm:$0xff]
    %v1096 = vld [vmem:[#allocation10 + $0x678] sm:$0xff]
    %v1097 = vld [vmem:[#allocation10 + $0x680] sm:$0xff]
    %v1098 = vld [vmem:[#allocation10 + $0x688] sm:$0xff]
    %v1099 = vld [vmem:[#allocation10 + $0x690] sm:$0xff]
    %v1100 = vld [vmem:[#allocation10 + $0x698] sm:$0xff]
    %v1101 = vld [vmem:[#allocation10 + $0x6a0] sm:$0xff]
    %v1102 = vld [vmem:[#allocation10 + $0x6a8] sm:$0xff]
    %v1103 = vld [vmem:[#allocation10 + $0x6b0] sm:$0xff]
    %v1104 = vld [vmem:[#allocation10 + $0x6b8] sm:$0xff]
    %v1105 = vld [vmem:[#allocation10 + $0x6c0] sm:$0xff]
    %v1106 = vld [vmem:[#allocation10 + $0x6c8] sm:$0xff]
    %v1107 = vld [vmem:[#allocation10 + $0x6d0] sm:$0xff]
    %v1108 = vld [vmem:[#allocation10 + $0x6d8] sm:$0xff]
    %v1109 = vld [vmem:[#allocation10 + $0x6e0] sm:$0xff]
    %v1110 = vld [vmem:[#allocation10 + $0x6e8] sm:$0xff]
    %v1111 = vld [vmem:[#allocation10 + $0x6f0] sm:$0xff]
    %v1112 = vld [vmem:[#allocation10 + $0x6f8] sm:$0xff]
    %v1113 = vld [vmem:[#allocation10 + $0x700] sm:$0xff]
    %v1114 = vld [vmem:[#allocation10 + $0x708] sm:$0xff]
    %v1115 = vld [vmem:[#allocation10 + $0x710] sm:$0xff]
    %v1116 = vld [vmem:[#allocation10 + $0x718] sm:$0xff]
    %v1117 = vld [vmem:[#allocation10 + $0x720] sm:$0xff]
    %v1118 = vld [vmem:[#allocation10 + $0x728] sm:$0xff]
    %v1119 = vld [vmem:[#allocation10 + $0x730] sm:$0xff]
    %v1120 = vld [vmem:[#allocation10 + $0x738] sm:$0xff]
    %v1121 = vld [vmem:[#allocation10 + $0x740] sm:$0xff]
    %v1122 = vld [vmem:[#allocation10 + $0x748] sm:$0xff]
    %v1123 = vld [vmem:[#allocation10 + $0x750] sm:$0xff]
    %v1124 = vld [vmem:[#allocation10 + $0x758] sm:$0xff]
    %v1125 = vld [vmem:[#allocation10 + $0x760] sm:$0xff]
    %v1126 = vld [vmem:[#allocation10 + $0x768] sm:$0xff]
    %v1127 = vld [vmem:[#allocation10 + $0x770] sm:$0xff]
    %v1128 = vld [vmem:[#allocation10 + $0x778] sm:$0xff]
    %v1129 = vld [vmem:[#allocation10 + $0x780] sm:$0xff]
    %v1130 = vld [vmem:[#allocation10 + $0x788] sm:$0xff]
    %v1131 = vld [vmem:[#allocation10 + $0x790] sm:$0xff]
    %v1132 = vld [vmem:[#allocation10 + $0x798] sm:$0xff]
    %v1133 = vld [vmem:[#allocation10 + $0x7a0] sm:$0xff]
    %v1134 = vld [vmem:[#allocation10 + $0x7a8] sm:$0xff]
    %v1135 = vld [vmem:[#allocation10 + $0x7b0] sm:$0xff]
    %v1136 = vld [vmem:[#allocation10 + $0x7b8] sm:$0xff]
    %v1137 = vld [vmem:[#allocation10 + $0x7c0] sm:$0xff]
    %v1138 = vld [vmem:[#allocation10 + $0x7c8] sm:$0xff]
    %v1139 = vld [vmem:[#allocation10 + $0x7d0] sm:$0xff]
    %v1140 = vld [vmem:[#allocation10 + $0x7d8] sm:$0xff]
    %v1141 = vld [vmem:[#allocation10 + $0x7e0] sm:$0xff]
    %v1142 = vld [vmem:[#allocation10 + $0x7e8] sm:$0xff]
    %v1143 = vld [vmem:[#allocation10 + $0x7f0] sm:$0xff]
    %v1144 = vld [vmem:[#allocation10 + $0x7f8] sm:$0xff]
    %v1145 = vld [vmem:[#allocation12] sm:$0xff]
    %v1147 = vperm.slane %v1145, 0
    %v1148 = vperm.slane %v1145, 1
    %v1149 = vperm.slane %v1145, 2
    %v1150 = vperm.slane %v1145, 3
    %v1151 = vperm.slane %v1145, 4
    %v1152 = vperm.slane %v1145, 5
    %v1153 = vperm.slane %v1145, 6
    %v1154 = vperm.slane %v1145, 7
    %v1419 = vunpack.c.l.b16 %v889
    %v1420 = vunpack.c.h.b16 %v889
    %v1421 = vunpack.c.l.b16 %v890
    %v1422 = vunpack.c.h.b16 %v890
    %v1423 = vunpack.c.l.b16 %v891
    %v1424 = vunpack.c.h.b16 %v891
    %v1425 = vunpack.c.l.b16 %v892
    %v1426 = vunpack.c.h.b16 %v892
    %v1427 = vunpack.c.l.b16 %v893
    %v1428 = vunpack.c.h.b16 %v893
    %v1429 = vunpack.c.l.b16 %v894
    %v1430 = vunpack.c.h.b16 %v894
    %v1431 = vunpack.c.l.b16 %v895
    %v1432 = vunpack.c.h.b16 %v895
    %v1433 = vunpack.c.l.b16 %v896
    %v1434 = vunpack.c.h.b16 %v896
    %v1435 = vunpack.c.l.b16 %v897
    %v1436 = vunpack.c.h.b16 %v897
    %v1437 = vunpack.c.l.b16 %v898
    %v1438 = vunpack.c.h.b16 %v898
    %v1439 = vunpack.c.l.b16 %v899
    %v1440 = vunpack.c.h.b16 %v899
    %v1441 = vunpack.c.l.b16 %v900
    %v1442 = vunpack.c.h.b16 %v900
    %v1443 = vunpack.c.l.b16 %v901
    %v1444 = vunpack.c.h.b16 %v901
    %v1445 = vunpack.c.l.b16 %v902
    %v1446 = vunpack.c.h.b16 %v902
    %v1447 = vunpack.c.l.b16 %v903
    %v1448 = vunpack.c.h.b16 %v903
    %v1449 = vunpack.c.l.b16 %v904
    %v1450 = vunpack.c.h.b16 %v904
    %v1451 = vunpack.c.l.b16 %v905
    %v1452 = vunpack.c.h.b16 %v905
    %v1453 = vunpack.c.l.b16 %v906
    %v1454 = vunpack.c.h.b16 %v906
    %v1455 = vunpack.c.l.b16 %v907
    %v1456 = vunpack.c.h.b16 %v907
    %v1457 = vunpack.c.l.b16 %v908
    %v1458 = vunpack.c.h.b16 %v908
    %v1459 = vunpack.c.l.b16 %v909
    %v1460 = vunpack.c.h.b16 %v909
    %v1461 = vunpack.c.l.b16 %v910
    %v1462 = vunpack.c.h.b16 %v910
    %v1463 = vunpack.c.l.b16 %v911
    %v1464 = vunpack.c.h.b16 %v911
    %v1465 = vunpack.c.l.b16 %v912
    %v1466 = vunpack.c.h.b16 %v912
    %v1467 = vunpack.c.l.b16 %v913
    %v1468 = vunpack.c.h.b16 %v913
    %v1469 = vunpack.c.l.b16 %v914
    %v1470 = vunpack.c.h.b16 %v914
    %v1471 = vunpack.c.l.b16 %v915
    %v1472 = vunpack.c.h.b16 %v915
    %v1473 = vunpack.c.l.b16 %v916
    %v1474 = vunpack.c.h.b16 %v916
    %v1475 = vunpack.c.l.b16 %v917
    %v1476 = vunpack.c.h.b16 %v917
    %v1477 = vunpack.c.l.b16 %v918
    %v1478 = vunpack.c.h.b16 %v918
    %v1479 = vunpack.c.l.b16 %v919
    %v1480 = vunpack.c.h.b16 %v919
    %v1481 = vunpack.c.l.b16 %v920
    %v1482 = vunpack.c.h.b16 %v920
    %v1483 = vunpack.c.l.b16 %v921
    %v1484 = vunpack.c.h.b16 %v921
    %v1485 = vunpack.c.l.b16 %v922
    %v1486 = vunpack.c.h.b16 %v922
    %v1487 = vunpack.c.l.b16 %v923
    %v1488 = vunpack.c.h.b16 %v923
    %v1489 = vunpack.c.l.b16 %v924
    %v1490 = vunpack.c.h.b16 %v924
    %v1491 = vunpack.c.l.b16 %v925
    %v1492 = vunpack.c.h.b16 %v925
    %v1493 = vunpack.c.l.b16 %v926
    %v1494 = vunpack.c.h.b16 %v926
    %v1495 = vunpack.c.l.b16 %v927
    %v1496 = vunpack.c.h.b16 %v927
    %v1497 = vunpack.c.l.b16 %v928
    %v1498 = vunpack.c.h.b16 %v928
    %v1499 = vunpack.c.l.b16 %v929
    %v1500 = vunpack.c.h.b16 %v929
    %v1501 = vunpack.c.l.b16 %v930
    %v1502 = vunpack.c.h.b16 %v930
    %v1503 = vunpack.c.l.b16 %v931
    %v1504 = vunpack.c.h.b16 %v931
    %v1505 = vunpack.c.l.b16 %v932
    %v1506 = vunpack.c.h.b16 %v932
    %v1507 = vunpack.c.l.b16 %v933
    %v1508 = vunpack.c.h.b16 %v933
    %v1509 = vunpack.c.l.b16 %v934
    %v1510 = vunpack.c.h.b16 %v934
    %v1511 = vunpack.c.l.b16 %v935
    %v1512 = vunpack.c.h.b16 %v935
    %v1513 = vunpack.c.l.b16 %v936
    %v1514 = vunpack.c.h.b16 %v936
    %v1515 = vunpack.c.l.b16 %v937
    %v1516 = vunpack.c.h.b16 %v937
    %v1517 = vunpack.c.l.b16 %v938
    %v1518 = vunpack.c.h.b16 %v938
    %v1519 = vunpack.c.l.b16 %v939
    %v1520 = vunpack.c.h.b16 %v939
    %v1521 = vunpack.c.l.b16 %v940
    %v1522 = vunpack.c.h.b16 %v940
    %v1523 = vunpack.c.l.b16 %v941
    %v1524 = vunpack.c.h.b16 %v941
    %v1525 = vunpack.c.l.b16 %v942
    %v1526 = vunpack.c.h.b16 %v942
    %v1527 = vunpack.c.l.b16 %v943
    %v1528 = vunpack.c.h.b16 %v943
    %v1529 = vunpack.c.l.b16 %v944
    %v1530 = vunpack.c.h.b16 %v944
    %v1531 = vunpack.c.l.b16 %v945
    %v1532 = vunpack.c.h.b16 %v945
    %v1533 = vunpack.c.l.b16 %v946
    %v1534 = vunpack.c.h.b16 %v946
    %v1535 = vunpack.c.l.b16 %v947
    %v1536 = vunpack.c.h.b16 %v947
    %v1537 = vunpack.c.l.b16 %v948
    %v1538 = vunpack.c.h.b16 %v948
    %v1539 = vunpack.c.l.b16 %v949
    %v1540 = vunpack.c.h.b16 %v949
    %v1541 = vunpack.c.l.b16 %v950
    %v1542 = vunpack.c.h.b16 %v950
    %v1543 = vunpack.c.l.b16 %v951
    %v1544 = vunpack.c.h.b16 %v951
    %v1545 = vunpack.c.l.b16 %v952
    %v1546 = vunpack.c.h.b16 %v952
    %v1547 = vunpack.c.l.b16 %v953
    %v1548 = vunpack.c.h.b16 %v953
    %v1549 = vunpack.c.l.b16 %v954
    %v1550 = vunpack.c.h.b16 %v954
    %v1551 = vunpack.c.l.b16 %v955
    %v1552 = vunpack.c.h.b16 %v955
    %v1553 = vunpack.c.l.b16 %v956
    %v1554 = vunpack.c.h.b16 %v956
    %v1555 = vunpack.c.l.b16 %v957
    %v1556 = vunpack.c.h.b16 %v957
    %v1557 = vunpack.c.l.b16 %v958
    %v1558 = vunpack.c.h.b16 %v958
    %v1559 = vunpack.c.l.b16 %v959
    %v1560 = vunpack.c.h.b16 %v959
    %v1561 = vunpack.c.l.b16 %v960
    %v1562 = vunpack.c.h.b16 %v960
    %v1563 = vunpack.c.l.b16 %v961
    %v1564 = vunpack.c.h.b16 %v961
    %v1565 = vunpack.c.l.b16 %v962
    %v1566 = vunpack.c.h.b16 %v962
    %v1567 = vunpack.c.l.b16 %v963
    %v1568 = vunpack.c.h.b16 %v963
    %v1569 = vunpack.c.l.b16 %v964
    %v1570 = vunpack.c.h.b16 %v964
    %v1571 = vunpack.c.l.b16 %v965
    %v1572 = vunpack.c.h.b16 %v965
    %v1573 = vunpack.c.l.b16 %v966
    %v1574 = vunpack.c.h.b16 %v966
    %v1575 = vunpack.c.l.b16 %v967
    %v1576 = vunpack.c.h.b16 %v967
    %v1577 = vunpack.c.l.b16 %v968
    %v1578 = vunpack.c.h.b16 %v968
    %v1579 = vunpack.c.l.b16 %v969
    %v1580 = vunpack.c.h.b16 %v969
    %v1581 = vunpack.c.l.b16 %v970
    %v1582 = vunpack.c.h.b16 %v970
    %v1583 = vunpack.c.l.b16 %v971
    %v1584 = vunpack.c.h.b16 %v971
    %v1585 = vunpack.c.l.b16 %v972
    %v1586 = vunpack.c.h.b16 %v972
    %v1587 = vunpack.c.l.b16 %v973
    %v1588 = vunpack.c.h.b16 %v973
    %v1589 = vunpack.c.l.b16 %v974
    %v1590 = vunpack.c.h.b16 %v974
    %v1591 = vunpack.c.l.b16 %v975
    %v1592 = vunpack.c.h.b16 %v975
    %v1593 = vunpack.c.l.b16 %v976
    %v1594 = vunpack.c.h.b16 %v976
    %v1595 = vunpack.c.l.b16 %v977
    %v1596 = vunpack.c.h.b16 %v977
    %v1597 = vunpack.c.l.b16 %v978
    %v1598 = vunpack.c.h.b16 %v978
    %v1599 = vunpack.c.l.b16 %v979
    %v1600 = vunpack.c.h.b16 %v979
    %v1601 = vunpack.c.l.b16 %v980
    %v1602 = vunpack.c.h.b16 %v980
    %v1603 = vunpack.c.l.b16 %v981
    %v1604 = vunpack.c.h.b16 %v981
    %v1605 = vunpack.c.l.b16 %v982
    %v1606 = vunpack.c.h.b16 %v982
    %v1607 = vunpack.c.l.b16 %v983
    %v1608 = vunpack.c.h.b16 %v983
    %v1609 = vunpack.c.l.b16 %v984
    %v1610 = vunpack.c.h.b16 %v984
    %v1611 = vunpack.c.l.b16 %v985
    %v1612 = vunpack.c.h.b16 %v985
    %v1613 = vunpack.c.l.b16 %v986
    %v1614 = vunpack.c.h.b16 %v986
    %v1615 = vunpack.c.l.b16 %v987
    %v1616 = vunpack.c.h.b16 %v987
    %v1617 = vunpack.c.l.b16 %v988
    %v1618 = vunpack.c.h.b16 %v988
    %v1619 = vunpack.c.l.b16 %v989
    %v1620 = vunpack.c.h.b16 %v989
    %v1621 = vunpack.c.l.b16 %v990
    %v1622 = vunpack.c.h.b16 %v990
    %v1623 = vunpack.c.l.b16 %v991
    %v1624 = vunpack.c.h.b16 %v991
    %v1625 = vunpack.c.l.b16 %v992
    %v1626 = vunpack.c.h.b16 %v992
    %v1627 = vunpack.c.l.b16 %v993
    %v1628 = vunpack.c.h.b16 %v993
    %v1629 = vunpack.c.l.b16 %v994
    %v1630 = vunpack.c.h.b16 %v994
    %v1631 = vunpack.c.l.b16 %v995
    %v1632 = vunpack.c.h.b16 %v995
    %v1633 = vunpack.c.l.b16 %v996
    %v1634 = vunpack.c.h.b16 %v996
    %v1635 = vunpack.c.l.b16 %v997
    %v1636 = vunpack.c.h.b16 %v997
    %v1637 = vunpack.c.l.b16 %v998
    %v1638 = vunpack.c.h.b16 %v998
    %v1639 = vunpack.c.l.b16 %v999
    %v1640 = vunpack.c.h.b16 %v999
    %v1641 = vunpack.c.l.b16 %v1000
    %v1642 = vunpack.c.h.b16 %v1000
    %v1643 = vunpack.c.l.b16 %v1001
    %v1644 = vunpack.c.h.b16 %v1001
    %v1645 = vunpack.c.l.b16 %v1002
    %v1646 = vunpack.c.h.b16 %v1002
    %v1647 = vunpack.c.l.b16 %v1003
    %v1648 = vunpack.c.h.b16 %v1003
    %v1649 = vunpack.c.l.b16 %v1004
    %v1650 = vunpack.c.h.b16 %v1004
    %v1651 = vunpack.c.l.b16 %v1005
    %v1652 = vunpack.c.h.b16 %v1005
    %v1653 = vunpack.c.l.b16 %v1006
    %v1654 = vunpack.c.h.b16 %v1006
    %v1655 = vunpack.c.l.b16 %v1007
    %v1656 = vunpack.c.h.b16 %v1007
    %v1657 = vunpack.c.l.b16 %v1008
    %v1658 = vunpack.c.h.b16 %v1008
    %v1659 = vunpack.c.l.b16 %v1009
    %v1660 = vunpack.c.h.b16 %v1009
    %v1661 = vunpack.c.l.b16 %v1010
    %v1662 = vunpack.c.h.b16 %v1010
    %v1663 = vunpack.c.l.b16 %v1011
    %v1664 = vunpack.c.h.b16 %v1011
    %v1665 = vunpack.c.l.b16 %v1012
    %v1666 = vunpack.c.h.b16 %v1012
    %v1667 = vunpack.c.l.b16 %v1013
    %v1668 = vunpack.c.h.b16 %v1013
    %v1669 = vunpack.c.l.b16 %v1014
    %v1670 = vunpack.c.h.b16 %v1014
    %v1671 = vunpack.c.l.b16 %v1015
    %v1672 = vunpack.c.h.b16 %v1015
    %v1673 = vunpack.c.l.b16 %v1016
    %v1674 = vunpack.c.h.b16 %v1016
    %v1675 = vunpack.c.l.b16 %v1017
    %v1676 = vunpack.c.h.b16 %v1017
    %v1677 = vunpack.c.l.b16 %v1018
    %v1678 = vunpack.c.h.b16 %v1018
    %v1679 = vunpack.c.l.b16 %v1019
    %v1680 = vunpack.c.h.b16 %v1019
    %v1681 = vunpack.c.l.b16 %v1020
    %v1682 = vunpack.c.h.b16 %v1020
    %v1683 = vunpack.c.l.b16 %v1021
    %v1684 = vunpack.c.h.b16 %v1021
    %v1685 = vunpack.c.l.b16 %v1022
    %v1686 = vunpack.c.h.b16 %v1022
    %v1687 = vunpack.c.l.b16 %v1023
    %v1688 = vunpack.c.h.b16 %v1023
    %v1689 = vunpack.c.l.b16 %v1024
    %v1690 = vunpack.c.h.b16 %v1024
    %v1691 = vunpack.c.l.b16 %v1025
    %v1692 = vunpack.c.h.b16 %v1025
    %v1693 = vunpack.c.l.b16 %v1026
    %v1694 = vunpack.c.h.b16 %v1026
    %v1695 = vunpack.c.l.b16 %v1027
    %v1696 = vunpack.c.h.b16 %v1027
    %v1697 = vunpack.c.l.b16 %v1028
    %v1698 = vunpack.c.h.b16 %v1028
    %v1699 = vunpack.c.l.b16 %v1029
    %v1700 = vunpack.c.h.b16 %v1029
    %v1701 = vunpack.c.l.b16 %v1030
    %v1702 = vunpack.c.h.b16 %v1030
    %v1703 = vunpack.c.l.b16 %v1031
    %v1704 = vunpack.c.h.b16 %v1031
    %v1705 = vunpack.c.l.b16 %v1032
    %v1706 = vunpack.c.h.b16 %v1032
    %v1707 = vunpack.c.l.b16 %v1033
    %v1708 = vunpack.c.h.b16 %v1033
    %v1709 = vunpack.c.l.b16 %v1034
    %v1710 = vunpack.c.h.b16 %v1034
    %v1711 = vunpack.c.l.b16 %v1035
    %v1712 = vunpack.c.h.b16 %v1035
    %v1713 = vunpack.c.l.b16 %v1036
    %v1714 = vunpack.c.h.b16 %v1036
    %v1715 = vunpack.c.l.b16 %v1037
    %v1716 = vunpack.c.h.b16 %v1037
    %v1717 = vunpack.c.l.b16 %v1038
    %v1718 = vunpack.c.h.b16 %v1038
    %v1719 = vunpack.c.l.b16 %v1039
    %v1720 = vunpack.c.h.b16 %v1039
    %v1721 = vunpack.c.l.b16 %v1040
    %v1722 = vunpack.c.h.b16 %v1040
    %v1723 = vunpack.c.l.b16 %v1041
    %v1724 = vunpack.c.h.b16 %v1041
    %v1725 = vunpack.c.l.b16 %v1042
    %v1726 = vunpack.c.h.b16 %v1042
    %v1727 = vunpack.c.l.b16 %v1043
    %v1728 = vunpack.c.h.b16 %v1043
    %v1729 = vunpack.c.l.b16 %v1044
    %v1730 = vunpack.c.h.b16 %v1044
    %v1731 = vunpack.c.l.b16 %v1045
    %v1732 = vunpack.c.h.b16 %v1045
    %v1733 = vunpack.c.l.b16 %v1046
    %v1734 = vunpack.c.h.b16 %v1046
    %v1735 = vunpack.c.l.b16 %v1047
    %v1736 = vunpack.c.h.b16 %v1047
    %v1737 = vunpack.c.l.b16 %v1048
    %v1738 = vunpack.c.h.b16 %v1048
    %v1739 = vunpack.c.l.b16 %v1049
    %v1740 = vunpack.c.h.b16 %v1049
    %v1741 = vunpack.c.l.b16 %v1050
    %v1742 = vunpack.c.h.b16 %v1050
    %v1743 = vunpack.c.l.b16 %v1051
    %v1744 = vunpack.c.h.b16 %v1051
    %v1745 = vunpack.c.l.b16 %v1052
    %v1746 = vunpack.c.h.b16 %v1052
    %v1747 = vunpack.c.l.b16 %v1053
    %v1748 = vunpack.c.h.b16 %v1053
    %v1749 = vunpack.c.l.b16 %v1054
    %v1750 = vunpack.c.h.b16 %v1054
    %v1751 = vunpack.c.l.b16 %v1055
    %v1752 = vunpack.c.h.b16 %v1055
    %v1753 = vunpack.c.l.b16 %v1056
    %v1754 = vunpack.c.h.b16 %v1056
    %v1755 = vunpack.c.l.b16 %v1057
    %v1756 = vunpack.c.h.b16 %v1057
    %v1757 = vunpack.c.l.b16 %v1058
    %v1758 = vunpack.c.h.b16 %v1058
    %v1759 = vunpack.c.l.b16 %v1059
    %v1760 = vunpack.c.h.b16 %v1059
    %v1761 = vunpack.c.l.b16 %v1060
    %v1762 = vunpack.c.h.b16 %v1060
    %v1763 = vunpack.c.l.b16 %v1061
    %v1764 = vunpack.c.h.b16 %v1061
    %v1765 = vunpack.c.l.b16 %v1062
    %v1766 = vunpack.c.h.b16 %v1062
    %v1767 = vunpack.c.l.b16 %v1063
    %v1768 = vunpack.c.h.b16 %v1063
    %v1769 = vunpack.c.l.b16 %v1064
    %v1770 = vunpack.c.h.b16 %v1064
    %v1771 = vunpack.c.l.b16 %v1065
    %v1772 = vunpack.c.h.b16 %v1065
    %v1773 = vunpack.c.l.b16 %v1066
    %v1774 = vunpack.c.h.b16 %v1066
    %v1775 = vunpack.c.l.b16 %v1067
    %v1776 = vunpack.c.h.b16 %v1067
    %v1777 = vunpack.c.l.b16 %v1068
    %v1778 = vunpack.c.h.b16 %v1068
    %v1779 = vunpack.c.l.b16 %v1069
    %v1780 = vunpack.c.h.b16 %v1069
    %v1781 = vunpack.c.l.b16 %v1070
    %v1782 = vunpack.c.h.b16 %v1070
    %v1783 = vunpack.c.l.b16 %v1071
    %v1784 = vunpack.c.h.b16 %v1071
    %v1785 = vunpack.c.l.b16 %v1072
    %v1786 = vunpack.c.h.b16 %v1072
    %v1787 = vunpack.c.l.b16 %v1073
    %v1788 = vunpack.c.h.b16 %v1073
    %v1789 = vunpack.c.l.b16 %v1074
    %v1790 = vunpack.c.h.b16 %v1074
    %v1791 = vunpack.c.l.b16 %v1075
    %v1792 = vunpack.c.h.b16 %v1075
    %v1793 = vunpack.c.l.b16 %v1076
    %v1794 = vunpack.c.h.b16 %v1076
    %v1795 = vunpack.c.l.b16 %v1077
    %v1796 = vunpack.c.h.b16 %v1077
    %v1797 = vunpack.c.l.b16 %v1078
    %v1798 = vunpack.c.h.b16 %v1078
    %v1799 = vunpack.c.l.b16 %v1079
    %v1800 = vunpack.c.h.b16 %v1079
    %v1801 = vunpack.c.l.b16 %v1080
    %v1802 = vunpack.c.h.b16 %v1080
    %v1803 = vunpack.c.l.b16 %v1081
    %v1804 = vunpack.c.h.b16 %v1081
    %v1805 = vunpack.c.l.b16 %v1082
    %v1806 = vunpack.c.h.b16 %v1082
    %v1807 = vunpack.c.l.b16 %v1083
    %v1808 = vunpack.c.h.b16 %v1083
    %v1809 = vunpack.c.l.b16 %v1084
    %v1810 = vunpack.c.h.b16 %v1084
    %v1811 = vunpack.c.l.b16 %v1085
    %v1812 = vunpack.c.h.b16 %v1085
    %v1813 = vunpack.c.l.b16 %v1086
    %v1814 = vunpack.c.h.b16 %v1086
    %v1815 = vunpack.c.l.b16 %v1087
    %v1816 = vunpack.c.h.b16 %v1087
    %v1817 = vunpack.c.l.b16 %v1088
    %v1818 = vunpack.c.h.b16 %v1088
    %v1819 = vunpack.c.l.b16 %v1089
    %v1820 = vunpack.c.h.b16 %v1089
    %v1821 = vunpack.c.l.b16 %v1090
    %v1822 = vunpack.c.h.b16 %v1090
    %v1823 = vunpack.c.l.b16 %v1091
    %v1824 = vunpack.c.h.b16 %v1091
    %v1825 = vunpack.c.l.b16 %v1092
    %v1826 = vunpack.c.h.b16 %v1092
    %v1827 = vunpack.c.l.b16 %v1093
    %v1828 = vunpack.c.h.b16 %v1093
    %v1829 = vunpack.c.l.b16 %v1094
    %v1830 = vunpack.c.h.b16 %v1094
    %v1831 = vunpack.c.l.b16 %v1095
    %v1832 = vunpack.c.h.b16 %v1095
    %v1833 = vunpack.c.l.b16 %v1096
    %v1834 = vunpack.c.h.b16 %v1096
    %v1835 = vunpack.c.l.b16 %v1097
    %v1836 = vunpack.c.h.b16 %v1097
    %v1837 = vunpack.c.l.b16 %v1098
    %v1838 = vunpack.c.h.b16 %v1098
    %v1839 = vunpack.c.l.b16 %v1099
    %v1840 = vunpack.c.h.b16 %v1099
    %v1841 = vunpack.c.l.b16 %v1100
    %v1842 = vunpack.c.h.b16 %v1100
    %v1843 = vunpack.c.l.b16 %v1101
    %v1844 = vunpack.c.h.b16 %v1101
    %v1845 = vunpack.c.l.b16 %v1102
    %v1846 = vunpack.c.h.b16 %v1102
    %v1847 = vunpack.c.l.b16 %v1103
    %v1848 = vunpack.c.h.b16 %v1103
    %v1849 = vunpack.c.l.b16 %v1104
    %v1850 = vunpack.c.h.b16 %v1104
    %v1851 = vunpack.c.l.b16 %v1105
    %v1852 = vunpack.c.h.b16 %v1105
    %v1853 = vunpack.c.l.b16 %v1106
    %v1854 = vunpack.c.h.b16 %v1106
    %v1855 = vunpack.c.l.b16 %v1107
    %v1856 = vunpack.c.h.b16 %v1107
    %v1857 = vunpack.c.l.b16 %v1108
    %v1858 = vunpack.c.h.b16 %v1108
    %v1859 = vunpack.c.l.b16 %v1109
    %v1860 = vunpack.c.h.b16 %v1109
    %v1861 = vunpack.c.l.b16 %v1110
    %v1862 = vunpack.c.h.b16 %v1110
    %v1863 = vunpack.c.l.b16 %v1111
    %v1864 = vunpack.c.h.b16 %v1111
    %v1865 = vunpack.c.l.b16 %v1112
    %v1866 = vunpack.c.h.b16 %v1112
    %v1867 = vunpack.c.l.b16 %v1113
    %v1868 = vunpack.c.h.b16 %v1113
    %v1869 = vunpack.c.l.b16 %v1114
    %v1870 = vunpack.c.h.b16 %v1114
    %v1871 = vunpack.c.l.b16 %v1115
    %v1872 = vunpack.c.h.b16 %v1115
    %v1873 = vunpack.c.l.b16 %v1116
    %v1874 = vunpack.c.h.b16 %v1116
    %v1875 = vunpack.c.l.b16 %v1117
    %v1876 = vunpack.c.h.b16 %v1117
    %v1877 = vunpack.c.l.b16 %v1118
    %v1878 = vunpack.c.h.b16 %v1118
    %v1879 = vunpack.c.l.b16 %v1119
    %v1880 = vunpack.c.h.b16 %v1119
    %v1881 = vunpack.c.l.b16 %v1120
    %v1882 = vunpack.c.h.b16 %v1120
    %v1883 = vunpack.c.l.b16 %v1121
    %v1884 = vunpack.c.h.b16 %v1121
    %v1885 = vunpack.c.l.b16 %v1122
    %v1886 = vunpack.c.h.b16 %v1122
    %v1887 = vunpack.c.l.b16 %v1123
    %v1888 = vunpack.c.h.b16 %v1123
    %v1889 = vunpack.c.l.b16 %v1124
    %v1890 = vunpack.c.h.b16 %v1124
    %v1891 = vunpack.c.l.b16 %v1125
    %v1892 = vunpack.c.h.b16 %v1125
    %v1893 = vunpack.c.l.b16 %v1126
    %v1894 = vunpack.c.h.b16 %v1126
    %v1895 = vunpack.c.l.b16 %v1127
    %v1896 = vunpack.c.h.b16 %v1127
    %v1897 = vunpack.c.l.b16 %v1128
    %v1898 = vunpack.c.h.b16 %v1128
    %v1899 = vunpack.c.l.b16 %v1129
    %v1900 = vunpack.c.h.b16 %v1129
    %v1901 = vunpack.c.l.b16 %v1130
    %v1902 = vunpack.c.h.b16 %v1130
    %v1903 = vunpack.c.l.b16 %v1131
    %v1904 = vunpack.c.h.b16 %v1131
    %v1905 = vunpack.c.l.b16 %v1132
    %v1906 = vunpack.c.h.b16 %v1132
    %v1907 = vunpack.c.l.b16 %v1133
    %v1908 = vunpack.c.h.b16 %v1133
    %v1909 = vunpack.c.l.b16 %v1134
    %v1910 = vunpack.c.h.b16 %v1134
    %v1911 = vunpack.c.l.b16 %v1135
    %v1912 = vunpack.c.h.b16 %v1135
    %v1913 = vunpack.c.l.b16 %v1136
    %v1914 = vunpack.c.h.b16 %v1136
    %v1915 = vunpack.c.l.b16 %v1137
    %v1916 = vunpack.c.h.b16 %v1137
    %v1917 = vunpack.c.l.b16 %v1138
    %v1918 = vunpack.c.h.b16 %v1138
    %v1919 = vunpack.c.l.b16 %v1139
    %v1920 = vunpack.c.h.b16 %v1139
    %v1921 = vunpack.c.l.b16 %v1140
    %v1922 = vunpack.c.h.b16 %v1140
    %v1923 = vunpack.c.l.b16 %v1141
    %v1924 = vunpack.c.h.b16 %v1141
    %v1925 = vunpack.c.l.b16 %v1142
    %v1926 = vunpack.c.h.b16 %v1142
    %v1927 = vunpack.c.l.b16 %v1143
    %v1928 = vunpack.c.h.b16 %v1143
    %v1929 = vunpack.c.l.b16 %v1144
    %v1930 = vunpack.c.h.b16 %v1144
    %v1931 = vpack.c.b16 %v1427, %v1419
    %v1932 = vpack.c.b16 %v1428, %v1420
    %v1933 = vpack.c.b16 %v1429, %v1421
    %v1934 = vpack.c.b16 %v1430, %v1422
    %v1935 = vpack.c.b16 %v1431, %v1423
    %v1936 = vpack.c.b16 %v1432, %v1424
    %v1937 = vpack.c.b16 %v1433, %v1425
    %v1938 = vpack.c.b16 %v1434, %v1426
    %v1939 = vpack.c.b16 %v1443, %v1435
    %v1940 = vpack.c.b16 %v1444, %v1436
    %v1941 = vpack.c.b16 %v1445, %v1437
    %v1942 = vpack.c.b16 %v1446, %v1438
    %v1943 = vpack.c.b16 %v1447, %v1439
    %v1944 = vpack.c.b16 %v1448, %v1440
    %v1945 = vpack.c.b16 %v1449, %v1441
    %v1946 = vpack.c.b16 %v1450, %v1442
    %v1947 = vpack.c.b16 %v1459, %v1451
    %v1948 = vpack.c.b16 %v1460, %v1452
    %v1949 = vpack.c.b16 %v1461, %v1453
    %v1950 = vpack.c.b16 %v1462, %v1454
    %v1951 = vpack.c.b16 %v1463, %v1455
    %v1952 = vpack.c.b16 %v1464, %v1456
    %v1953 = vpack.c.b16 %v1465, %v1457
    %v1954 = vpack.c.b16 %v1466, %v1458
    %v1955 = vpack.c.b16 %v1475, %v1467
    %v1956 = vpack.c.b16 %v1476, %v1468
    %v1957 = vpack.c.b16 %v1477, %v1469
    %v1958 = vpack.c.b16 %v1478, %v1470
    %v1959 = vpack.c.b16 %v1479, %v1471
    %v1960 = vpack.c.b16 %v1480, %v1472
    %v1961 = vpack.c.b16 %v1481, %v1473
    %v1962 = vpack.c.b16 %v1482, %v1474
    %v1963 = vpack.c.b16 %v1491, %v1483
    %v1964 = vpack.c.b16 %v1492, %v1484
    %v1965 = vpack.c.b16 %v1493, %v1485
    %v1966 = vpack.c.b16 %v1494, %v1486
    %v1967 = vpack.c.b16 %v1495, %v1487
    %v1968 = vpack.c.b16 %v1496, %v1488
    %v1969 = vpack.c.b16 %v1497, %v1489
    %v1970 = vpack.c.b16 %v1498, %v1490
    %v1971 = vpack.c.b16 %v1507, %v1499
    %v1972 = vpack.c.b16 %v1508, %v1500
    %v1973 = vpack.c.b16 %v1509, %v1501
    %v1974 = vpack.c.b16 %v1510, %v1502
    %v1975 = vpack.c.b16 %v1511, %v1503
    %v1976 = vpack.c.b16 %v1512, %v1504
    %v1977 = vpack.c.b16 %v1513, %v1505
    %v1978 = vpack.c.b16 %v1514, %v1506
    %v1979 = vpack.c.b16 %v1523, %v1515
    %v1980 = vpack.c.b16 %v1524, %v1516
    %v1981 = vpack.c.b16 %v1525, %v1517
    %v1982 = vpack.c.b16 %v1526, %v1518
    %v1983 = vpack.c.b16 %v1527, %v1519
    %v1984 = vpack.c.b16 %v1528, %v1520
    %v1985 = vpack.c.b16 %v1529, %v1521
    %v1986 = vpack.c.b16 %v1530, %v1522
    %v1987 = vpack.c.b16 %v1539, %v1531
    %v1988 = vpack.c.b16 %v1540, %v1532
    %v1989 = vpack.c.b16 %v1541, %v1533
    %v1990 = vpack.c.b16 %v1542, %v1534
    %v1991 = vpack.c.b16 %v1543, %v1535
    %v1992 = vpack.c.b16 %v1544, %v1536
    %v1993 = vpack.c.b16 %v1545, %v1537
    %v1994 = vpack.c.b16 %v1546, %v1538
    %v1995 = vpack.c.b16 %v1555, %v1547
    %v1996 = vpack.c.b16 %v1556, %v1548
    %v1997 = vpack.c.b16 %v1557, %v1549
    %v1998 = vpack.c.b16 %v1558, %v1550
    %v1999 = vpack.c.b16 %v1559, %v1551
    %v2000 = vpack.c.b16 %v1560, %v1552
    %v2001 = vpack.c.b16 %v1561, %v1553
    %v2002 = vpack.c.b16 %v1562, %v1554
    %v2003 = vpack.c.b16 %v1571, %v1563
    %v2004 = vpack.c.b16 %v1572, %v1564
    %v2005 = vpack.c.b16 %v1573, %v1565
    %v2006 = vpack.c.b16 %v1574, %v1566
    %v2007 = vpack.c.b16 %v1575, %v1567
    %v2008 = vpack.c.b16 %v1576, %v1568
    %v2009 = vpack.c.b16 %v1577, %v1569
    %v2010 = vpack.c.b16 %v1578, %v1570
    %v2011 = vpack.c.b16 %v1587, %v1579
    %v2012 = vpack.c.b16 %v1588, %v1580
    %v2013 = vpack.c.b16 %v1589, %v1581
    %v2014 = vpack.c.b16 %v1590, %v1582
    %v2015 = vpack.c.b16 %v1591, %v1583
    %v2016 = vpack.c.b16 %v1592, %v1584
    %v2017 = vpack.c.b16 %v1593, %v1585
    %v2018 = vpack.c.b16 %v1594, %v1586
    %v2019 = vpack.c.b16 %v1603, %v1595
    %v2020 = vpack.c.b16 %v1604, %v1596
    %v2021 = vpack.c.b16 %v1605, %v1597
    %v2022 = vpack.c.b16 %v1606, %v1598
    %v2023 = vpack.c.b16 %v1607, %v1599
    %v2024 = vpack.c.b16 %v1608, %v1600
    %v2025 = vpack.c.b16 %v1609, %v1601
    %v2026 = vpack.c.b16 %v1610, %v1602
    %v2027 = vpack.c.b16 %v1619, %v1611
    %v2028 = vpack.c.b16 %v1620, %v1612
    %v2029 = vpack.c.b16 %v1621, %v1613
    %v2030 = vpack.c.b16 %v1622, %v1614
    %v2031 = vpack.c.b16 %v1623, %v1615
    %v2032 = vpack.c.b16 %v1624, %v1616
    %v2033 = vpack.c.b16 %v1625, %v1617
    %v2034 = vpack.c.b16 %v1626, %v1618
    %v2035 = vpack.c.b16 %v1635, %v1627
    %v2036 = vpack.c.b16 %v1636, %v1628
    %v2037 = vpack.c.b16 %v1637, %v1629
    %v2038 = vpack.c.b16 %v1638, %v1630
    %v2039 = vpack.c.b16 %v1639, %v1631
    %v2040 = vpack.c.b16 %v1640, %v1632
    %v2041 = vpack.c.b16 %v1641, %v1633
    %v2042 = vpack.c.b16 %v1642, %v1634
    %v2043 = vpack.c.b16 %v1651, %v1643
    %v2044 = vpack.c.b16 %v1652, %v1644
    %v2045 = vpack.c.b16 %v1653, %v1645
    %v2046 = vpack.c.b16 %v1654, %v1646
    %v2047 = vpack.c.b16 %v1655, %v1647
    %v2048 = vpack.c.b16 %v1656, %v1648
    %v2049 = vpack.c.b16 %v1657, %v1649
    %v2050 = vpack.c.b16 %v1658, %v1650
    %v2051 = vpack.c.b16 %v1667, %v1659
    %v2052 = vpack.c.b16 %v1668, %v1660
    %v2053 = vpack.c.b16 %v1669, %v1661
    %v2054 = vpack.c.b16 %v1670, %v1662
    %v2055 = vpack.c.b16 %v1671, %v1663
    %v2056 = vpack.c.b16 %v1672, %v1664
    %v2057 = vpack.c.b16 %v1673, %v1665
    %v2058 = vpack.c.b16 %v1674, %v1666
    %v2059 = vpack.c.b16 %v1683, %v1675
    %v2060 = vpack.c.b16 %v1684, %v1676
    %v2061 = vpack.c.b16 %v1685, %v1677
    %v2062 = vpack.c.b16 %v1686, %v1678
    %v2063 = vpack.c.b16 %v1687, %v1679
    %v2064 = vpack.c.b16 %v1688, %v1680
    %v2065 = vpack.c.b16 %v1689, %v1681
    %v2066 = vpack.c.b16 %v1690, %v1682
    %v2067 = vpack.c.b16 %v1699, %v1691
    %v2068 = vpack.c.b16 %v1700, %v1692
    %v2069 = vpack.c.b16 %v1701, %v1693
    %v2070 = vpack.c.b16 %v1702, %v1694
    %v2071 = vpack.c.b16 %v1703, %v1695
    %v2072 = vpack.c.b16 %v1704, %v1696
    %v2073 = vpack.c.b16 %v1705, %v1697
    %v2074 = vpack.c.b16 %v1706, %v1698
    %v2075 = vpack.c.b16 %v1715, %v1707
    %v2076 = vpack.c.b16 %v1716, %v1708
    %v2077 = vpack.c.b16 %v1717, %v1709
    %v2078 = vpack.c.b16 %v1718, %v1710
    %v2079 = vpack.c.b16 %v1719, %v1711
    %v2080 = vpack.c.b16 %v1720, %v1712
    %v2081 = vpack.c.b16 %v1721, %v1713
    %v2082 = vpack.c.b16 %v1722, %v1714
    %v2083 = vpack.c.b16 %v1731, %v1723
    %v2084 = vpack.c.b16 %v1732, %v1724
    %v2085 = vpack.c.b16 %v1733, %v1725
    %v2086 = vpack.c.b16 %v1734, %v1726
    %v2087 = vpack.c.b16 %v1735, %v1727
    %v2088 = vpack.c.b16 %v1736, %v1728
    %v2089 = vpack.c.b16 %v1737, %v1729
    %v2090 = vpack.c.b16 %v1738, %v1730
    %v2091 = vpack.c.b16 %v1747, %v1739
    %v2092 = vpack.c.b16 %v1748, %v1740
    %v2093 = vpack.c.b16 %v1749, %v1741
    %v2094 = vpack.c.b16 %v1750, %v1742
    %v2095 = vpack.c.b16 %v1751, %v1743
    %v2096 = vpack.c.b16 %v1752, %v1744
    %v2097 = vpack.c.b16 %v1753, %v1745
    %v2098 = vpack.c.b16 %v1754, %v1746
    %v2099 = vpack.c.b16 %v1763, %v1755
    %v2100 = vpack.c.b16 %v1764, %v1756
    %v2101 = vpack.c.b16 %v1765, %v1757
    %v2102 = vpack.c.b16 %v1766, %v1758
    %v2103 = vpack.c.b16 %v1767, %v1759
    %v2104 = vpack.c.b16 %v1768, %v1760
    %v2105 = vpack.c.b16 %v1769, %v1761
    %v2106 = vpack.c.b16 %v1770, %v1762
    %v2107 = vpack.c.b16 %v1779, %v1771
    %v2108 = vpack.c.b16 %v1780, %v1772
    %v2109 = vpack.c.b16 %v1781, %v1773
    %v2110 = vpack.c.b16 %v1782, %v1774
    %v2111 = vpack.c.b16 %v1783, %v1775
    %v2112 = vpack.c.b16 %v1784, %v1776
    %v2113 = vpack.c.b16 %v1785, %v1777
    %v2114 = vpack.c.b16 %v1786, %v1778
    %v2115 = vpack.c.b16 %v1795, %v1787
    %v2116 = vpack.c.b16 %v1796, %v1788
    %v2117 = vpack.c.b16 %v1797, %v1789
    %v2118 = vpack.c.b16 %v1798, %v1790
    %v2119 = vpack.c.b16 %v1799, %v1791
    %v2120 = vpack.c.b16 %v1800, %v1792
    %v2121 = vpack.c.b16 %v1801, %v1793
    %v2122 = vpack.c.b16 %v1802, %v1794
    %v2123 = vpack.c.b16 %v1811, %v1803
    %v2124 = vpack.c.b16 %v1812, %v1804
    %v2125 = vpack.c.b16 %v1813, %v1805
    %v2126 = vpack.c.b16 %v1814, %v1806
    %v2127 = vpack.c.b16 %v1815, %v1807
    %v2128 = vpack.c.b16 %v1816, %v1808
    %v2129 = vpack.c.b16 %v1817, %v1809
    %v2130 = vpack.c.b16 %v1818, %v1810
    %v2131 = vpack.c.b16 %v1827, %v1819
    %v2132 = vpack.c.b16 %v1828, %v1820
    %v2133 = vpack.c.b16 %v1829, %v1821
    %v2134 = vpack.c.b16 %v1830, %v1822
    %v2135 = vpack.c.b16 %v1831, %v1823
    %v2136 = vpack.c.b16 %v1832, %v1824
    %v2137 = vpack.c.b16 %v1833, %v1825
    %v2138 = vpack.c.b16 %v1834, %v1826
    %v2139 = vpack.c.b16 %v1843, %v1835
    %v2140 = vpack.c.b16 %v1844, %v1836
    %v2141 = vpack.c.b16 %v1845, %v1837
    %v2142 = vpack.c.b16 %v1846, %v1838
    %v2143 = vpack.c.b16 %v1847, %v1839
    %v2144 = vpack.c.b16 %v1848, %v1840
    %v2145 = vpack.c.b16 %v1849, %v1841
    %v2146 = vpack.c.b16 %v1850, %v1842
    %v2147 = vpack.c.b16 %v1859, %v1851
    %v2148 = vpack.c.b16 %v1860, %v1852
    %v2149 = vpack.c.b16 %v1861, %v1853
    %v2150 = vpack.c.b16 %v1862, %v1854
    %v2151 = vpack.c.b16 %v1863, %v1855
    %v2152 = vpack.c.b16 %v1864, %v1856
    %v2153 = vpack.c.b16 %v1865, %v1857
    %v2154 = vpack.c.b16 %v1866, %v1858
    %v2155 = vpack.c.b16 %v1875, %v1867
    %v2156 = vpack.c.b16 %v1876, %v1868
    %v2157 = vpack.c.b16 %v1877, %v1869
    %v2158 = vpack.c.b16 %v1878, %v1870
    %v2159 = vpack.c.b16 %v1879, %v1871
    %v2160 = vpack.c.b16 %v1880, %v1872
    %v2161 = vpack.c.b16 %v1881, %v1873
    %v2162 = vpack.c.b16 %v1882, %v1874
    %v2163 = vpack.c.b16 %v1891, %v1883
    %v2164 = vpack.c.b16 %v1892, %v1884
    %v2165 = vpack.c.b16 %v1893, %v1885
    %v2166 = vpack.c.b16 %v1894, %v1886
    %v2167 = vpack.c.b16 %v1895, %v1887
    %v2168 = vpack.c.b16 %v1896, %v1888
    %v2169 = vpack.c.b16 %v1897, %v1889
    %v2170 = vpack.c.b16 %v1898, %v1890
    %v2171 = vpack.c.b16 %v1907, %v1899
    %v2172 = vpack.c.b16 %v1908, %v1900
    %v2173 = vpack.c.b16 %v1909, %v1901
    %v2174 = vpack.c.b16 %v1910, %v1902
    %v2175 = vpack.c.b16 %v1911, %v1903
    %v2176 = vpack.c.b16 %v1912, %v1904
    %v2177 = vpack.c.b16 %v1913, %v1905
    %v2178 = vpack.c.b16 %v1914, %v1906
    %v2179 = vpack.c.b16 %v1923, %v1915
    %v2180 = vpack.c.b16 %v1924, %v1916
    %v2181 = vpack.c.b16 %v1925, %v1917
    %v2182 = vpack.c.b16 %v1926, %v1918
    %v2183 = vpack.c.b16 %v1927, %v1919
    %v2184 = vpack.c.b16 %v1928, %v1920
    %v2185 = vpack.c.b16 %v1929, %v1921
    %v2186 = vpack.c.b16 %v1930, %v1922
    %2443 = vmatpush.bf16.msra.mxu0 %v1987
    %2444 = vmatpush.bf16.msra.mxu0 %v1979
    %2445 = vmatpush.bf16.msra.mxu0 %v1971
    %2446 = vmatpush.bf16.msra.mxu0 %v1963
    %2447 = vmatpush.bf16.msra.mxu0 %v1955
    %2448 = vmatpush.bf16.msra.mxu0 %v1947
    %2449 = vmatpush.bf16.msra.mxu0 %v1939
    %2450 = vmatpush.bf16.msra.mxu0 %v1931
    %2451 = vmatmul.bf16.gmra.mxu0 %v881
    %v2452 = vpop.f32.mrf.mxu0
    %v2453 = vadd.f32 %v1147, %v2452
    %v2454 = vpop.f32.mrf.mxu0
    %v2455 = vadd.f32 %v1147, %v2454
    %2456 = vmatmul.bf16.gmra.mxu0 %v885
    %v2457 = vpop.f32.mrf.mxu0
    %v2458 = vadd.f32 %v1147, %v2457
    %v2459 = vpop.f32.mrf.mxu0
    %v2460 = vadd.f32 %v1147, %v2459
    %2461 = vdwg.mxu0
    %2462 = vmatpush.bf16.msra.mxu0 %v2051
    %2463 = vmatpush.bf16.msra.mxu0 %v2043
    %2464 = vmatpush.bf16.msra.mxu0 %v2035
    %2465 = vmatpush.bf16.msra.mxu0 %v2027
    %2466 = vmatpush.bf16.msra.mxu0 %v2019
    %2467 = vmatpush.bf16.msra.mxu0 %v2011
    %2468 = vmatpush.bf16.msra.mxu0 %v2003
    %2469 = vmatpush.bf16.msra.mxu0 %v1995
    %2470 = vmatmul.bf16.gmra.mxu0 %v882
    %v2471 = vpop.f32.mrf.mxu0
    %v2472 = vadd.f32 %v2453, %v2471
    %v2473 = vpop.f32.mrf.mxu0
    %v2474 = vadd.f32 %v2455, %v2473
    %2475 = vmatmul.bf16.gmra.mxu0 %v886
    %v2476 = vpop.f32.mrf.mxu0
    %v2477 = vadd.f32 %v2458, %v2476
    %v2478 = vpop.f32.mrf.mxu0
    %v2479 = vadd.f32 %v2460, %v2478
    %2480 = vdwg.mxu0
    %2481 = vmatpush.bf16.msra.mxu0 %v2115
    %2482 = vmatpush.bf16.msra.mxu0 %v2107
    %2483 = vmatpush.bf16.msra.mxu0 %v2099
    %2484 = vmatpush.bf16.msra.mxu0 %v2091
    %2485 = vmatpush.bf16.msra.mxu0 %v2083
    %2486 = vmatpush.bf16.msra.mxu0 %v2075
    %2487 = vmatpush.bf16.msra.mxu0 %v2067
    %2488 = vmatpush.bf16.msra.mxu0 %v2059
    %2489 = vmatmul.bf16.gmra.mxu0 %v883
    %v2490 = vpop.f32.mrf.mxu0
    %v2491 = vadd.f32 %v2472, %v2490
    %v2492 = vpop.f32.mrf.mxu0
    %v2493 = vadd.f32 %v2474, %v2492
    %2494 = vmatmul.bf16.gmra.mxu0 %v887
    %v2495 = vpop.f32.mrf.mxu0
    %v2496 = vadd.f32 %v2477, %v2495
    %v2497 = vpop.f32.mrf.mxu0
    %v2498 = vadd.f32 %v2479, %v2497
    %2499 = vdwg.mxu0
    %2500 = vmatpush.bf16.msra.mxu0 %v2179
    %2501 = vmatpush.bf16.msra.mxu0 %v2171
    %2502 = vmatpush.bf16.msra.mxu0 %v2163
    %2503 = vmatpush.bf16.msra.mxu0 %v2155
    %2504 = vmatpush.bf16.msra.mxu0 %v2147
    %2505 = vmatpush.bf16.msra.mxu0 %v2139
    %2506 = vmatpush.bf16.msra.mxu0 %v2131
    %2507 = vmatpush.bf16.msra.mxu0 %v2123
    %2508 = vmatmul.bf16.gmra.mxu0 %v884
    %v2509 = vpop.f32.mrf.mxu0
    %v2510 = vadd.f32 %v2491, %v2509
    %v2511 = vpop.f32.mrf.mxu0
    %v2512 = vadd.f32 %v2493, %v2511
    %2513 = vmatmul.bf16.gmra.mxu0 %v888
    %v2514 = vpop.f32.mrf.mxu0
    %v2515 = vadd.f32 %v2496, %v2514
    %v2516 = vpop.f32.mrf.mxu0
    %v2517 = vadd.f32 %v2498, %v2516
    %2518 = vdwg.mxu0
    %2519 = vmatpush.bf16.msra.mxu0 %v1988
    %2520 = vmatpush.bf16.msra.mxu0 %v1980
    %2521 = vmatpush.bf16.msra.mxu0 %v1972
    %2522 = vmatpush.bf16.msra.mxu0 %v1964
    %2523 = vmatpush.bf16.msra.mxu0 %v1956
    %2524 = vmatpush.bf16.msra.mxu0 %v1948
    %2525 = vmatpush.bf16.msra.mxu0 %v1940
    %2526 = vmatpush.bf16.msra.mxu0 %v1932
    %2527 = vmatmul.bf16.gmra.mxu0 %v881
    %v2528 = vpop.f32.mrf.mxu0
    %v2529 = vadd.f32 %v1148, %v2528
    %v2530 = vpop.f32.mrf.mxu0
    %v2531 = vadd.f32 %v1148, %v2530
    %2532 = vmatmul.bf16.gmra.mxu0 %v885
    %v2533 = vpop.f32.mrf.mxu0
    %v2534 = vadd.f32 %v1148, %v2533
    %v2535 = vpop.f32.mrf.mxu0
    %v2536 = vadd.f32 %v1148, %v2535
    %2537 = vdwg.mxu0
    %2538 = vmatpush.bf16.msra.mxu0 %v2052
    %2539 = vmatpush.bf16.msra.mxu0 %v2044
    %2540 = vmatpush.bf16.msra.mxu0 %v2036
    %2541 = vmatpush.bf16.msra.mxu0 %v2028
    %2542 = vmatpush.bf16.msra.mxu0 %v2020
    %2543 = vmatpush.bf16.msra.mxu0 %v2012
    %2544 = vmatpush.bf16.msra.mxu0 %v2004
    %2545 = vmatpush.bf16.msra.mxu0 %v1996
    %2546 = vmatmul.bf16.gmra.mxu0 %v882
    %v2547 = vpop.f32.mrf.mxu0
    %v2548 = vadd.f32 %v2529, %v2547
    %v2549 = vpop.f32.mrf.mxu0
    %v2550 = vadd.f32 %v2531, %v2549
    %2551 = vmatmul.bf16.gmra.mxu0 %v886
    %v2552 = vpop.f32.mrf.mxu0
    %v2553 = vadd.f32 %v2534, %v2552
    %v2554 = vpop.f32.mrf.mxu0
    %v2555 = vadd.f32 %v2536, %v2554
    %2556 = vdwg.mxu0
    %2557 = vmatpush.bf16.msra.mxu0 %v2116
    %2558 = vmatpush.bf16.msra.mxu0 %v2108
    %2559 = vmatpush.bf16.msra.mxu0 %v2100
    %2560 = vmatpush.bf16.msra.mxu0 %v2092
    %2561 = vmatpush.bf16.msra.mxu0 %v2084
    %2562 = vmatpush.bf16.msra.mxu0 %v2076
    %2563 = vmatpush.bf16.msra.mxu0 %v2068
    %2564 = vmatpush.bf16.msra.mxu0 %v2060
    %2565 = vmatmul.bf16.gmra.mxu0 %v883
    %v2566 = vpop.f32.mrf.mxu0
    %v2567 = vadd.f32 %v2548, %v2566
    %v2568 = vpop.f32.mrf.mxu0
    %v2569 = vadd.f32 %v2550, %v2568
    %2570 = vmatmul.bf16.gmra.mxu0 %v887
    %v2571 = vpop.f32.mrf.mxu0
    %v2572 = vadd.f32 %v2553, %v2571
    %v2573 = vpop.f32.mrf.mxu0
    %v2574 = vadd.f32 %v2555, %v2573
    %2575 = vdwg.mxu0
    %2576 = vmatpush.bf16.msra.mxu0 %v2180
    %2577 = vmatpush.bf16.msra.mxu0 %v2172
    %2578 = vmatpush.bf16.msra.mxu0 %v2164
    %2579 = vmatpush.bf16.msra.mxu0 %v2156
    %2580 = vmatpush.bf16.msra.mxu0 %v2148
    %2581 = vmatpush.bf16.msra.mxu0 %v2140
    %2582 = vmatpush.bf16.msra.mxu0 %v2132
    %2583 = vmatpush.bf16.msra.mxu0 %v2124
    %2584 = vmatmul.bf16.gmra.mxu0 %v884
    %v2585 = vpop.f32.mrf.mxu0
    %v2586 = vadd.f32 %v2567, %v2585
    %v2587 = vpop.f32.mrf.mxu0
    %v2588 = vadd.f32 %v2569, %v2587
    %2589 = vmatmul.bf16.gmra.mxu0 %v888
    %v2590 = vpop.f32.mrf.mxu0
    %v2591 = vadd.f32 %v2572, %v2590
    %v2592 = vpop.f32.mrf.mxu0
    %v2593 = vadd.f32 %v2574, %v2592
    %2594 = vdwg.mxu0
    %2595 = vmatpush.bf16.msra.mxu0 %v1989
    %2596 = vmatpush.bf16.msra.mxu0 %v1981
    %2597 = vmatpush.bf16.msra.mxu0 %v1973
    %2598 = vmatpush.bf16.msra.mxu0 %v1965
    %2599 = vmatpush.bf16.msra.mxu0 %v1957
    %2600 = vmatpush.bf16.msra.mxu0 %v1949
    %2601 = vmatpush.bf16.msra.mxu0 %v1941
    %2602 = vmatpush.bf16.msra.mxu0 %v1933
    %2603 = vmatmul.bf16.gmra.mxu0 %v881
    %v2604 = vpop.f32.mrf.mxu0
    %v2605 = vadd.f32 %v1149, %v2604
    %v2606 = vpop.f32.mrf.mxu0
    %v2607 = vadd.f32 %v1149, %v2606
    %2608 = vmatmul.bf16.gmra.mxu0 %v885
    %v2609 = vpop.f32.mrf.mxu0
    %v2610 = vadd.f32 %v1149, %v2609
    %v2611 = vpop.f32.mrf.mxu0
    %v2612 = vadd.f32 %v1149, %v2611
    %2613 = vdwg.mxu0
    %2614 = vmatpush.bf16.msra.mxu0 %v2053
    %2615 = vmatpush.bf16.msra.mxu0 %v2045
    %2616 = vmatpush.bf16.msra.mxu0 %v2037
    %2617 = vmatpush.bf16.msra.mxu0 %v2029
    %2618 = vmatpush.bf16.msra.mxu0 %v2021
    %2619 = vmatpush.bf16.msra.mxu0 %v2013
    %2620 = vmatpush.bf16.msra.mxu0 %v2005
    %2621 = vmatpush.bf16.msra.mxu0 %v1997
    %2622 = vmatmul.bf16.gmra.mxu0 %v882
    %v2623 = vpop.f32.mrf.mxu0
    %v2624 = vadd.f32 %v2605, %v2623
    %v2625 = vpop.f32.mrf.mxu0
    %v2626 = vadd.f32 %v2607, %v2625
    %2627 = vmatmul.bf16.gmra.mxu0 %v886
    %v2628 = vpop.f32.mrf.mxu0
    %v2629 = vadd.f32 %v2610, %v2628
    %v2630 = vpop.f32.mrf.mxu0
    %v2631 = vadd.f32 %v2612, %v2630
    %2632 = vdwg.mxu0
    %2633 = vmatpush.bf16.msra.mxu0 %v2117
    %2634 = vmatpush.bf16.msra.mxu0 %v2109
    %2635 = vmatpush.bf16.msra.mxu0 %v2101
    %2636 = vmatpush.bf16.msra.mxu0 %v2093
    %2637 = vmatpush.bf16.msra.mxu0 %v2085
    %2638 = vmatpush.bf16.msra.mxu0 %v2077
    %2639 = vmatpush.bf16.msra.mxu0 %v2069
    %2640 = vmatpush.bf16.msra.mxu0 %v2061
    %2641 = vmatmul.bf16.gmra.mxu0 %v883
    %v2642 = vpop.f32.mrf.mxu0
    %v2643 = vadd.f32 %v2624, %v2642
    %v2644 = vpop.f32.mrf.mxu0
    %v2645 = vadd.f32 %v2626, %v2644
    %2646 = vmatmul.bf16.gmra.mxu0 %v887
    %v2647 = vpop.f32.mrf.mxu0
    %v2648 = vadd.f32 %v2629, %v2647
    %v2649 = vpop.f32.mrf.mxu0
    %v2650 = vadd.f32 %v2631, %v2649
    %2651 = vdwg.mxu0
    %2652 = vmatpush.bf16.msra.mxu0 %v2181
    %2653 = vmatpush.bf16.msra.mxu0 %v2173
    %2654 = vmatpush.bf16.msra.mxu0 %v2165
    %2655 = vmatpush.bf16.msra.mxu0 %v2157
    %2656 = vmatpush.bf16.msra.mxu0 %v2149
    %2657 = vmatpush.bf16.msra.mxu0 %v2141
    %2658 = vmatpush.bf16.msra.mxu0 %v2133
    %2659 = vmatpush.bf16.msra.mxu0 %v2125
    %2660 = vmatmul.bf16.gmra.mxu0 %v884
    %v2661 = vpop.f32.mrf.mxu0
    %v2662 = vadd.f32 %v2643, %v2661
    %v2663 = vpop.f32.mrf.mxu0
    %v2664 = vadd.f32 %v2645, %v2663
    %2665 = vmatmul.bf16.gmra.mxu0 %v888
    %v2666 = vpop.f32.mrf.mxu0
    %v2667 = vadd.f32 %v2648, %v2666
    %v2668 = vpop.f32.mrf.mxu0
    %v2669 = vadd.f32 %v2650, %v2668
    %2670 = vdwg.mxu0
    %2671 = vmatpush.bf16.msra.mxu0 %v1990
    %2672 = vmatpush.bf16.msra.mxu0 %v1982
    %2673 = vmatpush.bf16.msra.mxu0 %v1974
    %2674 = vmatpush.bf16.msra.mxu0 %v1966
    %2675 = vmatpush.bf16.msra.mxu0 %v1958
    %2676 = vmatpush.bf16.msra.mxu0 %v1950
    %2677 = vmatpush.bf16.msra.mxu0 %v1942
    %2678 = vmatpush.bf16.msra.mxu0 %v1934
    %2679 = vmatmul.bf16.gmra.mxu0 %v881
    %v2680 = vpop.f32.mrf.mxu0
    %v2681 = vadd.f32 %v1150, %v2680
    %v2682 = vpop.f32.mrf.mxu0
    %v2683 = vadd.f32 %v1150, %v2682
    %2684 = vmatmul.bf16.gmra.mxu0 %v885
    %v2685 = vpop.f32.mrf.mxu0
    %v2686 = vadd.f32 %v1150, %v2685
    %v2687 = vpop.f32.mrf.mxu0
    %v2688 = vadd.f32 %v1150, %v2687
    %2689 = vdwg.mxu0
    %2690 = vmatpush.bf16.msra.mxu0 %v2054
    %2691 = vmatpush.bf16.msra.mxu0 %v2046
    %2692 = vmatpush.bf16.msra.mxu0 %v2038
    %2693 = vmatpush.bf16.msra.mxu0 %v2030
    %2694 = vmatpush.bf16.msra.mxu0 %v2022
    %2695 = vmatpush.bf16.msra.mxu0 %v2014
    %2696 = vmatpush.bf16.msra.mxu0 %v2006
    %2697 = vmatpush.bf16.msra.mxu0 %v1998
    %2698 = vmatmul.bf16.gmra.mxu0 %v882
    %v2699 = vpop.f32.mrf.mxu0
    %v2700 = vadd.f32 %v2681, %v2699
    %v2701 = vpop.f32.mrf.mxu0
    %v2702 = vadd.f32 %v2683, %v2701
    %2703 = vmatmul.bf16.gmra.mxu0 %v886
    %v2704 = vpop.f32.mrf.mxu0
    %v2705 = vadd.f32 %v2686, %v2704
    %v2706 = vpop.f32.mrf.mxu0
    %v2707 = vadd.f32 %v2688, %v2706
    %2708 = vdwg.mxu0
    %2709 = vmatpush.bf16.msra.mxu0 %v2118
    %2710 = vmatpush.bf16.msra.mxu0 %v2110
    %2711 = vmatpush.bf16.msra.mxu0 %v2102
    %2712 = vmatpush.bf16.msra.mxu0 %v2094
    %2713 = vmatpush.bf16.msra.mxu0 %v2086
    %2714 = vmatpush.bf16.msra.mxu0 %v2078
    %2715 = vmatpush.bf16.msra.mxu0 %v2070
    %2716 = vmatpush.bf16.msra.mxu0 %v2062
    %2717 = vmatmul.bf16.gmra.mxu0 %v883
    %v2718 = vpop.f32.mrf.mxu0
    %v2719 = vadd.f32 %v2700, %v2718
    %v2720 = vpop.f32.mrf.mxu0
    %v2721 = vadd.f32 %v2702, %v2720
    %2722 = vmatmul.bf16.gmra.mxu0 %v887
    %v2723 = vpop.f32.mrf.mxu0
    %v2724 = vadd.f32 %v2705, %v2723
    %v2725 = vpop.f32.mrf.mxu0
    %v2726 = vadd.f32 %v2707, %v2725
    %2727 = vdwg.mxu0
    %2728 = vmatpush.bf16.msra.mxu0 %v2182
    %2729 = vmatpush.bf16.msra.mxu0 %v2174
    %2730 = vmatpush.bf16.msra.mxu0 %v2166
    %2731 = vmatpush.bf16.msra.mxu0 %v2158
    %2732 = vmatpush.bf16.msra.mxu0 %v2150
    %2733 = vmatpush.bf16.msra.mxu0 %v2142
    %2734 = vmatpush.bf16.msra.mxu0 %v2134
    %2735 = vmatpush.bf16.msra.mxu0 %v2126
    %2736 = vmatmul.bf16.gmra.mxu0 %v884
    %v2737 = vpop.f32.mrf.mxu0
    %v2738 = vadd.f32 %v2719, %v2737
    %v2739 = vpop.f32.mrf.mxu0
    %v2740 = vadd.f32 %v2721, %v2739
    %2741 = vmatmul.bf16.gmra.mxu0 %v888
    %v2742 = vpop.f32.mrf.mxu0
    %v2743 = vadd.f32 %v2724, %v2742
    %v2744 = vpop.f32.mrf.mxu0
    %v2745 = vadd.f32 %v2726, %v2744
    %2746 = vdwg.mxu0
    %2747 = vmatpush.bf16.msra.mxu0 %v1991
    %2748 = vmatpush.bf16.msra.mxu0 %v1983
    %2749 = vmatpush.bf16.msra.mxu0 %v1975
    %2750 = vmatpush.bf16.msra.mxu0 %v1967
    %2751 = vmatpush.bf16.msra.mxu0 %v1959
    %2752 = vmatpush.bf16.msra.mxu0 %v1951
    %2753 = vmatpush.bf16.msra.mxu0 %v1943
    %2754 = vmatpush.bf16.msra.mxu0 %v1935
    %2755 = vmatmul.bf16.gmra.mxu0 %v881
    %v2756 = vpop.f32.mrf.mxu0
    %v2757 = vadd.f32 %v1151, %v2756
    %v2758 = vpop.f32.mrf.mxu0
    %v2759 = vadd.f32 %v1151, %v2758
    %2760 = vmatmul.bf16.gmra.mxu0 %v885
    %v2761 = vpop.f32.mrf.mxu0
    %v2762 = vadd.f32 %v1151, %v2761
    %v2763 = vpop.f32.mrf.mxu0
    %v2764 = vadd.f32 %v1151, %v2763
    %2765 = vdwg.mxu0
    %2766 = vmatpush.bf16.msra.mxu0 %v2055
    %2767 = vmatpush.bf16.msra.mxu0 %v2047
    %2768 = vmatpush.bf16.msra.mxu0 %v2039
    %2769 = vmatpush.bf16.msra.mxu0 %v2031
    %2770 = vmatpush.bf16.msra.mxu0 %v2023
    %2771 = vmatpush.bf16.msra.mxu0 %v2015
    %2772 = vmatpush.bf16.msra.mxu0 %v2007
    %2773 = vmatpush.bf16.msra.mxu0 %v1999
    %2774 = vmatmul.bf16.gmra.mxu0 %v882
    %v2775 = vpop.f32.mrf.mxu0
    %v2776 = vadd.f32 %v2757, %v2775
    %v2777 = vpop.f32.mrf.mxu0
    %v2778 = vadd.f32 %v2759, %v2777
    %2779 = vmatmul.bf16.gmra.mxu0 %v886
    %v2780 = vpop.f32.mrf.mxu0
    %v2781 = vadd.f32 %v2762, %v2780
    %v2782 = vpop.f32.mrf.mxu0
    %v2783 = vadd.f32 %v2764, %v2782
    %2784 = vdwg.mxu0
    %2785 = vmatpush.bf16.msra.mxu0 %v2119
    %2786 = vmatpush.bf16.msra.mxu0 %v2111
    %2787 = vmatpush.bf16.msra.mxu0 %v2103
    %2788 = vmatpush.bf16.msra.mxu0 %v2095
    %2789 = vmatpush.bf16.msra.mxu0 %v2087
    %2790 = vmatpush.bf16.msra.mxu0 %v2079
    %2791 = vmatpush.bf16.msra.mxu0 %v2071
    %2792 = vmatpush.bf16.msra.mxu0 %v2063
    %2793 = vmatmul.bf16.gmra.mxu0 %v883
    %v2794 = vpop.f32.mrf.mxu0
    %v2795 = vadd.f32 %v2776, %v2794
    %v2796 = vpop.f32.mrf.mxu0
    %v2797 = vadd.f32 %v2778, %v2796
    %2798 = vmatmul.bf16.gmra.mxu0 %v887
    %v2799 = vpop.f32.mrf.mxu0
    %v2800 = vadd.f32 %v2781, %v2799
    %v2801 = vpop.f32.mrf.mxu0
    %v2802 = vadd.f32 %v2783, %v2801
    %2803 = vdwg.mxu0
    %2804 = vmatpush.bf16.msra.mxu0 %v2183
    %2805 = vmatpush.bf16.msra.mxu0 %v2175
    %2806 = vmatpush.bf16.msra.mxu0 %v2167
    %2807 = vmatpush.bf16.msra.mxu0 %v2159
    %2808 = vmatpush.bf16.msra.mxu0 %v2151
    %2809 = vmatpush.bf16.msra.mxu0 %v2143
    %2810 = vmatpush.bf16.msra.mxu0 %v2135
    %2811 = vmatpush.bf16.msra.mxu0 %v2127
    %2812 = vmatmul.bf16.gmra.mxu0 %v884
    %v2813 = vpop.f32.mrf.mxu0
    %v2814 = vadd.f32 %v2795, %v2813
    %v2815 = vpop.f32.mrf.mxu0
    %v2816 = vadd.f32 %v2797, %v2815
    %2817 = vmatmul.bf16.gmra.mxu0 %v888
    %v2818 = vpop.f32.mrf.mxu0
    %v2819 = vadd.f32 %v2800, %v2818
    %v2820 = vpop.f32.mrf.mxu0
    %v2821 = vadd.f32 %v2802, %v2820
    %2822 = vdwg.mxu0
    %2823 = vmatpush.bf16.msra.mxu0 %v1992
    %2824 = vmatpush.bf16.msra.mxu0 %v1984
    %2825 = vmatpush.bf16.msra.mxu0 %v1976
    %2826 = vmatpush.bf16.msra.mxu0 %v1968
    %2827 = vmatpush.bf16.msra.mxu0 %v1960
    %2828 = vmatpush.bf16.msra.mxu0 %v1952
    %2829 = vmatpush.bf16.msra.mxu0 %v1944
    %2830 = vmatpush.bf16.msra.mxu0 %v1936
    %2831 = vmatmul.bf16.gmra.mxu0 %v881
    %v2832 = vpop.f32.mrf.mxu0
    %v2833 = vadd.f32 %v1152, %v2832
    %v2834 = vpop.f32.mrf.mxu0
    %v2835 = vadd.f32 %v1152, %v2834
    %2836 = vmatmul.bf16.gmra.mxu0 %v885
    %v2837 = vpop.f32.mrf.mxu0
    %v2838 = vadd.f32 %v1152, %v2837
    %v2839 = vpop.f32.mrf.mxu0
    %v2840 = vadd.f32 %v1152, %v2839
    %2841 = vdwg.mxu0
    %2842 = vmatpush.bf16.msra.mxu0 %v2056
    %2843 = vmatpush.bf16.msra.mxu0 %v2048
    %2844 = vmatpush.bf16.msra.mxu0 %v2040
    %2845 = vmatpush.bf16.msra.mxu0 %v2032
    %2846 = vmatpush.bf16.msra.mxu0 %v2024
    %2847 = vmatpush.bf16.msra.mxu0 %v2016
    %2848 = vmatpush.bf16.msra.mxu0 %v2008
    %2849 = vmatpush.bf16.msra.mxu0 %v2000
    %2850 = vmatmul.bf16.gmra.mxu0 %v882
    %v2851 = vpop.f32.mrf.mxu0
    %v2852 = vadd.f32 %v2833, %v2851
    %v2853 = vpop.f32.mrf.mxu0
    %v2854 = vadd.f32 %v2835, %v2853
    %2855 = vmatmul.bf16.gmra.mxu0 %v886
    %v2856 = vpop.f32.mrf.mxu0
    %v2857 = vadd.f32 %v2838, %v2856
    %v2858 = vpop.f32.mrf.mxu0
    %v2859 = vadd.f32 %v2840, %v2858
    %2860 = vdwg.mxu0
    %2861 = vmatpush.bf16.msra.mxu0 %v2120
    %2862 = vmatpush.bf16.msra.mxu0 %v2112
    %2863 = vmatpush.bf16.msra.mxu0 %v2104
    %2864 = vmatpush.bf16.msra.mxu0 %v2096
    %2865 = vmatpush.bf16.msra.mxu0 %v2088
    %2866 = vmatpush.bf16.msra.mxu0 %v2080
    %2867 = vmatpush.bf16.msra.mxu0 %v2072
    %2868 = vmatpush.bf16.msra.mxu0 %v2064
    %2869 = vmatmul.bf16.gmra.mxu0 %v883
    %v2870 = vpop.f32.mrf.mxu0
    %v2871 = vadd.f32 %v2852, %v2870
    %v2872 = vpop.f32.mrf.mxu0
    %v2873 = vadd.f32 %v2854, %v2872
    %2874 = vmatmul.bf16.gmra.mxu0 %v887
    %v2875 = vpop.f32.mrf.mxu0
    %v2876 = vadd.f32 %v2857, %v2875
    %v2877 = vpop.f32.mrf.mxu0
    %v2878 = vadd.f32 %v2859, %v2877
    %2879 = vdwg.mxu0
    %2880 = vmatpush.bf16.msra.mxu0 %v2184
    %2881 = vmatpush.bf16.msra.mxu0 %v2176
    %2882 = vmatpush.bf16.msra.mxu0 %v2168
    %2883 = vmatpush.bf16.msra.mxu0 %v2160
    %2884 = vmatpush.bf16.msra.mxu0 %v2152
    %2885 = vmatpush.bf16.msra.mxu0 %v2144
    %2886 = vmatpush.bf16.msra.mxu0 %v2136
    %2887 = vmatpush.bf16.msra.mxu0 %v2128
    %2888 = vmatmul.bf16.gmra.mxu0 %v884
    %v2889 = vpop.f32.mrf.mxu0
    %v2890 = vadd.f32 %v2871, %v2889
    %v2891 = vpop.f32.mrf.mxu0
    %v2892 = vadd.f32 %v2873, %v2891
    %2893 = vmatmul.bf16.gmra.mxu0 %v888
    %v2894 = vpop.f32.mrf.mxu0
    %v2895 = vadd.f32 %v2876, %v2894
    %v2896 = vpop.f32.mrf.mxu0
    %v2897 = vadd.f32 %v2878, %v2896
    %2898 = vdwg.mxu0
    %2899 = vmatpush.bf16.msra.mxu0 %v1993
    %2900 = vmatpush.bf16.msra.mxu0 %v1985
    %2901 = vmatpush.bf16.msra.mxu0 %v1977
    %2902 = vmatpush.bf16.msra.mxu0 %v1969
    %2903 = vmatpush.bf16.msra.mxu0 %v1961
    %2904 = vmatpush.bf16.msra.mxu0 %v1953
    %2905 = vmatpush.bf16.msra.mxu0 %v1945
    %2906 = vmatpush.bf16.msra.mxu0 %v1937
    %2907 = vmatmul.bf16.gmra.mxu0 %v881
    %v2908 = vpop.f32.mrf.mxu0
    %v2909 = vadd.f32 %v1153, %v2908
    %v2910 = vpop.f32.mrf.mxu0
    %v2911 = vadd.f32 %v1153, %v2910
    %2912 = vmatmul.bf16.gmra.mxu0 %v885
    %v2913 = vpop.f32.mrf.mxu0
    %v2914 = vadd.f32 %v1153, %v2913
    %v2915 = vpop.f32.mrf.mxu0
    %v2916 = vadd.f32 %v1153, %v2915
    %2917 = vdwg.mxu0
    %2918 = vmatpush.bf16.msra.mxu0 %v2057
    %2919 = vmatpush.bf16.msra.mxu0 %v2049
    %2920 = vmatpush.bf16.msra.mxu0 %v2041
    %2921 = vmatpush.bf16.msra.mxu0 %v2033
    %2922 = vmatpush.bf16.msra.mxu0 %v2025
    %2923 = vmatpush.bf16.msra.mxu0 %v2017
    %2924 = vmatpush.bf16.msra.mxu0 %v2009
    %2925 = vmatpush.bf16.msra.mxu0 %v2001
    %2926 = vmatmul.bf16.gmra.mxu0 %v882
    %v2927 = vpop.f32.mrf.mxu0
    %v2928 = vadd.f32 %v2909, %v2927
    %v2929 = vpop.f32.mrf.mxu0
    %v2930 = vadd.f32 %v2911, %v2929
    %2931 = vmatmul.bf16.gmra.mxu0 %v886
    %v2932 = vpop.f32.mrf.mxu0
    %v2933 = vadd.f32 %v2914, %v2932
    %v2934 = vpop.f32.mrf.mxu0
    %v2935 = vadd.f32 %v2916, %v2934
    %2936 = vdwg.mxu0
    %2937 = vmatpush.bf16.msra.mxu0 %v2121
    %2938 = vmatpush.bf16.msra.mxu0 %v2113
    %2939 = vmatpush.bf16.msra.mxu0 %v2105
    %2940 = vmatpush.bf16.msra.mxu0 %v2097
    %2941 = vmatpush.bf16.msra.mxu0 %v2089
    %2942 = vmatpush.bf16.msra.mxu0 %v2081
    %2943 = vmatpush.bf16.msra.mxu0 %v2073
    %2944 = vmatpush.bf16.msra.mxu0 %v2065
    %2945 = vmatmul.bf16.gmra.mxu0 %v883
    %v2946 = vpop.f32.mrf.mxu0
    %v2947 = vadd.f32 %v2928, %v2946
    %v2948 = vpop.f32.mrf.mxu0
    %v2949 = vadd.f32 %v2930, %v2948
    %2950 = vmatmul.bf16.gmra.mxu0 %v887
    %v2951 = vpop.f32.mrf.mxu0
    %v2952 = vadd.f32 %v2933, %v2951
    %v2953 = vpop.f32.mrf.mxu0
    %v2954 = vadd.f32 %v2935, %v2953
    %2955 = vdwg.mxu0
    %2956 = vmatpush.bf16.msra.mxu0 %v2185
    %2957 = vmatpush.bf16.msra.mxu0 %v2177
    %2958 = vmatpush.bf16.msra.mxu0 %v2169
    %2959 = vmatpush.bf16.msra.mxu0 %v2161
    %2960 = vmatpush.bf16.msra.mxu0 %v2153
    %2961 = vmatpush.bf16.msra.mxu0 %v2145
    %2962 = vmatpush.bf16.msra.mxu0 %v2137
    %2963 = vmatpush.bf16.msra.mxu0 %v2129
    %2964 = vmatmul.bf16.gmra.mxu0 %v884
    %v2965 = vpop.f32.mrf.mxu0
    %v2966 = vadd.f32 %v2947, %v2965
    %v2967 = vpop.f32.mrf.mxu0
    %v2968 = vadd.f32 %v2949, %v2967
    %2969 = vmatmul.bf16.gmra.mxu0 %v888
    %v2970 = vpop.f32.mrf.mxu0
    %v2971 = vadd.f32 %v2952, %v2970
    %v2972 = vpop.f32.mrf.mxu0
    %v2973 = vadd.f32 %v2954, %v2972
    %2974 = vdwg.mxu0
    %2975 = vmatpush.bf16.msra.mxu0 %v1994
    %2976 = vmatpush.bf16.msra.mxu0 %v1986
    %2977 = vmatpush.bf16.msra.mxu0 %v1978
    %2978 = vmatpush.bf16.msra.mxu0 %v1970
    %2979 = vmatpush.bf16.msra.mxu0 %v1962
    %2980 = vmatpush.bf16.msra.mxu0 %v1954
    %2981 = vmatpush.bf16.msra.mxu0 %v1946
    %2982 = vmatpush.bf16.msra.mxu0 %v1938
    %2983 = vmatmul.bf16.gmra.mxu0 %v881
    %v2984 = vpop.f32.mrf.mxu0
    %v2985 = vadd.f32 %v1154, %v2984
    %v2986 = vpop.f32.mrf.mxu0
    %v2987 = vadd.f32 %v1154, %v2986
    %2988 = vmatmul.bf16.gmra.mxu0 %v885
    %v2989 = vpop.f32.mrf.mxu0
    %v2990 = vadd.f32 %v1154, %v2989
    %v2991 = vpop.f32.mrf.mxu0
    %v2992 = vadd.f32 %v1154, %v2991
    %2993 = vdwg.mxu0
    %2994 = vmatpush.bf16.msra.mxu0 %v2058
    %2995 = vmatpush.bf16.msra.mxu0 %v2050
    %2996 = vmatpush.bf16.msra.mxu0 %v2042
    %2997 = vmatpush.bf16.msra.mxu0 %v2034
    %2998 = vmatpush.bf16.msra.mxu0 %v2026
    %2999 = vmatpush.bf16.msra.mxu0 %v2018
    %3000 = vmatpush.bf16.msra.mxu0 %v2010
    %3001 = vmatpush.bf16.msra.mxu0 %v2002
    %3002 = vmatmul.bf16.gmra.mxu0 %v882
    %v3003 = vpop.f32.mrf.mxu0
    %v3004 = vadd.f32 %v2985, %v3003
    %v3005 = vpop.f32.mrf.mxu0
    %v3006 = vadd.f32 %v2987, %v3005
    %3007 = vmatmul.bf16.gmra.mxu0 %v886
    %v3008 = vpop.f32.mrf.mxu0
    %v3009 = vadd.f32 %v2990, %v3008
    %v3010 = vpop.f32.mrf.mxu0
    %v3011 = vadd.f32 %v2992, %v3010
    %3012 = vdwg.mxu0
    %3013 = vmatpush.bf16.msra.mxu0 %v2122
    %3014 = vmatpush.bf16.msra.mxu0 %v2114
    %3015 = vmatpush.bf16.msra.mxu0 %v2106
    %3016 = vmatpush.bf16.msra.mxu0 %v2098
    %3017 = vmatpush.bf16.msra.mxu0 %v2090
    %3018 = vmatpush.bf16.msra.mxu0 %v2082
    %3019 = vmatpush.bf16.msra.mxu0 %v2074
    %3020 = vmatpush.bf16.msra.mxu0 %v2066
    %3021 = vmatmul.bf16.gmra.mxu0 %v883
    %v3022 = vpop.f32.mrf.mxu0
    %v3023 = vadd.f32 %v3004, %v3022
    %v3024 = vpop.f32.mrf.mxu0
    %v3025 = vadd.f32 %v3006, %v3024
    %3026 = vmatmul.bf16.gmra.mxu0 %v887
    %v3027 = vpop.f32.mrf.mxu0
    %v3028 = vadd.f32 %v3009, %v3027
    %v3029 = vpop.f32.mrf.mxu0
    %v3030 = vadd.f32 %v3011, %v3029
    %3031 = vdwg.mxu0
    %3032 = vmatpush.bf16.msra.mxu0 %v2186
    %3033 = vmatpush.bf16.msra.mxu0 %v2178
    %3034 = vmatpush.bf16.msra.mxu0 %v2170
    %3035 = vmatpush.bf16.msra.mxu0 %v2162
    %3036 = vmatpush.bf16.msra.mxu0 %v2154
    %3037 = vmatpush.bf16.msra.mxu0 %v2146
    %3038 = vmatpush.bf16.msra.mxu0 %v2138
    %3039 = vmatpush.bf16.msra.mxu0 %v2130
    %3040 = vmatmul.bf16.gmra.mxu0 %v884
    %v3041 = vpop.f32.mrf.mxu0
    %v3042 = vadd.f32 %v3023, %v3041
    %v3043 = vpop.f32.mrf.mxu0
    %v3044 = vadd.f32 %v3025, %v3043
    %3045 = vmatmul.bf16.gmra.mxu0 %v888
    %v3046 = vpop.f32.mrf.mxu0
    %v3047 = vadd.f32 %v3028, %v3046
    %v3048 = vpop.f32.mrf.mxu0
    %v3049 = vadd.f32 %v3030, %v3048
    %3050 = vdwg.mxu0
    %v3051 = vmax.f32 %v2510, 0.0
    %v3052 = vmax.f32 %v2586, 0.0
    %v3053 = vmax.f32 %v2662, 0.0
    %v3054 = vmax.f32 %v2738, 0.0
    %v3055 = vmax.f32 %v2814, 0.0
    %v3056 = vmax.f32 %v2890, 0.0
    %v3057 = vmax.f32 %v2966, 0.0
    %v3058 = vmax.f32 %v3042, 0.0
    %v3059 = vmax.f32 %v2512, 0.0
    %v3060 = vmax.f32 %v2588, 0.0
    %v3061 = vmax.f32 %v2664, 0.0
    %v3062 = vmax.f32 %v2740, 0.0
    %v3063 = vmax.f32 %v2816, 0.0
    %v3064 = vmax.f32 %v2892, 0.0
    %v3065 = vmax.f32 %v2968, 0.0
    %v3066 = vmax.f32 %v3044, 0.0
    %v3067 = vmax.f32 %v2515, 0.0
    %v3068 = vmax.f32 %v2591, 0.0
    %v3069 = vmax.f32 %v2667, 0.0
    %v3070 = vmax.f32 %v2743, 0.0
    %v3071 = vmax.f32 %v2819, 0.0
    %v3072 = vmax.f32 %v2895, 0.0
    %v3073 = vmax.f32 %v2971, 0.0
    %v3074 = vmax.f32 %v3047, 0.0
    %v3075 = vmax.f32 %v2517, 0.0
    %v3076 = vmax.f32 %v2593, 0.0
    %v3077 = vmax.f32 %v2669, 0.0
    %v3078 = vmax.f32 %v2745, 0.0
    %v3079 = vmax.f32 %v2821, 0.0
    %v3080 = vmax.f32 %v2897, 0.0
    %v3081 = vmax.f32 %v2973, 0.0
    %v3082 = vmax.f32 %v3049, 0.0
    %v3083 = vpack.c.bf16 %v3059, %v3051
    %v3084 = vpack.c.bf16 %v3060, %v3052
    %v3085 = vpack.c.bf16 %v3061, %v3053
    %v3086 = vpack.c.bf16 %v3062, %v3054
    %v3087 = vpack.c.bf16 %v3063, %v3055
    %v3088 = vpack.c.bf16 %v3064, %v3056
    %v3089 = vpack.c.bf16 %v3065, %v3057
    %v3090 = vpack.c.bf16 %v3066, %v3058
    %v3091 = vpack.c.bf16 %v3075, %v3067
    %v3092 = vpack.c.bf16 %v3076, %v3068
    %v3093 = vpack.c.bf16 %v3077, %v3069
    %v3094 = vpack.c.bf16 %v3078, %v3070
    %v3095 = vpack.c.bf16 %v3079, %v3071
    %v3096 = vpack.c.bf16 %v3080, %v3072
    %v3097 = vpack.c.bf16 %v3081, %v3073
    %v3098 = vpack.c.bf16 %v3082, %v3074
    %v3099 = vld [vmem:[#allocation13] sm:$0xff]
    %v3100 = vld [vmem:[#allocation13 + $0x8] sm:$0xff]
    %v3101 = vld [vmem:[#allocation13 + $0x10] sm:$0xff]
    %v3102 = vld [vmem:[#allocation13 + $0x18] sm:$0xf]
    %v3103 = vld [vmem:[#allocation13 + $0x1c] sm:$0xff]
    %v3104 = vld [vmem:[#allocation13 + $0x24] sm:$0xff]
    %v3105 = vld [vmem:[#allocation13 + $0x2c] sm:$0xff]
    %v3106 = vld [vmem:[#allocation13 + $0x34] sm:$0xf]
    %v3107 = vld [vmem:[#allocation13 + $0x38] sm:$0xff]
    %v3108 = vld [vmem:[#allocation13 + $0x40] sm:$0xff]
    %v3109 = vld [vmem:[#allocation13 + $0x48] sm:$0xff]
    %v3110 = vld [vmem:[#allocation13 + $0x50] sm:$0xf]
    %v3111 = vld [vmem:[#allocation13 + $0x54] sm:$0xff]
    %v3112 = vld [vmem:[#allocation13 + $0x5c] sm:$0xff]
    %v3113 = vld [vmem:[#allocation13 + $0x64] sm:$0xff]
    %v3114 = vld [vmem:[#allocation13 + $0x6c] sm:$0xf]
    %v3115 = vld [vmem:[#allocation13 + $0x70] sm:$0xff]
    %v3116 = vld [vmem:[#allocation13 + $0x78] sm:$0xff]
    %v3117 = vld [vmem:[#allocation13 + $0x80] sm:$0xff]
    %v3118 = vld [vmem:[#allocation13 + $0x88] sm:$0xf]
    %v3119 = vld [vmem:[#allocation13 + $0x8c] sm:$0xff]
    %v3120 = vld [vmem:[#allocation13 + $0x94] sm:$0xff]
    %v3121 = vld [vmem:[#allocation13 + $0x9c] sm:$0xff]
    %v3122 = vld [vmem:[#allocation13 + $0xa4] sm:$0xf]
    %v3123 = vld [vmem:[#allocation13 + $0xa8] sm:$0xff]
    %v3124 = vld [vmem:[#allocation13 + $0xb0] sm:$0xff]
    %v3125 = vld [vmem:[#allocation13 + $0xb8] sm:$0xff]
    %v3126 = vld [vmem:[#allocation13 + $0xc0] sm:$0xf]
    %v3127 = vld [vmem:[#allocation13 + $0xc4] sm:$0xff]
    %v3128 = vld [vmem:[#allocation13 + $0xcc] sm:$0xff]
    %v3129 = vld [vmem:[#allocation13 + $0xd4] sm:$0xff]
    %v3130 = vld [vmem:[#allocation13 + $0xdc] sm:$0xf]
    %v3131 = vld [vmem:[#allocation13 + $0xe0] sm:$0xff]
    %v3132 = vld [vmem:[#allocation13 + $0xe8] sm:$0xff]
    %v3133 = vld [vmem:[#allocation13 + $0xf0] sm:$0xff]
    %v3134 = vld [vmem:[#allocation13 + $0xf8] sm:$0xf]
    %v3135 = vld [vmem:[#allocation13 + $0xfc] sm:$0xff]
    %v3136 = vld [vmem:[#allocation13 + $0x104] sm:$0xff]
    %v3137 = vld [vmem:[#allocation13 + $0x10c] sm:$0xff]
    %v3138 = vld [vmem:[#allocation13 + $0x114] sm:$0xf]
    %v3139 = vld [vmem:[#allocation13 + $0x118] sm:$0xff]
    %v3140 = vld [vmem:[#allocation13 + $0x120] sm:$0xff]
    %v3141 = vld [vmem:[#allocation13 + $0x128] sm:$0xff]
    %v3142 = vld [vmem:[#allocation13 + $0x130] sm:$0xf]
    %v3143 = vld [vmem:[#allocation13 + $0x134] sm:$0xff]
    %v3144 = vld [vmem:[#allocation13 + $0x13c] sm:$0xff]
    %v3145 = vld [vmem:[#allocation13 + $0x144] sm:$0xff]
    %v3146 = vld [vmem:[#allocation13 + $0x14c] sm:$0xf]
    %v3147 = vld [vmem:[#allocation13 + $0x150] sm:$0xff]
    %v3148 = vld [vmem:[#allocation13 + $0x158] sm:$0xff]
    %v3149 = vld [vmem:[#allocation13 + $0x160] sm:$0xff]
    %v3150 = vld [vmem:[#allocation13 + $0x168] sm:$0xf]
    %v3151 = vld [vmem:[#allocation13 + $0x16c] sm:$0xff]
    %v3152 = vld [vmem:[#allocation13 + $0x174] sm:$0xff]
    %v3153 = vld [vmem:[#allocation13 + $0x17c] sm:$0xff]
    %v3154 = vld [vmem:[#allocation13 + $0x184] sm:$0xf]
    %v3155 = vld [vmem:[#allocation13 + $0x188] sm:$0xff]
    %v3156 = vld [vmem:[#allocation13 + $0x190] sm:$0xff]
    %v3157 = vld [vmem:[#allocation13 + $0x198] sm:$0xff]
    %v3158 = vld [vmem:[#allocation13 + $0x1a0] sm:$0xf]
    %v3159 = vld [vmem:[#allocation13 + $0x1a4] sm:$0xff]
    %v3160 = vld [vmem:[#allocation13 + $0x1ac] sm:$0xff]
    %v3161 = vld [vmem:[#allocation13 + $0x1b4] sm:$0xff]
    %v3162 = vld [vmem:[#allocation13 + $0x1bc] sm:$0xf]
    %v3163 = vld [vmem:[#allocation13 + $0x1c0] sm:$0xff]
    %v3164 = vld [vmem:[#allocation13 + $0x1c8] sm:$0xff]
    %v3165 = vld [vmem:[#allocation13 + $0x1d0] sm:$0xff]
    %v3166 = vld [vmem:[#allocation13 + $0x1d8] sm:$0xf]
    %v3167 = vld [vmem:[#allocation13 + $0x1dc] sm:$0xff]
    %v3168 = vld [vmem:[#allocation13 + $0x1e4] sm:$0xff]
    %v3169 = vld [vmem:[#allocation13 + $0x1ec] sm:$0xff]
    %v3170 = vld [vmem:[#allocation13 + $0x1f4] sm:$0xf]
    %v3171 = vld [vmem:[#allocation13 + $0x1f8] sm:$0xff]
    %v3172 = vld [vmem:[#allocation13 + $0x200] sm:$0xff]
    %v3173 = vld [vmem:[#allocation13 + $0x208] sm:$0xff]
    %v3174 = vld [vmem:[#allocation13 + $0x210] sm:$0xf]
    %v3175 = vld [vmem:[#allocation13 + $0x214] sm:$0xff]
    %v3176 = vld [vmem:[#allocation13 + $0x21c] sm:$0xff]
    %v3177 = vld [vmem:[#allocation13 + $0x224] sm:$0xff]
    %v3178 = vld [vmem:[#allocation13 + $0x22c] sm:$0xf]
    %v3179 = vld [vmem:[#allocation13 + $0x230] sm:$0xff]
    %v3180 = vld [vmem:[#allocation13 + $0x238] sm:$0xff]
    %v3181 = vld [vmem:[#allocation13 + $0x240] sm:$0xff]
    %v3182 = vld [vmem:[#allocation13 + $0x248] sm:$0xf]
    %v3183 = vld [vmem:[#allocation13 + $0x24c] sm:$0xff]
    %v3184 = vld [vmem:[#allocation13 + $0x254] sm:$0xff]
    %v3185 = vld [vmem:[#allocation13 + $0x25c] sm:$0xff]
    %v3186 = vld [vmem:[#allocation13 + $0x264] sm:$0xf]
    %v3187 = vld [vmem:[#allocation13 + $0x268] sm:$0xff]
    %v3188 = vld [vmem:[#allocation13 + $0x270] sm:$0xff]
    %v3189 = vld [vmem:[#allocation13 + $0x278] sm:$0xff]
    %v3190 = vld [vmem:[#allocation13 + $0x280] sm:$0xf]
    %v3191 = vld [vmem:[#allocation13 + $0x284] sm:$0xff]
    %v3192 = vld [vmem:[#allocation13 + $0x28c] sm:$0xff]
    %v3193 = vld [vmem:[#allocation13 + $0x294] sm:$0xff]
    %v3194 = vld [vmem:[#allocation13 + $0x29c] sm:$0xf]
    %v3195 = vld [vmem:[#allocation13 + $0x2a0] sm:$0xff]
    %v3196 = vld [vmem:[#allocation13 + $0x2a8] sm:$0xff]
    %v3197 = vld [vmem:[#allocation13 + $0x2b0] sm:$0xff]
    %v3198 = vld [vmem:[#allocation13 + $0x2b8] sm:$0xf]
    %v3199 = vld [vmem:[#allocation13 + $0x2bc] sm:$0xff]
    %v3200 = vld [vmem:[#allocation13 + $0x2c4] sm:$0xff]
    %v3201 = vld [vmem:[#allocation13 + $0x2cc] sm:$0xff]
    %v3202 = vld [vmem:[#allocation13 + $0x2d4] sm:$0xf]
    %v3203 = vld [vmem:[#allocation13 + $0x2d8] sm:$0xff]
    %v3204 = vld [vmem:[#allocation13 + $0x2e0] sm:$0xff]
    %v3205 = vld [vmem:[#allocation13 + $0x2e8] sm:$0xff]
    %v3206 = vld [vmem:[#allocation13 + $0x2f0] sm:$0xf]
    %v3207 = vld [vmem:[#allocation13 + $0x2f4] sm:$0xff]
    %v3208 = vld [vmem:[#allocation13 + $0x2fc] sm:$0xff]
    %v3209 = vld [vmem:[#allocation13 + $0x304] sm:$0xff]
    %v3210 = vld [vmem:[#allocation13 + $0x30c] sm:$0xf]
    %v3211 = vld [vmem:[#allocation13 + $0x310] sm:$0xff]
    %v3212 = vld [vmem:[#allocation13 + $0x318] sm:$0xff]
    %v3213 = vld [vmem:[#allocation13 + $0x320] sm:$0xff]
    %v3214 = vld [vmem:[#allocation13 + $0x328] sm:$0xf]
    %v3215 = vld [vmem:[#allocation13 + $0x32c] sm:$0xff]
    %v3216 = vld [vmem:[#allocation13 + $0x334] sm:$0xff]
    %v3217 = vld [vmem:[#allocation13 + $0x33c] sm:$0xff]
    %v3218 = vld [vmem:[#allocation13 + $0x344] sm:$0xf]
    %v3219 = vld [vmem:[#allocation13 + $0x348] sm:$0xff]
    %v3220 = vld [vmem:[#allocation13 + $0x350] sm:$0xff]
    %v3221 = vld [vmem:[#allocation13 + $0x358] sm:$0xff]
    %v3222 = vld [vmem:[#allocation13 + $0x360] sm:$0xf]
    %v3223 = vld [vmem:[#allocation13 + $0x364] sm:$0xff]
    %v3224 = vld [vmem:[#allocation13 + $0x36c] sm:$0xff]
    %v3225 = vld [vmem:[#allocation13 + $0x374] sm:$0xff]
    %v3226 = vld [vmem:[#allocation13 + $0x37c] sm:$0xf]
    %v3227 = vld [vmem:[#allocation13 + $0x380] sm:$0xff]
    %v3228 = vld [vmem:[#allocation13 + $0x388] sm:$0xff]
    %v3229 = vld [vmem:[#allocation13 + $0x390] sm:$0xff]
    %v3230 = vld [vmem:[#allocation13 + $0x398] sm:$0xf]
    %v3231 = vld [vmem:[#allocation13 + $0x39c] sm:$0xff]
    %v3232 = vld [vmem:[#allocation13 + $0x3a4] sm:$0xff]
    %v3233 = vld [vmem:[#allocation13 + $0x3ac] sm:$0xff]
    %v3234 = vld [vmem:[#allocation13 + $0x3b4] sm:$0xf]
    %v3235 = vld [vmem:[#allocation13 + $0x3b8] sm:$0xff]
    %v3236 = vld [vmem:[#allocation13 + $0x3c0] sm:$0xff]
    %v3237 = vld [vmem:[#allocation13 + $0x3c8] sm:$0xff]
    %v3238 = vld [vmem:[#allocation13 + $0x3d0] sm:$0xf]
    %v3239 = vld [vmem:[#allocation13 + $0x3d4] sm:$0xff]
    %v3240 = vld [vmem:[#allocation13 + $0x3dc] sm:$0xff]
    %v3241 = vld [vmem:[#allocation13 + $0x3e4] sm:$0xff]
    %v3242 = vld [vmem:[#allocation13 + $0x3ec] sm:$0xf]
    %v3243 = vld [vmem:[#allocation13 + $0x3f0] sm:$0xff]
    %v3244 = vld [vmem:[#allocation13 + $0x3f8] sm:$0xff]
    %v3245 = vld [vmem:[#allocation13 + $0x400] sm:$0xff]
    %v3246 = vld [vmem:[#allocation13 + $0x408] sm:$0xf]
    %v3247 = vld [vmem:[#allocation13 + $0x40c] sm:$0xff]
    %v3248 = vld [vmem:[#allocation13 + $0x414] sm:$0xff]
    %v3249 = vld [vmem:[#allocation13 + $0x41c] sm:$0xff]
    %v3250 = vld [vmem:[#allocation13 + $0x424] sm:$0xf]
    %v3251 = vld [vmem:[#allocation13 + $0x428] sm:$0xff]
    %v3252 = vld [vmem:[#allocation13 + $0x430] sm:$0xff]
    %v3253 = vld [vmem:[#allocation13 + $0x438] sm:$0xff]
    %v3254 = vld [vmem:[#allocation13 + $0x440] sm:$0xf]
    %v3255 = vld [vmem:[#allocation13 + $0x444] sm:$0xff]
    %v3256 = vld [vmem:[#allocation13 + $0x44c] sm:$0xff]
    %v3257 = vld [vmem:[#allocation13 + $0x454] sm:$0xff]
    %v3258 = vld [vmem:[#allocation13 + $0x45c] sm:$0xf]
    %v3259 = vld [vmem:[#allocation13 + $0x460] sm:$0xff]
    %v3260 = vld [vmem:[#allocation13 + $0x468] sm:$0xff]
    %v3261 = vld [vmem:[#allocation13 + $0x470] sm:$0xff]
    %v3262 = vld [vmem:[#allocation13 + $0x478] sm:$0xf]
    %v3263 = vld [vmem:[#allocation13 + $0x47c] sm:$0xff]
    %v3264 = vld [vmem:[#allocation13 + $0x484] sm:$0xff]
    %v3265 = vld [vmem:[#allocation13 + $0x48c] sm:$0xff]
    %v3266 = vld [vmem:[#allocation13 + $0x494] sm:$0xf]
    %v3267 = vld [vmem:[#allocation13 + $0x498] sm:$0xff]
    %v3268 = vld [vmem:[#allocation13 + $0x4a0] sm:$0xff]
    %v3269 = vld [vmem:[#allocation13 + $0x4a8] sm:$0xff]
    %v3270 = vld [vmem:[#allocation13 + $0x4b0] sm:$0xf]
    %v3271 = vld [vmem:[#allocation13 + $0x4b4] sm:$0xff]
    %v3272 = vld [vmem:[#allocation13 + $0x4bc] sm:$0xff]
    %v3273 = vld [vmem:[#allocation13 + $0x4c4] sm:$0xff]
    %v3274 = vld [vmem:[#allocation13 + $0x4cc] sm:$0xf]
    %v3275 = vld [vmem:[#allocation13 + $0x4d0] sm:$0xff]
    %v3276 = vld [vmem:[#allocation13 + $0x4d8] sm:$0xff]
    %v3277 = vld [vmem:[#allocation13 + $0x4e0] sm:$0xff]
    %v3278 = vld [vmem:[#allocation13 + $0x4e8] sm:$0xf]
    %v3279 = vld [vmem:[#allocation13 + $0x4ec] sm:$0xff]
    %v3280 = vld [vmem:[#allocation13 + $0x4f4] sm:$0xff]
    %v3281 = vld [vmem:[#allocation13 + $0x4fc] sm:$0xff]
    %v3282 = vld [vmem:[#allocation13 + $0x504] sm:$0xf]
    %v3283 = vld [vmem:[#allocation13 + $0x508] sm:$0xff]
    %v3284 = vld [vmem:[#allocation13 + $0x510] sm:$0xff]
    %v3285 = vld [vmem:[#allocation13 + $0x518] sm:$0xff]
    %v3286 = vld [vmem:[#allocation13 + $0x520] sm:$0xf]
    %v3287 = vld [vmem:[#allocation13 + $0x524] sm:$0xff]
    %v3288 = vld [vmem:[#allocation13 + $0x52c] sm:$0xff]
    %v3289 = vld [vmem:[#allocation13 + $0x534] sm:$0xff]
    %v3290 = vld [vmem:[#allocation13 + $0x53c] sm:$0xf]
    %v3291 = vld [vmem:[#allocation13 + $0x540] sm:$0xff]
    %v3292 = vld [vmem:[#allocation13 + $0x548] sm:$0xff]
    %v3293 = vld [vmem:[#allocation13 + $0x550] sm:$0xff]
    %v3294 = vld [vmem:[#allocation13 + $0x558] sm:$0xf]
    %v3295 = vld [vmem:[#allocation13 + $0x55c] sm:$0xff]
    %v3296 = vld [vmem:[#allocation13 + $0x564] sm:$0xff]
    %v3297 = vld [vmem:[#allocation13 + $0x56c] sm:$0xff]
    %v3298 = vld [vmem:[#allocation13 + $0x574] sm:$0xf]
    %v3299 = vld [vmem:[#allocation13 + $0x578] sm:$0xff]
    %v3300 = vld [vmem:[#allocation13 + $0x580] sm:$0xff]
    %v3301 = vld [vmem:[#allocation13 + $0x588] sm:$0xff]
    %v3302 = vld [vmem:[#allocation13 + $0x590] sm:$0xf]
    %v3303 = vld [vmem:[#allocation13 + $0x594] sm:$0xff]
    %v3304 = vld [vmem:[#allocation13 + $0x59c] sm:$0xff]
    %v3305 = vld [vmem:[#allocation13 + $0x5a4] sm:$0xff]
    %v3306 = vld [vmem:[#allocation13 + $0x5ac] sm:$0xf]
    %v3307 = vld [vmem:[#allocation13 + $0x5b0] sm:$0xff]
    %v3308 = vld [vmem:[#allocation13 + $0x5b8] sm:$0xff]
    %v3309 = vld [vmem:[#allocation13 + $0x5c0] sm:$0xff]
    %v3310 = vld [vmem:[#allocation13 + $0x5c8] sm:$0xf]
    %v3311 = vld [vmem:[#allocation13 + $0x5cc] sm:$0xff]
    %v3312 = vld [vmem:[#allocation13 + $0x5d4] sm:$0xff]
    %v3313 = vld [vmem:[#allocation13 + $0x5dc] sm:$0xff]
    %v3314 = vld [vmem:[#allocation13 + $0x5e4] sm:$0xf]
    %v3315 = vld [vmem:[#allocation13 + $0x5e8] sm:$0xff]
    %v3316 = vld [vmem:[#allocation13 + $0x5f0] sm:$0xff]
    %v3317 = vld [vmem:[#allocation13 + $0x5f8] sm:$0xff]
    %v3318 = vld [vmem:[#allocation13 + $0x600] sm:$0xf]
    %v3319 = vld [vmem:[#allocation13 + $0x604] sm:$0xff]
    %v3320 = vld [vmem:[#allocation13 + $0x60c] sm:$0xff]
    %v3321 = vld [vmem:[#allocation13 + $0x614] sm:$0xff]
    %v3322 = vld [vmem:[#allocation13 + $0x61c] sm:$0xf]
    %v3323 = vld [vmem:[#allocation13 + $0x620] sm:$0xff]
    %v3324 = vld [vmem:[#allocation13 + $0x628] sm:$0xff]
    %v3325 = vld [vmem:[#allocation13 + $0x630] sm:$0xff]
    %v3326 = vld [vmem:[#allocation13 + $0x638] sm:$0xf]
    %v3327 = vld [vmem:[#allocation13 + $0x63c] sm:$0xff]
    %v3328 = vld [vmem:[#allocation13 + $0x644] sm:$0xff]
    %v3329 = vld [vmem:[#allocation13 + $0x64c] sm:$0xff]
    %v3330 = vld [vmem:[#allocation13 + $0x654] sm:$0xf]
    %v3331 = vld [vmem:[#allocation13 + $0x658] sm:$0xff]
    %v3332 = vld [vmem:[#allocation13 + $0x660] sm:$0xff]
    %v3333 = vld [vmem:[#allocation13 + $0x668] sm:$0xff]
    %v3334 = vld [vmem:[#allocation13 + $0x670] sm:$0xf]
    %v3335 = vld [vmem:[#allocation13 + $0x674] sm:$0xff]
    %v3336 = vld [vmem:[#allocation13 + $0x67c] sm:$0xff]
    %v3337 = vld [vmem:[#allocation13 + $0x684] sm:$0xff]
    %v3338 = vld [vmem:[#allocation13 + $0x68c] sm:$0xf]
    %v3339 = vld [vmem:[#allocation13 + $0x690] sm:$0xff]
    %v3340 = vld [vmem:[#allocation13 + $0x698] sm:$0xff]
    %v3341 = vld [vmem:[#allocation13 + $0x6a0] sm:$0xff]
    %v3342 = vld [vmem:[#allocation13 + $0x6a8] sm:$0xf]
    %v3343 = vld [vmem:[#allocation13 + $0x6ac] sm:$0xff]
    %v3344 = vld [vmem:[#allocation13 + $0x6b4] sm:$0xff]
    %v3345 = vld [vmem:[#allocation13 + $0x6bc] sm:$0xff]
    %v3346 = vld [vmem:[#allocation13 + $0x6c4] sm:$0xf]
    %v3347 = vld [vmem:[#allocation13 + $0x6c8] sm:$0xff]
    %v3348 = vld [vmem:[#allocation13 + $0x6d0] sm:$0xff]
    %v3349 = vld [vmem:[#allocation13 + $0x6d8] sm:$0xff]
    %v3350 = vld [vmem:[#allocation13 + $0x6e0] sm:$0xf]
    %v3351 = vld [vmem:[#allocation13 + $0x6e4] sm:$0xff]
    %v3352 = vld [vmem:[#allocation13 + $0x6ec] sm:$0xff]
    %v3353 = vld [vmem:[#allocation13 + $0x6f4] sm:$0xff]
    %v3354 = vld [vmem:[#allocation13 + $0x6fc] sm:$0xf]
    %v3355 = vld [vmem:[#allocation13 + $0x700] sm:$0xff]
    %v3356 = vld [vmem:[#allocation13 + $0x708] sm:$0xff]
    %v3357 = vld [vmem:[#allocation13 + $0x710] sm:$0xff]
    %v3358 = vld [vmem:[#allocation13 + $0x718] sm:$0xf]
    %v3359 = vld [vmem:[#allocation13 + $0x71c] sm:$0xff]
    %v3360 = vld [vmem:[#allocation13 + $0x724] sm:$0xff]
    %v3361 = vld [vmem:[#allocation13 + $0x72c] sm:$0xff]
    %v3362 = vld [vmem:[#allocation13 + $0x734] sm:$0xf]
    %v3363 = vld [vmem:[#allocation13 + $0x738] sm:$0xff]
    %v3364 = vld [vmem:[#allocation13 + $0x740] sm:$0xff]
    %v3365 = vld [vmem:[#allocation13 + $0x748] sm:$0xff]
    %v3366 = vld [vmem:[#allocation13 + $0x750] sm:$0xf]
    %v3367 = vld [vmem:[#allocation13 + $0x754] sm:$0xff]
    %v3368 = vld [vmem:[#allocation13 + $0x75c] sm:$0xff]
    %v3369 = vld [vmem:[#allocation13 + $0x764] sm:$0xff]
    %v3370 = vld [vmem:[#allocation13 + $0x76c] sm:$0xf]
    %v3371 = vld [vmem:[#allocation13 + $0x770] sm:$0xff]
    %v3372 = vld [vmem:[#allocation13 + $0x778] sm:$0xff]
    %v3373 = vld [vmem:[#allocation13 + $0x780] sm:$0xff]
    %v3374 = vld [vmem:[#allocation13 + $0x788] sm:$0xf]
    %v3375 = vld [vmem:[#allocation13 + $0x78c] sm:$0xff]
    %v3376 = vld [vmem:[#allocation13 + $0x794] sm:$0xff]
    %v3377 = vld [vmem:[#allocation13 + $0x79c] sm:$0xff]
    %v3378 = vld [vmem:[#allocation13 + $0x7a4] sm:$0xf]
    %v3379 = vld [vmem:[#allocation13 + $0x7a8] sm:$0xff]
    %v3380 = vld [vmem:[#allocation13 + $0x7b0] sm:$0xff]
    %v3381 = vld [vmem:[#allocation13 + $0x7b8] sm:$0xff]
    %v3382 = vld [vmem:[#allocation13 + $0x7c0] sm:$0xf]
    %v3383 = vld [vmem:[#allocation13 + $0x7c4] sm:$0xff]
    %v3384 = vld [vmem:[#allocation13 + $0x7cc] sm:$0xff]
    %v3385 = vld [vmem:[#allocation13 + $0x7d4] sm:$0xff]
    %v3386 = vld [vmem:[#allocation13 + $0x7dc] sm:$0xf]
    %v3387 = vld [vmem:[#allocation13 + $0x7e0] sm:$0xff]
    %v3388 = vld [vmem:[#allocation13 + $0x7e8] sm:$0xff]
    %v3389 = vld [vmem:[#allocation13 + $0x7f0] sm:$0xff]
    %v3390 = vld [vmem:[#allocation13 + $0x7f8] sm:$0xf]
    %v3391 = vld [vmem:[#allocation13 + $0x7fc] sm:$0xff]
    %v3392 = vld [vmem:[#allocation13 + $0x804] sm:$0xff]
    %v3393 = vld [vmem:[#allocation13 + $0x80c] sm:$0xff]
    %v3394 = vld [vmem:[#allocation13 + $0x814] sm:$0xf]
    %v3395 = vld [vmem:[#allocation13 + $0x818] sm:$0xff]
    %v3396 = vld [vmem:[#allocation13 + $0x820] sm:$0xff]
    %v3397 = vld [vmem:[#allocation13 + $0x828] sm:$0xff]
    %v3398 = vld [vmem:[#allocation13 + $0x830] sm:$0xf]
    %v3399 = vld [vmem:[#allocation13 + $0x834] sm:$0xff]
    %v3400 = vld [vmem:[#allocation13 + $0x83c] sm:$0xff]
    %v3401 = vld [vmem:[#allocation13 + $0x844] sm:$0xff]
    %v3402 = vld [vmem:[#allocation13 + $0x84c] sm:$0xf]
    %v3403 = vld [vmem:[#allocation13 + $0x850] sm:$0xff]
    %v3404 = vld [vmem:[#allocation13 + $0x858] sm:$0xff]
    %v3405 = vld [vmem:[#allocation13 + $0x860] sm:$0xff]
    %v3406 = vld [vmem:[#allocation13 + $0x868] sm:$0xf]
    %v3407 = vld [vmem:[#allocation13 + $0x86c] sm:$0xff]
    %v3408 = vld [vmem:[#allocation13 + $0x874] sm:$0xff]
    %v3409 = vld [vmem:[#allocation13 + $0x87c] sm:$0xff]
    %v3410 = vld [vmem:[#allocation13 + $0x884] sm:$0xf]
    %v3411 = vld [vmem:[#allocation13 + $0x888] sm:$0xff]
    %v3412 = vld [vmem:[#allocation13 + $0x890] sm:$0xff]
    %v3413 = vld [vmem:[#allocation13 + $0x898] sm:$0xff]
    %v3414 = vld [vmem:[#allocation13 + $0x8a0] sm:$0xf]
    %v3415 = vld [vmem:[#allocation13 + $0x8a4] sm:$0xff]
    %v3416 = vld [vmem:[#allocation13 + $0x8ac] sm:$0xff]
    %v3417 = vld [vmem:[#allocation13 + $0x8b4] sm:$0xff]
    %v3418 = vld [vmem:[#allocation13 + $0x8bc] sm:$0xf]
    %v3419 = vld [vmem:[#allocation13 + $0x8c0] sm:$0xff]
    %v3420 = vld [vmem:[#allocation13 + $0x8c8] sm:$0xff]
    %v3421 = vld [vmem:[#allocation13 + $0x8d0] sm:$0xff]
    %v3422 = vld [vmem:[#allocation13 + $0x8d8] sm:$0xf]
    %v3423 = vld [vmem:[#allocation13 + $0x8dc] sm:$0xff]
    %v3424 = vld [vmem:[#allocation13 + $0x8e4] sm:$0xff]
    %v3425 = vld [vmem:[#allocation13 + $0x8ec] sm:$0xff]
    %v3426 = vld [vmem:[#allocation13 + $0x8f4] sm:$0xf]
    %v3427 = vld [vmem:[#allocation13 + $0x8f8] sm:$0xff]
    %v3428 = vld [vmem:[#allocation13 + $0x900] sm:$0xff]
    %v3429 = vld [vmem:[#allocation13 + $0x908] sm:$0xff]
    %v3430 = vld [vmem:[#allocation13 + $0x910] sm:$0xf]
    %v3431 = vld [vmem:[#allocation13 + $0x914] sm:$0xff]
    %v3432 = vld [vmem:[#allocation13 + $0x91c] sm:$0xff]
    %v3433 = vld [vmem:[#allocation13 + $0x924] sm:$0xff]
    %v3434 = vld [vmem:[#allocation13 + $0x92c] sm:$0xf]
    %v3435 = vld [vmem:[#allocation13 + $0x930] sm:$0xff]
    %v3436 = vld [vmem:[#allocation13 + $0x938] sm:$0xff]
    %v3437 = vld [vmem:[#allocation13 + $0x940] sm:$0xff]
    %v3438 = vld [vmem:[#allocation13 + $0x948] sm:$0xf]
    %v3439 = vld [vmem:[#allocation13 + $0x94c] sm:$0xff]
    %v3440 = vld [vmem:[#allocation13 + $0x954] sm:$0xff]
    %v3441 = vld [vmem:[#allocation13 + $0x95c] sm:$0xff]
    %v3442 = vld [vmem:[#allocation13 + $0x964] sm:$0xf]
    %v3443 = vld [vmem:[#allocation13 + $0x968] sm:$0xff]
    %v3444 = vld [vmem:[#allocation13 + $0x970] sm:$0xff]
    %v3445 = vld [vmem:[#allocation13 + $0x978] sm:$0xff]
    %v3446 = vld [vmem:[#allocation13 + $0x980] sm:$0xf]
    %v3447 = vld [vmem:[#allocation13 + $0x984] sm:$0xff]
    %v3448 = vld [vmem:[#allocation13 + $0x98c] sm:$0xff]
    %v3449 = vld [vmem:[#allocation13 + $0x994] sm:$0xff]
    %v3450 = vld [vmem:[#allocation13 + $0x99c] sm:$0xf]
    %v3451 = vld [vmem:[#allocation13 + $0x9a0] sm:$0xff]
    %v3452 = vld [vmem:[#allocation13 + $0x9a8] sm:$0xff]
    %v3453 = vld [vmem:[#allocation13 + $0x9b0] sm:$0xff]
    %v3454 = vld [vmem:[#allocation13 + $0x9b8] sm:$0xf]
    %v3455 = vld [vmem:[#allocation13 + $0x9bc] sm:$0xff]
    %v3456 = vld [vmem:[#allocation13 + $0x9c4] sm:$0xff]
    %v3457 = vld [vmem:[#allocation13 + $0x9cc] sm:$0xff]
    %v3458 = vld [vmem:[#allocation13 + $0x9d4] sm:$0xf]
    %v3459 = vld [vmem:[#allocation13 + $0x9d8] sm:$0xff]
    %v3460 = vld [vmem:[#allocation13 + $0x9e0] sm:$0xff]
    %v3461 = vld [vmem:[#allocation13 + $0x9e8] sm:$0xff]
    %v3462 = vld [vmem:[#allocation13 + $0x9f0] sm:$0xf]
    %v3463 = vld [vmem:[#allocation13 + $0x9f4] sm:$0xff]
    %v3464 = vld [vmem:[#allocation13 + $0x9fc] sm:$0xff]
    %v3465 = vld [vmem:[#allocation13 + $0xa04] sm:$0xff]
    %v3466 = vld [vmem:[#allocation13 + $0xa0c] sm:$0xf]
    %v3467 = vld [vmem:[#allocation13 + $0xa10] sm:$0xff]
    %v3468 = vld [vmem:[#allocation13 + $0xa18] sm:$0xff]
    %v3469 = vld [vmem:[#allocation13 + $0xa20] sm:$0xff]
    %v3470 = vld [vmem:[#allocation13 + $0xa28] sm:$0xf]
    %v3471 = vld [vmem:[#allocation13 + $0xa2c] sm:$0xff]
    %v3472 = vld [vmem:[#allocation13 + $0xa34] sm:$0xff]
    %v3473 = vld [vmem:[#allocation13 + $0xa3c] sm:$0xff]
    %v3474 = vld [vmem:[#allocation13 + $0xa44] sm:$0xf]
    %v3475 = vld [vmem:[#allocation13 + $0xa48] sm:$0xff]
    %v3476 = vld [vmem:[#allocation13 + $0xa50] sm:$0xff]
    %v3477 = vld [vmem:[#allocation13 + $0xa58] sm:$0xff]
    %v3478 = vld [vmem:[#allocation13 + $0xa60] sm:$0xf]
    %v3479 = vld [vmem:[#allocation13 + $0xa64] sm:$0xff]
    %v3480 = vld [vmem:[#allocation13 + $0xa6c] sm:$0xff]
    %v3481 = vld [vmem:[#allocation13 + $0xa74] sm:$0xff]
    %v3482 = vld [vmem:[#allocation13 + $0xa7c] sm:$0xf]
    %v3483 = vld [vmem:[#allocation13 + $0xa80] sm:$0xff]
    %v3484 = vld [vmem:[#allocation13 + $0xa88] sm:$0xff]
    %v3485 = vld [vmem:[#allocation13 + $0xa90] sm:$0xff]
    %v3486 = vld [vmem:[#allocation13 + $0xa98] sm:$0xf]
    %v3487 = vld [vmem:[#allocation13 + $0xa9c] sm:$0xff]
    %v3488 = vld [vmem:[#allocation13 + $0xaa4] sm:$0xff]
    %v3489 = vld [vmem:[#allocation13 + $0xaac] sm:$0xff]
    %v3490 = vld [vmem:[#allocation13 + $0xab4] sm:$0xf]
    %v3491 = vld [vmem:[#allocation13 + $0xab8] sm:$0xff]
    %v3492 = vld [vmem:[#allocation13 + $0xac0] sm:$0xff]
    %v3493 = vld [vmem:[#allocation13 + $0xac8] sm:$0xff]
    %v3494 = vld [vmem:[#allocation13 + $0xad0] sm:$0xf]
    %v3495 = vld [vmem:[#allocation13 + $0xad4] sm:$0xff]
    %v3496 = vld [vmem:[#allocation13 + $0xadc] sm:$0xff]
    %v3497 = vld [vmem:[#allocation13 + $0xae4] sm:$0xff]
    %v3498 = vld [vmem:[#allocation13 + $0xaec] sm:$0xf]
    %v3499 = vld [vmem:[#allocation13 + $0xaf0] sm:$0xff]
    %v3500 = vld [vmem:[#allocation13 + $0xaf8] sm:$0xff]
    %v3501 = vld [vmem:[#allocation13 + $0xb00] sm:$0xff]
    %v3502 = vld [vmem:[#allocation13 + $0xb08] sm:$0xf]
    %v3503 = vld [vmem:[#allocation13 + $0xb0c] sm:$0xff]
    %v3504 = vld [vmem:[#allocation13 + $0xb14] sm:$0xff]
    %v3505 = vld [vmem:[#allocation13 + $0xb1c] sm:$0xff]
    %v3506 = vld [vmem:[#allocation13 + $0xb24] sm:$0xf]
    %v3507 = vld [vmem:[#allocation13 + $0xb28] sm:$0xff]
    %v3508 = vld [vmem:[#allocation13 + $0xb30] sm:$0xff]
    %v3509 = vld [vmem:[#allocation13 + $0xb38] sm:$0xff]
    %v3510 = vld [vmem:[#allocation13 + $0xb40] sm:$0xf]
    %v3511 = vld [vmem:[#allocation13 + $0xb44] sm:$0xff]
    %v3512 = vld [vmem:[#allocation13 + $0xb4c] sm:$0xff]
    %v3513 = vld [vmem:[#allocation13 + $0xb54] sm:$0xff]
    %v3514 = vld [vmem:[#allocation13 + $0xb5c] sm:$0xf]
    %v3515 = vld [vmem:[#allocation13 + $0xb60] sm:$0xff]
    %v3516 = vld [vmem:[#allocation13 + $0xb68] sm:$0xff]
    %v3517 = vld [vmem:[#allocation13 + $0xb70] sm:$0xff]
    %v3518 = vld [vmem:[#allocation13 + $0xb78] sm:$0xf]
    %v3519 = vld [vmem:[#allocation13 + $0xb7c] sm:$0xff]
    %v3520 = vld [vmem:[#allocation13 + $0xb84] sm:$0xff]
    %v3521 = vld [vmem:[#allocation13 + $0xb8c] sm:$0xff]
    %v3522 = vld [vmem:[#allocation13 + $0xb94] sm:$0xf]
    %v3523 = vld [vmem:[#allocation13 + $0xb98] sm:$0xff]
    %v3524 = vld [vmem:[#allocation13 + $0xba0] sm:$0xff]
    %v3525 = vld [vmem:[#allocation13 + $0xba8] sm:$0xff]
    %v3526 = vld [vmem:[#allocation13 + $0xbb0] sm:$0xf]
    %v3527 = vld [vmem:[#allocation13 + $0xbb4] sm:$0xff]
    %v3528 = vld [vmem:[#allocation13 + $0xbbc] sm:$0xff]
    %v3529 = vld [vmem:[#allocation13 + $0xbc4] sm:$0xff]
    %v3530 = vld [vmem:[#allocation13 + $0xbcc] sm:$0xf]
    %v3531 = vld [vmem:[#allocation13 + $0xbd0] sm:$0xff]
    %v3532 = vld [vmem:[#allocation13 + $0xbd8] sm:$0xff]
    %v3533 = vld [vmem:[#allocation13 + $0xbe0] sm:$0xff]
    %v3534 = vld [vmem:[#allocation13 + $0xbe8] sm:$0xf]
    %v3535 = vld [vmem:[#allocation13 + $0xbec] sm:$0xff]
    %v3536 = vld [vmem:[#allocation13 + $0xbf4] sm:$0xff]
    %v3537 = vld [vmem:[#allocation13 + $0xbfc] sm:$0xff]
    %v3538 = vld [vmem:[#allocation13 + $0xc04] sm:$0xf]
    %v3539 = vld [vmem:[#allocation13 + $0xc08] sm:$0xff]
    %v3540 = vld [vmem:[#allocation13 + $0xc10] sm:$0xff]
    %v3541 = vld [vmem:[#allocation13 + $0xc18] sm:$0xff]
    %v3542 = vld [vmem:[#allocation13 + $0xc20] sm:$0xf]
    %v3543 = vld [vmem:[#allocation13 + $0xc24] sm:$0xff]
    %v3544 = vld [vmem:[#allocation13 + $0xc2c] sm:$0xff]
    %v3545 = vld [vmem:[#allocation13 + $0xc34] sm:$0xff]
    %v3546 = vld [vmem:[#allocation13 + $0xc3c] sm:$0xf]
    %v3547 = vld [vmem:[#allocation13 + $0xc40] sm:$0xff]
    %v3548 = vld [vmem:[#allocation13 + $0xc48] sm:$0xff]
    %v3549 = vld [vmem:[#allocation13 + $0xc50] sm:$0xff]
    %v3550 = vld [vmem:[#allocation13 + $0xc58] sm:$0xf]
    %v3551 = vld [vmem:[#allocation13 + $0xc5c] sm:$0xff]
    %v3552 = vld [vmem:[#allocation13 + $0xc64] sm:$0xff]
    %v3553 = vld [vmem:[#allocation13 + $0xc6c] sm:$0xff]
    %v3554 = vld [vmem:[#allocation13 + $0xc74] sm:$0xf]
    %v3555 = vld [vmem:[#allocation13 + $0xc78] sm:$0xff]
    %v3556 = vld [vmem:[#allocation13 + $0xc80] sm:$0xff]
    %v3557 = vld [vmem:[#allocation13 + $0xc88] sm:$0xff]
    %v3558 = vld [vmem:[#allocation13 + $0xc90] sm:$0xf]
    %v3559 = vld [vmem:[#allocation13 + $0xc94] sm:$0xff]
    %v3560 = vld [vmem:[#allocation13 + $0xc9c] sm:$0xff]
    %v3561 = vld [vmem:[#allocation13 + $0xca4] sm:$0xff]
    %v3562 = vld [vmem:[#allocation13 + $0xcac] sm:$0xf]
    %v3563 = vld [vmem:[#allocation13 + $0xcb0] sm:$0xff]
    %v3564 = vld [vmem:[#allocation13 + $0xcb8] sm:$0xff]
    %v3565 = vld [vmem:[#allocation13 + $0xcc0] sm:$0xff]
    %v3566 = vld [vmem:[#allocation13 + $0xcc8] sm:$0xf]
    %v3567 = vld [vmem:[#allocation13 + $0xccc] sm:$0xff]
    %v3568 = vld [vmem:[#allocation13 + $0xcd4] sm:$0xff]
    %v3569 = vld [vmem:[#allocation13 + $0xcdc] sm:$0xff]
    %v3570 = vld [vmem:[#allocation13 + $0xce4] sm:$0xf]
    %v3571 = vld [vmem:[#allocation13 + $0xce8] sm:$0xff]
    %v3572 = vld [vmem:[#allocation13 + $0xcf0] sm:$0xff]
    %v3573 = vld [vmem:[#allocation13 + $0xcf8] sm:$0xff]
    %v3574 = vld [vmem:[#allocation13 + $0xd00] sm:$0xf]
    %v3575 = vld [vmem:[#allocation13 + $0xd04] sm:$0xff]
    %v3576 = vld [vmem:[#allocation13 + $0xd0c] sm:$0xff]
    %v3577 = vld [vmem:[#allocation13 + $0xd14] sm:$0xff]
    %v3578 = vld [vmem:[#allocation13 + $0xd1c] sm:$0xf]
    %v3579 = vld [vmem:[#allocation13 + $0xd20] sm:$0xff]
    %v3580 = vld [vmem:[#allocation13 + $0xd28] sm:$0xff]
    %v3581 = vld [vmem:[#allocation13 + $0xd30] sm:$0xff]
    %v3582 = vld [vmem:[#allocation13 + $0xd38] sm:$0xf]
    %v3583 = vld [vmem:[#allocation13 + $0xd3c] sm:$0xff]
    %v3584 = vld [vmem:[#allocation13 + $0xd44] sm:$0xff]
    %v3585 = vld [vmem:[#allocation13 + $0xd4c] sm:$0xff]
    %v3586 = vld [vmem:[#allocation13 + $0xd54] sm:$0xf]
    %v3587 = vld [vmem:[#allocation13 + $0xd58] sm:$0xff]
    %v3588 = vld [vmem:[#allocation13 + $0xd60] sm:$0xff]
    %v3589 = vld [vmem:[#allocation13 + $0xd68] sm:$0xff]
    %v3590 = vld [vmem:[#allocation13 + $0xd70] sm:$0xf]
    %v3591 = vld [vmem:[#allocation13 + $0xd74] sm:$0xff]
    %v3592 = vld [vmem:[#allocation13 + $0xd7c] sm:$0xff]
    %v3593 = vld [vmem:[#allocation13 + $0xd84] sm:$0xff]
    %v3594 = vld [vmem:[#allocation13 + $0xd8c] sm:$0xf]
    %v3595 = vld [vmem:[#allocation13 + $0xd90] sm:$0xff]
    %v3596 = vld [vmem:[#allocation13 + $0xd98] sm:$0xff]
    %v3597 = vld [vmem:[#allocation13 + $0xda0] sm:$0xff]
    %v3598 = vld [vmem:[#allocation13 + $0xda8] sm:$0xf]
    %v3599 = vld [vmem:[#allocation13 + $0xdac] sm:$0xff]
    %v3600 = vld [vmem:[#allocation13 + $0xdb4] sm:$0xff]
    %v3601 = vld [vmem:[#allocation13 + $0xdbc] sm:$0xff]
    %v3602 = vld [vmem:[#allocation13 + $0xdc4] sm:$0xf]
    %v3603 = vld [vmem:[#allocation13 + $0xdc8] sm:$0xff]
    %v3604 = vld [vmem:[#allocation13 + $0xdd0] sm:$0xff]
    %v3605 = vld [vmem:[#allocation13 + $0xdd8] sm:$0xff]
    %v3606 = vld [vmem:[#allocation13 + $0xde0] sm:$0xf]
    %v3607 = vld [vmem:[#allocation13 + $0xde4] sm:$0xff]
    %v3608 = vld [vmem:[#allocation13 + $0xdec] sm:$0xff]
    %v3609 = vld [vmem:[#allocation13 + $0xdf4] sm:$0xff]
    %v3610 = vld [vmem:[#allocation13 + $0xdfc] sm:$0xf]
    %v3611 = vld [vmem:[#allocation15] sm:$0x7f]
    %v3613 = vperm.slane %v3611, 0
    %v3614 = vperm.slane %v3611, 1
    %v3615 = vperm.slane %v3611, 2
    %v3616 = vperm.slane %v3611, 3
    %v3617 = vperm.slane %v3611, 4
    %v3618 = vperm.slane %v3611, 5
    %v3619 = vperm.slane %v3611, 6
    %v4139 = vunpack.c.l.b16 %v3099
    %v4140 = vunpack.c.h.b16 %v3099
    %v4141 = vunpack.c.l.b16 %v3100
    %v4142 = vunpack.c.h.b16 %v3100
    %v4143 = vunpack.c.l.b16 %v3101
    %v4144 = vunpack.c.h.b16 %v3101
    %v4145 = vunpack.c.l.b16 %v3102
    %v4146 = vunpack.c.l.b16 %v3103
    %v4147 = vunpack.c.h.b16 %v3103
    %v4148 = vunpack.c.l.b16 %v3104
    %v4149 = vunpack.c.h.b16 %v3104
    %v4150 = vunpack.c.l.b16 %v3105
    %v4151 = vunpack.c.h.b16 %v3105
    %v4152 = vunpack.c.l.b16 %v3106
    %v4153 = vunpack.c.l.b16 %v3107
    %v4154 = vunpack.c.h.b16 %v3107
    %v4155 = vunpack.c.l.b16 %v3108
    %v4156 = vunpack.c.h.b16 %v3108
    %v4157 = vunpack.c.l.b16 %v3109
    %v4158 = vunpack.c.h.b16 %v3109
    %v4159 = vunpack.c.l.b16 %v3110
    %v4160 = vunpack.c.l.b16 %v3111
    %v4161 = vunpack.c.h.b16 %v3111
    %v4162 = vunpack.c.l.b16 %v3112
    %v4163 = vunpack.c.h.b16 %v3112
    %v4164 = vunpack.c.l.b16 %v3113
    %v4165 = vunpack.c.h.b16 %v3113
    %v4166 = vunpack.c.l.b16 %v3114
    %v4167 = vunpack.c.l.b16 %v3115
    %v4168 = vunpack.c.h.b16 %v3115
    %v4169 = vunpack.c.l.b16 %v3116
    %v4170 = vunpack.c.h.b16 %v3116
    %v4171 = vunpack.c.l.b16 %v3117
    %v4172 = vunpack.c.h.b16 %v3117
    %v4173 = vunpack.c.l.b16 %v3118
    %v4174 = vunpack.c.l.b16 %v3119
    %v4175 = vunpack.c.h.b16 %v3119
    %v4176 = vunpack.c.l.b16 %v3120
    %v4177 = vunpack.c.h.b16 %v3120
    %v4178 = vunpack.c.l.b16 %v3121
    %v4179 = vunpack.c.h.b16 %v3121
    %v4180 = vunpack.c.l.b16 %v3122
    %v4181 = vunpack.c.l.b16 %v3123
    %v4182 = vunpack.c.h.b16 %v3123
    %v4183 = vunpack.c.l.b16 %v3124
    %v4184 = vunpack.c.h.b16 %v3124
    %v4185 = vunpack.c.l.b16 %v3125
    %v4186 = vunpack.c.h.b16 %v3125
    %v4187 = vunpack.c.l.b16 %v3126
    %v4188 = vunpack.c.l.b16 %v3127
    %v4189 = vunpack.c.h.b16 %v3127
    %v4190 = vunpack.c.l.b16 %v3128
    %v4191 = vunpack.c.h.b16 %v3128
    %v4192 = vunpack.c.l.b16 %v3129
    %v4193 = vunpack.c.h.b16 %v3129
    %v4194 = vunpack.c.l.b16 %v3130
    %v4195 = vunpack.c.l.b16 %v3131
    %v4196 = vunpack.c.h.b16 %v3131
    %v4197 = vunpack.c.l.b16 %v3132
    %v4198 = vunpack.c.h.b16 %v3132
    %v4199 = vunpack.c.l.b16 %v3133
    %v4200 = vunpack.c.h.b16 %v3133
    %v4201 = vunpack.c.l.b16 %v3134
    %v4202 = vunpack.c.l.b16 %v3135
    %v4203 = vunpack.c.h.b16 %v3135
    %v4204 = vunpack.c.l.b16 %v3136
    %v4205 = vunpack.c.h.b16 %v3136
    %v4206 = vunpack.c.l.b16 %v3137
    %v4207 = vunpack.c.h.b16 %v3137
    %v4208 = vunpack.c.l.b16 %v3138
    %v4209 = vunpack.c.l.b16 %v3139
    %v4210 = vunpack.c.h.b16 %v3139
    %v4211 = vunpack.c.l.b16 %v3140
    %v4212 = vunpack.c.h.b16 %v3140
    %v4213 = vunpack.c.l.b16 %v3141
    %v4214 = vunpack.c.h.b16 %v3141
    %v4215 = vunpack.c.l.b16 %v3142
    %v4216 = vunpack.c.l.b16 %v3143
    %v4217 = vunpack.c.h.b16 %v3143
    %v4218 = vunpack.c.l.b16 %v3144
    %v4219 = vunpack.c.h.b16 %v3144
    %v4220 = vunpack.c.l.b16 %v3145
    %v4221 = vunpack.c.h.b16 %v3145
    %v4222 = vunpack.c.l.b16 %v3146
    %v4223 = vunpack.c.l.b16 %v3147
    %v4224 = vunpack.c.h.b16 %v3147
    %v4225 = vunpack.c.l.b16 %v3148
    %v4226 = vunpack.c.h.b16 %v3148
    %v4227 = vunpack.c.l.b16 %v3149
    %v4228 = vunpack.c.h.b16 %v3149
    %v4229 = vunpack.c.l.b16 %v3150
    %v4230 = vunpack.c.l.b16 %v3151
    %v4231 = vunpack.c.h.b16 %v3151
    %v4232 = vunpack.c.l.b16 %v3152
    %v4233 = vunpack.c.h.b16 %v3152
    %v4234 = vunpack.c.l.b16 %v3153
    %v4235 = vunpack.c.h.b16 %v3153
    %v4236 = vunpack.c.l.b16 %v3154
    %v4237 = vunpack.c.l.b16 %v3155
    %v4238 = vunpack.c.h.b16 %v3155
    %v4239 = vunpack.c.l.b16 %v3156
    %v4240 = vunpack.c.h.b16 %v3156
    %v4241 = vunpack.c.l.b16 %v3157
    %v4242 = vunpack.c.h.b16 %v3157
    %v4243 = vunpack.c.l.b16 %v3158
    %v4244 = vunpack.c.l.b16 %v3159
    %v4245 = vunpack.c.h.b16 %v3159
    %v4246 = vunpack.c.l.b16 %v3160
    %v4247 = vunpack.c.h.b16 %v3160
    %v4248 = vunpack.c.l.b16 %v3161
    %v4249 = vunpack.c.h.b16 %v3161
    %v4250 = vunpack.c.l.b16 %v3162
    %v4251 = vunpack.c.l.b16 %v3163
    %v4252 = vunpack.c.h.b16 %v3163
    %v4253 = vunpack.c.l.b16 %v3164
    %v4254 = vunpack.c.h.b16 %v3164
    %v4255 = vunpack.c.l.b16 %v3165
    %v4256 = vunpack.c.h.b16 %v3165
    %v4257 = vunpack.c.l.b16 %v3166
    %v4258 = vunpack.c.l.b16 %v3167
    %v4259 = vunpack.c.h.b16 %v3167
    %v4260 = vunpack.c.l.b16 %v3168
    %v4261 = vunpack.c.h.b16 %v3168
    %v4262 = vunpack.c.l.b16 %v3169
    %v4263 = vunpack.c.h.b16 %v3169
    %v4264 = vunpack.c.l.b16 %v3170
    %v4265 = vunpack.c.l.b16 %v3171
    %v4266 = vunpack.c.h.b16 %v3171
    %v4267 = vunpack.c.l.b16 %v3172
    %v4268 = vunpack.c.h.b16 %v3172
    %v4269 = vunpack.c.l.b16 %v3173
    %v4270 = vunpack.c.h.b16 %v3173
    %v4271 = vunpack.c.l.b16 %v3174
    %v4272 = vunpack.c.l.b16 %v3175
    %v4273 = vunpack.c.h.b16 %v3175
    %v4274 = vunpack.c.l.b16 %v3176
    %v4275 = vunpack.c.h.b16 %v3176
    %v4276 = vunpack.c.l.b16 %v3177
    %v4277 = vunpack.c.h.b16 %v3177
    %v4278 = vunpack.c.l.b16 %v3178
    %v4279 = vunpack.c.l.b16 %v3179
    %v4280 = vunpack.c.h.b16 %v3179
    %v4281 = vunpack.c.l.b16 %v3180
    %v4282 = vunpack.c.h.b16 %v3180
    %v4283 = vunpack.c.l.b16 %v3181
    %v4284 = vunpack.c.h.b16 %v3181
    %v4285 = vunpack.c.l.b16 %v3182
    %v4286 = vunpack.c.l.b16 %v3183
    %v4287 = vunpack.c.h.b16 %v3183
    %v4288 = vunpack.c.l.b16 %v3184
    %v4289 = vunpack.c.h.b16 %v3184
    %v4290 = vunpack.c.l.b16 %v3185
    %v4291 = vunpack.c.h.b16 %v3185
    %v4292 = vunpack.c.l.b16 %v3186
    %v4293 = vunpack.c.l.b16 %v3187
    %v4294 = vunpack.c.h.b16 %v3187
    %v4295 = vunpack.c.l.b16 %v3188
    %v4296 = vunpack.c.h.b16 %v3188
    %v4297 = vunpack.c.l.b16 %v3189
    %v4298 = vunpack.c.h.b16 %v3189
    %v4299 = vunpack.c.l.b16 %v3190
    %v4300 = vunpack.c.l.b16 %v3191
    %v4301 = vunpack.c.h.b16 %v3191
    %v4302 = vunpack.c.l.b16 %v3192
    %v4303 = vunpack.c.h.b16 %v3192
    %v4304 = vunpack.c.l.b16 %v3193
    %v4305 = vunpack.c.h.b16 %v3193
    %v4306 = vunpack.c.l.b16 %v3194
    %v4307 = vunpack.c.l.b16 %v3195
    %v4308 = vunpack.c.h.b16 %v3195
    %v4309 = vunpack.c.l.b16 %v3196
    %v4310 = vunpack.c.h.b16 %v3196
    %v4311 = vunpack.c.l.b16 %v3197
    %v4312 = vunpack.c.h.b16 %v3197
    %v4313 = vunpack.c.l.b16 %v3198
    %v4314 = vunpack.c.l.b16 %v3199
    %v4315 = vunpack.c.h.b16 %v3199
    %v4316 = vunpack.c.l.b16 %v3200
    %v4317 = vunpack.c.h.b16 %v3200
    %v4318 = vunpack.c.l.b16 %v3201
    %v4319 = vunpack.c.h.b16 %v3201
    %v4320 = vunpack.c.l.b16 %v3202
    %v4321 = vunpack.c.l.b16 %v3203
    %v4322 = vunpack.c.h.b16 %v3203
    %v4323 = vunpack.c.l.b16 %v3204
    %v4324 = vunpack.c.h.b16 %v3204
    %v4325 = vunpack.c.l.b16 %v3205
    %v4326 = vunpack.c.h.b16 %v3205
    %v4327 = vunpack.c.l.b16 %v3206
    %v4328 = vunpack.c.l.b16 %v3207
    %v4329 = vunpack.c.h.b16 %v3207
    %v4330 = vunpack.c.l.b16 %v3208
    %v4331 = vunpack.c.h.b16 %v3208
    %v4332 = vunpack.c.l.b16 %v3209
    %v4333 = vunpack.c.h.b16 %v3209
    %v4334 = vunpack.c.l.b16 %v3210
    %v4335 = vunpack.c.l.b16 %v3211
    %v4336 = vunpack.c.h.b16 %v3211
    %v4337 = vunpack.c.l.b16 %v3212
    %v4338 = vunpack.c.h.b16 %v3212
    %v4339 = vunpack.c.l.b16 %v3213
    %v4340 = vunpack.c.h.b16 %v3213
    %v4341 = vunpack.c.l.b16 %v3214
    %v4342 = vunpack.c.l.b16 %v3215
    %v4343 = vunpack.c.h.b16 %v3215
    %v4344 = vunpack.c.l.b16 %v3216
    %v4345 = vunpack.c.h.b16 %v3216
    %v4346 = vunpack.c.l.b16 %v3217
    %v4347 = vunpack.c.h.b16 %v3217
    %v4348 = vunpack.c.l.b16 %v3218
    %v4349 = vunpack.c.l.b16 %v3219
    %v4350 = vunpack.c.h.b16 %v3219
    %v4351 = vunpack.c.l.b16 %v3220
    %v4352 = vunpack.c.h.b16 %v3220
    %v4353 = vunpack.c.l.b16 %v3221
    %v4354 = vunpack.c.h.b16 %v3221
    %v4355 = vunpack.c.l.b16 %v3222
    %v4356 = vunpack.c.l.b16 %v3223
    %v4357 = vunpack.c.h.b16 %v3223
    %v4358 = vunpack.c.l.b16 %v3224
    %v4359 = vunpack.c.h.b16 %v3224
    %v4360 = vunpack.c.l.b16 %v3225
    %v4361 = vunpack.c.h.b16 %v3225
    %v4362 = vunpack.c.l.b16 %v3226
    %v4363 = vunpack.c.l.b16 %v3227
    %v4364 = vunpack.c.h.b16 %v3227
    %v4365 = vunpack.c.l.b16 %v3228
    %v4366 = vunpack.c.h.b16 %v3228
    %v4367 = vunpack.c.l.b16 %v3229
    %v4368 = vunpack.c.h.b16 %v3229
    %v4369 = vunpack.c.l.b16 %v3230
    %v4370 = vunpack.c.l.b16 %v3231
    %v4371 = vunpack.c.h.b16 %v3231
    %v4372 = vunpack.c.l.b16 %v3232
    %v4373 = vunpack.c.h.b16 %v3232
    %v4374 = vunpack.c.l.b16 %v3233
    %v4375 = vunpack.c.h.b16 %v3233
    %v4376 = vunpack.c.l.b16 %v3234
    %v4377 = vunpack.c.l.b16 %v3235
    %v4378 = vunpack.c.h.b16 %v3235
    %v4379 = vunpack.c.l.b16 %v3236
    %v4380 = vunpack.c.h.b16 %v3236
    %v4381 = vunpack.c.l.b16 %v3237
    %v4382 = vunpack.c.h.b16 %v3237
    %v4383 = vunpack.c.l.b16 %v3238
    %v4384 = vunpack.c.l.b16 %v3239
    %v4385 = vunpack.c.h.b16 %v3239
    %v4386 = vunpack.c.l.b16 %v3240
    %v4387 = vunpack.c.h.b16 %v3240
    %v4388 = vunpack.c.l.b16 %v3241
    %v4389 = vunpack.c.h.b16 %v3241
    %v4390 = vunpack.c.l.b16 %v3242
    %v4391 = vunpack.c.l.b16 %v3243
    %v4392 = vunpack.c.h.b16 %v3243
    %v4393 = vunpack.c.l.b16 %v3244
    %v4394 = vunpack.c.h.b16 %v3244
    %v4395 = vunpack.c.l.b16 %v3245
    %v4396 = vunpack.c.h.b16 %v3245
    %v4397 = vunpack.c.l.b16 %v3246
    %v4398 = vunpack.c.l.b16 %v3247
    %v4399 = vunpack.c.h.b16 %v3247
    %v4400 = vunpack.c.l.b16 %v3248
    %v4401 = vunpack.c.h.b16 %v3248
    %v4402 = vunpack.c.l.b16 %v3249
    %v4403 = vunpack.c.h.b16 %v3249
    %v4404 = vunpack.c.l.b16 %v3250
    %v4405 = vunpack.c.l.b16 %v3251
    %v4406 = vunpack.c.h.b16 %v3251
    %v4407 = vunpack.c.l.b16 %v3252
    %v4408 = vunpack.c.h.b16 %v3252
    %v4409 = vunpack.c.l.b16 %v3253
    %v4410 = vunpack.c.h.b16 %v3253
    %v4411 = vunpack.c.l.b16 %v3254
    %v4412 = vunpack.c.l.b16 %v3255
    %v4413 = vunpack.c.h.b16 %v3255
    %v4414 = vunpack.c.l.b16 %v3256
    %v4415 = vunpack.c.h.b16 %v3256
    %v4416 = vunpack.c.l.b16 %v3257
    %v4417 = vunpack.c.h.b16 %v3257
    %v4418 = vunpack.c.l.b16 %v3258
    %v4419 = vunpack.c.l.b16 %v3259
    %v4420 = vunpack.c.h.b16 %v3259
    %v4421 = vunpack.c.l.b16 %v3260
    %v4422 = vunpack.c.h.b16 %v3260
    %v4423 = vunpack.c.l.b16 %v3261
    %v4424 = vunpack.c.h.b16 %v3261
    %v4425 = vunpack.c.l.b16 %v3262
    %v4426 = vunpack.c.l.b16 %v3263
    %v4427 = vunpack.c.h.b16 %v3263
    %v4428 = vunpack.c.l.b16 %v3264
    %v4429 = vunpack.c.h.b16 %v3264
    %v4430 = vunpack.c.l.b16 %v3265
    %v4431 = vunpack.c.h.b16 %v3265
    %v4432 = vunpack.c.l.b16 %v3266
    %v4433 = vunpack.c.l.b16 %v3267
    %v4434 = vunpack.c.h.b16 %v3267
    %v4435 = vunpack.c.l.b16 %v3268
    %v4436 = vunpack.c.h.b16 %v3268
    %v4437 = vunpack.c.l.b16 %v3269
    %v4438 = vunpack.c.h.b16 %v3269
    %v4439 = vunpack.c.l.b16 %v3270
    %v4440 = vunpack.c.l.b16 %v3271
    %v4441 = vunpack.c.h.b16 %v3271
    %v4442 = vunpack.c.l.b16 %v3272
    %v4443 = vunpack.c.h.b16 %v3272
    %v4444 = vunpack.c.l.b16 %v3273
    %v4445 = vunpack.c.h.b16 %v3273
    %v4446 = vunpack.c.l.b16 %v3274
    %v4447 = vunpack.c.l.b16 %v3275
    %v4448 = vunpack.c.h.b16 %v3275
    %v4449 = vunpack.c.l.b16 %v3276
    %v4450 = vunpack.c.h.b16 %v3276
    %v4451 = vunpack.c.l.b16 %v3277
    %v4452 = vunpack.c.h.b16 %v3277
    %v4453 = vunpack.c.l.b16 %v3278
    %v4454 = vunpack.c.l.b16 %v3279
    %v4455 = vunpack.c.h.b16 %v3279
    %v4456 = vunpack.c.l.b16 %v3280
    %v4457 = vunpack.c.h.b16 %v3280
    %v4458 = vunpack.c.l.b16 %v3281
    %v4459 = vunpack.c.h.b16 %v3281
    %v4460 = vunpack.c.l.b16 %v3282
    %v4461 = vunpack.c.l.b16 %v3283
    %v4462 = vunpack.c.h.b16 %v3283
    %v4463 = vunpack.c.l.b16 %v3284
    %v4464 = vunpack.c.h.b16 %v3284
    %v4465 = vunpack.c.l.b16 %v3285
    %v4466 = vunpack.c.h.b16 %v3285
    %v4467 = vunpack.c.l.b16 %v3286
    %v4468 = vunpack.c.l.b16 %v3287
    %v4469 = vunpack.c.h.b16 %v3287
    %v4470 = vunpack.c.l.b16 %v3288
    %v4471 = vunpack.c.h.b16 %v3288
    %v4472 = vunpack.c.l.b16 %v3289
    %v4473 = vunpack.c.h.b16 %v3289
    %v4474 = vunpack.c.l.b16 %v3290
    %v4475 = vunpack.c.l.b16 %v3291
    %v4476 = vunpack.c.h.b16 %v3291
    %v4477 = vunpack.c.l.b16 %v3292
    %v4478 = vunpack.c.h.b16 %v3292
    %v4479 = vunpack.c.l.b16 %v3293
    %v4480 = vunpack.c.h.b16 %v3293
    %v4481 = vunpack.c.l.b16 %v3294
    %v4482 = vunpack.c.l.b16 %v3295
    %v4483 = vunpack.c.h.b16 %v3295
    %v4484 = vunpack.c.l.b16 %v3296
    %v4485 = vunpack.c.h.b16 %v3296
    %v4486 = vunpack.c.l.b16 %v3297
    %v4487 = vunpack.c.h.b16 %v3297
    %v4488 = vunpack.c.l.b16 %v3298
    %v4489 = vunpack.c.l.b16 %v3299
    %v4490 = vunpack.c.h.b16 %v3299
    %v4491 = vunpack.c.l.b16 %v3300
    %v4492 = vunpack.c.h.b16 %v3300
    %v4493 = vunpack.c.l.b16 %v3301
    %v4494 = vunpack.c.h.b16 %v3301
    %v4495 = vunpack.c.l.b16 %v3302
    %v4496 = vunpack.c.l.b16 %v3303
    %v4497 = vunpack.c.h.b16 %v3303
    %v4498 = vunpack.c.l.b16 %v3304
    %v4499 = vunpack.c.h.b16 %v3304
    %v4500 = vunpack.c.l.b16 %v3305
    %v4501 = vunpack.c.h.b16 %v3305
    %v4502 = vunpack.c.l.b16 %v3306
    %v4503 = vunpack.c.l.b16 %v3307
    %v4504 = vunpack.c.h.b16 %v3307
    %v4505 = vunpack.c.l.b16 %v3308
    %v4506 = vunpack.c.h.b16 %v3308
    %v4507 = vunpack.c.l.b16 %v3309
    %v4508 = vunpack.c.h.b16 %v3309
    %v4509 = vunpack.c.l.b16 %v3310
    %v4510 = vunpack.c.l.b16 %v3311
    %v4511 = vunpack.c.h.b16 %v3311
    %v4512 = vunpack.c.l.b16 %v3312
    %v4513 = vunpack.c.h.b16 %v3312
    %v4514 = vunpack.c.l.b16 %v3313
    %v4515 = vunpack.c.h.b16 %v3313
    %v4516 = vunpack.c.l.b16 %v3314
    %v4517 = vunpack.c.l.b16 %v3315
    %v4518 = vunpack.c.h.b16 %v3315
    %v4519 = vunpack.c.l.b16 %v3316
    %v4520 = vunpack.c.h.b16 %v3316
    %v4521 = vunpack.c.l.b16 %v3317
    %v4522 = vunpack.c.h.b16 %v3317
    %v4523 = vunpack.c.l.b16 %v3318
    %v4524 = vunpack.c.l.b16 %v3319
    %v4525 = vunpack.c.h.b16 %v3319
    %v4526 = vunpack.c.l.b16 %v3320
    %v4527 = vunpack.c.h.b16 %v3320
    %v4528 = vunpack.c.l.b16 %v3321
    %v4529 = vunpack.c.h.b16 %v3321
    %v4530 = vunpack.c.l.b16 %v3322
    %v4531 = vunpack.c.l.b16 %v3323
    %v4532 = vunpack.c.h.b16 %v3323
    %v4533 = vunpack.c.l.b16 %v3324
    %v4534 = vunpack.c.h.b16 %v3324
    %v4535 = vunpack.c.l.b16 %v3325
    %v4536 = vunpack.c.h.b16 %v3325
    %v4537 = vunpack.c.l.b16 %v3326
    %v4538 = vunpack.c.l.b16 %v3327
    %v4539 = vunpack.c.h.b16 %v3327
    %v4540 = vunpack.c.l.b16 %v3328
    %v4541 = vunpack.c.h.b16 %v3328
    %v4542 = vunpack.c.l.b16 %v3329
    %v4543 = vunpack.c.h.b16 %v3329
    %v4544 = vunpack.c.l.b16 %v3330
    %v4545 = vunpack.c.l.b16 %v3331
    %v4546 = vunpack.c.h.b16 %v3331
    %v4547 = vunpack.c.l.b16 %v3332
    %v4548 = vunpack.c.h.b16 %v3332
    %v4549 = vunpack.c.l.b16 %v3333
    %v4550 = vunpack.c.h.b16 %v3333
    %v4551 = vunpack.c.l.b16 %v3334
    %v4552 = vunpack.c.l.b16 %v3335
    %v4553 = vunpack.c.h.b16 %v3335
    %v4554 = vunpack.c.l.b16 %v3336
    %v4555 = vunpack.c.h.b16 %v3336
    %v4556 = vunpack.c.l.b16 %v3337
    %v4557 = vunpack.c.h.b16 %v3337
    %v4558 = vunpack.c.l.b16 %v3338
    %v4559 = vunpack.c.l.b16 %v3339
    %v4560 = vunpack.c.h.b16 %v3339
    %v4561 = vunpack.c.l.b16 %v3340
    %v4562 = vunpack.c.h.b16 %v3340
    %v4563 = vunpack.c.l.b16 %v3341
    %v4564 = vunpack.c.h.b16 %v3341
    %v4565 = vunpack.c.l.b16 %v3342
    %v4566 = vunpack.c.l.b16 %v3343
    %v4567 = vunpack.c.h.b16 %v3343
    %v4568 = vunpack.c.l.b16 %v3344
    %v4569 = vunpack.c.h.b16 %v3344
    %v4570 = vunpack.c.l.b16 %v3345
    %v4571 = vunpack.c.h.b16 %v3345
    %v4572 = vunpack.c.l.b16 %v3346
    %v4573 = vunpack.c.l.b16 %v3347
    %v4574 = vunpack.c.h.b16 %v3347
    %v4575 = vunpack.c.l.b16 %v3348
    %v4576 = vunpack.c.h.b16 %v3348
    %v4577 = vunpack.c.l.b16 %v3349
    %v4578 = vunpack.c.h.b16 %v3349
    %v4579 = vunpack.c.l.b16 %v3350
    %v4580 = vunpack.c.l.b16 %v3351
    %v4581 = vunpack.c.h.b16 %v3351
    %v4582 = vunpack.c.l.b16 %v3352
    %v4583 = vunpack.c.h.b16 %v3352
    %v4584 = vunpack.c.l.b16 %v3353
    %v4585 = vunpack.c.h.b16 %v3353
    %v4586 = vunpack.c.l.b16 %v3354
    %v4587 = vunpack.c.l.b16 %v3355
    %v4588 = vunpack.c.h.b16 %v3355
    %v4589 = vunpack.c.l.b16 %v3356
    %v4590 = vunpack.c.h.b16 %v3356
    %v4591 = vunpack.c.l.b16 %v3357
    %v4592 = vunpack.c.h.b16 %v3357
    %v4593 = vunpack.c.l.b16 %v3358
    %v4594 = vunpack.c.l.b16 %v3359
    %v4595 = vunpack.c.h.b16 %v3359
    %v4596 = vunpack.c.l.b16 %v3360
    %v4597 = vunpack.c.h.b16 %v3360
    %v4598 = vunpack.c.l.b16 %v3361
    %v4599 = vunpack.c.h.b16 %v3361
    %v4600 = vunpack.c.l.b16 %v3362
    %v4601 = vunpack.c.l.b16 %v3363
    %v4602 = vunpack.c.h.b16 %v3363
    %v4603 = vunpack.c.l.b16 %v3364
    %v4604 = vunpack.c.h.b16 %v3364
    %v4605 = vunpack.c.l.b16 %v3365
    %v4606 = vunpack.c.h.b16 %v3365
    %v4607 = vunpack.c.l.b16 %v3366
    %v4608 = vunpack.c.l.b16 %v3367
    %v4609 = vunpack.c.h.b16 %v3367
    %v4610 = vunpack.c.l.b16 %v3368
    %v4611 = vunpack.c.h.b16 %v3368
    %v4612 = vunpack.c.l.b16 %v3369
    %v4613 = vunpack.c.h.b16 %v3369
    %v4614 = vunpack.c.l.b16 %v3370
    %v4615 = vunpack.c.l.b16 %v3371
    %v4616 = vunpack.c.h.b16 %v3371
    %v4617 = vunpack.c.l.b16 %v3372
    %v4618 = vunpack.c.h.b16 %v3372
    %v4619 = vunpack.c.l.b16 %v3373
    %v4620 = vunpack.c.h.b16 %v3373
    %v4621 = vunpack.c.l.b16 %v3374
    %v4622 = vunpack.c.l.b16 %v3375
    %v4623 = vunpack.c.h.b16 %v3375
    %v4624 = vunpack.c.l.b16 %v3376
    %v4625 = vunpack.c.h.b16 %v3376
    %v4626 = vunpack.c.l.b16 %v3377
    %v4627 = vunpack.c.h.b16 %v3377
    %v4628 = vunpack.c.l.b16 %v3378
    %v4629 = vunpack.c.l.b16 %v3379
    %v4630 = vunpack.c.h.b16 %v3379
    %v4631 = vunpack.c.l.b16 %v3380
    %v4632 = vunpack.c.h.b16 %v3380
    %v4633 = vunpack.c.l.b16 %v3381
    %v4634 = vunpack.c.h.b16 %v3381
    %v4635 = vunpack.c.l.b16 %v3382
    %v4636 = vunpack.c.l.b16 %v3383
    %v4637 = vunpack.c.h.b16 %v3383
    %v4638 = vunpack.c.l.b16 %v3384
    %v4639 = vunpack.c.h.b16 %v3384
    %v4640 = vunpack.c.l.b16 %v3385
    %v4641 = vunpack.c.h.b16 %v3385
    %v4642 = vunpack.c.l.b16 %v3386
    %v4643 = vunpack.c.l.b16 %v3387
    %v4644 = vunpack.c.h.b16 %v3387
    %v4645 = vunpack.c.l.b16 %v3388
    %v4646 = vunpack.c.h.b16 %v3388
    %v4647 = vunpack.c.l.b16 %v3389
    %v4648 = vunpack.c.h.b16 %v3389
    %v4649 = vunpack.c.l.b16 %v3390
    %v4650 = vunpack.c.l.b16 %v3391
    %v4651 = vunpack.c.h.b16 %v3391
    %v4652 = vunpack.c.l.b16 %v3392
    %v4653 = vunpack.c.h.b16 %v3392
    %v4654 = vunpack.c.l.b16 %v3393
    %v4655 = vunpack.c.h.b16 %v3393
    %v4656 = vunpack.c.l.b16 %v3394
    %v4657 = vunpack.c.l.b16 %v3395
    %v4658 = vunpack.c.h.b16 %v3395
    %v4659 = vunpack.c.l.b16 %v3396
    %v4660 = vunpack.c.h.b16 %v3396
    %v4661 = vunpack.c.l.b16 %v3397
    %v4662 = vunpack.c.h.b16 %v3397
    %v4663 = vunpack.c.l.b16 %v3398
    %v4664 = vunpack.c.l.b16 %v3399
    %v4665 = vunpack.c.h.b16 %v3399
    %v4666 = vunpack.c.l.b16 %v3400
    %v4667 = vunpack.c.h.b16 %v3400
    %v4668 = vunpack.c.l.b16 %v3401
    %v4669 = vunpack.c.h.b16 %v3401
    %v4670 = vunpack.c.l.b16 %v3402
    %v4671 = vunpack.c.l.b16 %v3403
    %v4672 = vunpack.c.h.b16 %v3403
    %v4673 = vunpack.c.l.b16 %v3404
    %v4674 = vunpack.c.h.b16 %v3404
    %v4675 = vunpack.c.l.b16 %v3405
    %v4676 = vunpack.c.h.b16 %v3405
    %v4677 = vunpack.c.l.b16 %v3406
    %v4678 = vunpack.c.l.b16 %v3407
    %v4679 = vunpack.c.h.b16 %v3407
    %v4680 = vunpack.c.l.b16 %v3408
    %v4681 = vunpack.c.h.b16 %v3408
    %v4682 = vunpack.c.l.b16 %v3409
    %v4683 = vunpack.c.h.b16 %v3409
    %v4684 = vunpack.c.l.b16 %v3410
    %v4685 = vunpack.c.l.b16 %v3411
    %v4686 = vunpack.c.h.b16 %v3411
    %v4687 = vunpack.c.l.b16 %v3412
    %v4688 = vunpack.c.h.b16 %v3412
    %v4689 = vunpack.c.l.b16 %v3413
    %v4690 = vunpack.c.h.b16 %v3413
    %v4691 = vunpack.c.l.b16 %v3414
    %v4692 = vunpack.c.l.b16 %v3415
    %v4693 = vunpack.c.h.b16 %v3415
    %v4694 = vunpack.c.l.b16 %v3416
    %v4695 = vunpack.c.h.b16 %v3416
    %v4696 = vunpack.c.l.b16 %v3417
    %v4697 = vunpack.c.h.b16 %v3417
    %v4698 = vunpack.c.l.b16 %v3418
    %v4699 = vunpack.c.l.b16 %v3419
    %v4700 = vunpack.c.h.b16 %v3419
    %v4701 = vunpack.c.l.b16 %v3420
    %v4702 = vunpack.c.h.b16 %v3420
    %v4703 = vunpack.c.l.b16 %v3421
    %v4704 = vunpack.c.h.b16 %v3421
    %v4705 = vunpack.c.l.b16 %v3422
    %v4706 = vunpack.c.l.b16 %v3423
    %v4707 = vunpack.c.h.b16 %v3423
    %v4708 = vunpack.c.l.b16 %v3424
    %v4709 = vunpack.c.h.b16 %v3424
    %v4710 = vunpack.c.l.b16 %v3425
    %v4711 = vunpack.c.h.b16 %v3425
    %v4712 = vunpack.c.l.b16 %v3426
    %v4713 = vunpack.c.l.b16 %v3427
    %v4714 = vunpack.c.h.b16 %v3427
    %v4715 = vunpack.c.l.b16 %v3428
    %v4716 = vunpack.c.h.b16 %v3428
    %v4717 = vunpack.c.l.b16 %v3429
    %v4718 = vunpack.c.h.b16 %v3429
    %v4719 = vunpack.c.l.b16 %v3430
    %v4720 = vunpack.c.l.b16 %v3431
    %v4721 = vunpack.c.h.b16 %v3431
    %v4722 = vunpack.c.l.b16 %v3432
    %v4723 = vunpack.c.h.b16 %v3432
    %v4724 = vunpack.c.l.b16 %v3433
    %v4725 = vunpack.c.h.b16 %v3433
    %v4726 = vunpack.c.l.b16 %v3434
    %v4727 = vunpack.c.l.b16 %v3435
    %v4728 = vunpack.c.h.b16 %v3435
    %v4729 = vunpack.c.l.b16 %v3436
    %v4730 = vunpack.c.h.b16 %v3436
    %v4731 = vunpack.c.l.b16 %v3437
    %v4732 = vunpack.c.h.b16 %v3437
    %v4733 = vunpack.c.l.b16 %v3438
    %v4734 = vunpack.c.l.b16 %v3439
    %v4735 = vunpack.c.h.b16 %v3439
    %v4736 = vunpack.c.l.b16 %v3440
    %v4737 = vunpack.c.h.b16 %v3440
    %v4738 = vunpack.c.l.b16 %v3441
    %v4739 = vunpack.c.h.b16 %v3441
    %v4740 = vunpack.c.l.b16 %v3442
    %v4741 = vunpack.c.l.b16 %v3443
    %v4742 = vunpack.c.h.b16 %v3443
    %v4743 = vunpack.c.l.b16 %v3444
    %v4744 = vunpack.c.h.b16 %v3444
    %v4745 = vunpack.c.l.b16 %v3445
    %v4746 = vunpack.c.h.b16 %v3445
    %v4747 = vunpack.c.l.b16 %v3446
    %v4748 = vunpack.c.l.b16 %v3447
    %v4749 = vunpack.c.h.b16 %v3447
    %v4750 = vunpack.c.l.b16 %v3448
    %v4751 = vunpack.c.h.b16 %v3448
    %v4752 = vunpack.c.l.b16 %v3449
    %v4753 = vunpack.c.h.b16 %v3449
    %v4754 = vunpack.c.l.b16 %v3450
    %v4755 = vunpack.c.l.b16 %v3451
    %v4756 = vunpack.c.h.b16 %v3451
    %v4757 = vunpack.c.l.b16 %v3452
    %v4758 = vunpack.c.h.b16 %v3452
    %v4759 = vunpack.c.l.b16 %v3453
    %v4760 = vunpack.c.h.b16 %v3453
    %v4761 = vunpack.c.l.b16 %v3454
    %v4762 = vunpack.c.l.b16 %v3455
    %v4763 = vunpack.c.h.b16 %v3455
    %v4764 = vunpack.c.l.b16 %v3456
    %v4765 = vunpack.c.h.b16 %v3456
    %v4766 = vunpack.c.l.b16 %v3457
    %v4767 = vunpack.c.h.b16 %v3457
    %v4768 = vunpack.c.l.b16 %v3458
    %v4769 = vunpack.c.l.b16 %v3459
    %v4770 = vunpack.c.h.b16 %v3459
    %v4771 = vunpack.c.l.b16 %v3460
    %v4772 = vunpack.c.h.b16 %v3460
    %v4773 = vunpack.c.l.b16 %v3461
    %v4774 = vunpack.c.h.b16 %v3461
    %v4775 = vunpack.c.l.b16 %v3462
    %v4776 = vunpack.c.l.b16 %v3463
    %v4777 = vunpack.c.h.b16 %v3463
    %v4778 = vunpack.c.l.b16 %v3464
    %v4779 = vunpack.c.h.b16 %v3464
    %v4780 = vunpack.c.l.b16 %v3465
    %v4781 = vunpack.c.h.b16 %v3465
    %v4782 = vunpack.c.l.b16 %v3466
    %v4783 = vunpack.c.l.b16 %v3467
    %v4784 = vunpack.c.h.b16 %v3467
    %v4785 = vunpack.c.l.b16 %v3468
    %v4786 = vunpack.c.h.b16 %v3468
    %v4787 = vunpack.c.l.b16 %v3469
    %v4788 = vunpack.c.h.b16 %v3469
    %v4789 = vunpack.c.l.b16 %v3470
    %v4790 = vunpack.c.l.b16 %v3471
    %v4791 = vunpack.c.h.b16 %v3471
    %v4792 = vunpack.c.l.b16 %v3472
    %v4793 = vunpack.c.h.b16 %v3472
    %v4794 = vunpack.c.l.b16 %v3473
    %v4795 = vunpack.c.h.b16 %v3473
    %v4796 = vunpack.c.l.b16 %v3474
    %v4797 = vunpack.c.l.b16 %v3475
    %v4798 = vunpack.c.h.b16 %v3475
    %v4799 = vunpack.c.l.b16 %v3476
    %v4800 = vunpack.c.h.b16 %v3476
    %v4801 = vunpack.c.l.b16 %v3477
    %v4802 = vunpack.c.h.b16 %v3477
    %v4803 = vunpack.c.l.b16 %v3478
    %v4804 = vunpack.c.l.b16 %v3479
    %v4805 = vunpack.c.h.b16 %v3479
    %v4806 = vunpack.c.l.b16 %v3480
    %v4807 = vunpack.c.h.b16 %v3480
    %v4808 = vunpack.c.l.b16 %v3481
    %v4809 = vunpack.c.h.b16 %v3481
    %v4810 = vunpack.c.l.b16 %v3482
    %v4811 = vunpack.c.l.b16 %v3483
    %v4812 = vunpack.c.h.b16 %v3483
    %v4813 = vunpack.c.l.b16 %v3484
    %v4814 = vunpack.c.h.b16 %v3484
    %v4815 = vunpack.c.l.b16 %v3485
    %v4816 = vunpack.c.h.b16 %v3485
    %v4817 = vunpack.c.l.b16 %v3486
    %v4818 = vunpack.c.l.b16 %v3487
    %v4819 = vunpack.c.h.b16 %v3487
    %v4820 = vunpack.c.l.b16 %v3488
    %v4821 = vunpack.c.h.b16 %v3488
    %v4822 = vunpack.c.l.b16 %v3489
    %v4823 = vunpack.c.h.b16 %v3489
    %v4824 = vunpack.c.l.b16 %v3490
    %v4825 = vunpack.c.l.b16 %v3491
    %v4826 = vunpack.c.h.b16 %v3491
    %v4827 = vunpack.c.l.b16 %v3492
    %v4828 = vunpack.c.h.b16 %v3492
    %v4829 = vunpack.c.l.b16 %v3493
    %v4830 = vunpack.c.h.b16 %v3493
    %v4831 = vunpack.c.l.b16 %v3494
    %v4832 = vunpack.c.l.b16 %v3495
    %v4833 = vunpack.c.h.b16 %v3495
    %v4834 = vunpack.c.l.b16 %v3496
    %v4835 = vunpack.c.h.b16 %v3496
    %v4836 = vunpack.c.l.b16 %v3497
    %v4837 = vunpack.c.h.b16 %v3497
    %v4838 = vunpack.c.l.b16 %v3498
    %v4839 = vunpack.c.l.b16 %v3499
    %v4840 = vunpack.c.h.b16 %v3499
    %v4841 = vunpack.c.l.b16 %v3500
    %v4842 = vunpack.c.h.b16 %v3500
    %v4843 = vunpack.c.l.b16 %v3501
    %v4844 = vunpack.c.h.b16 %v3501
    %v4845 = vunpack.c.l.b16 %v3502
    %v4846 = vunpack.c.l.b16 %v3503
    %v4847 = vunpack.c.h.b16 %v3503
    %v4848 = vunpack.c.l.b16 %v3504
    %v4849 = vunpack.c.h.b16 %v3504
    %v4850 = vunpack.c.l.b16 %v3505
    %v4851 = vunpack.c.h.b16 %v3505
    %v4852 = vunpack.c.l.b16 %v3506
    %v4853 = vunpack.c.l.b16 %v3507
    %v4854 = vunpack.c.h.b16 %v3507
    %v4855 = vunpack.c.l.b16 %v3508
    %v4856 = vunpack.c.h.b16 %v3508
    %v4857 = vunpack.c.l.b16 %v3509
    %v4858 = vunpack.c.h.b16 %v3509
    %v4859 = vunpack.c.l.b16 %v3510
    %v4860 = vunpack.c.l.b16 %v3511
    %v4861 = vunpack.c.h.b16 %v3511
    %v4862 = vunpack.c.l.b16 %v3512
    %v4863 = vunpack.c.h.b16 %v3512
    %v4864 = vunpack.c.l.b16 %v3513
    %v4865 = vunpack.c.h.b16 %v3513
    %v4866 = vunpack.c.l.b16 %v3514
    %v4867 = vunpack.c.l.b16 %v3515
    %v4868 = vunpack.c.h.b16 %v3515
    %v4869 = vunpack.c.l.b16 %v3516
    %v4870 = vunpack.c.h.b16 %v3516
    %v4871 = vunpack.c.l.b16 %v3517
    %v4872 = vunpack.c.h.b16 %v3517
    %v4873 = vunpack.c.l.b16 %v3518
    %v4874 = vunpack.c.l.b16 %v3519
    %v4875 = vunpack.c.h.b16 %v3519
    %v4876 = vunpack.c.l.b16 %v3520
    %v4877 = vunpack.c.h.b16 %v3520
    %v4878 = vunpack.c.l.b16 %v3521
    %v4879 = vunpack.c.h.b16 %v3521
    %v4880 = vunpack.c.l.b16 %v3522
    %v4881 = vunpack.c.l.b16 %v3523
    %v4882 = vunpack.c.h.b16 %v3523
    %v4883 = vunpack.c.l.b16 %v3524
    %v4884 = vunpack.c.h.b16 %v3524
    %v4885 = vunpack.c.l.b16 %v3525
    %v4886 = vunpack.c.h.b16 %v3525
    %v4887 = vunpack.c.l.b16 %v3526
    %v4888 = vunpack.c.l.b16 %v3527
    %v4889 = vunpack.c.h.b16 %v3527
    %v4890 = vunpack.c.l.b16 %v3528
    %v4891 = vunpack.c.h.b16 %v3528
    %v4892 = vunpack.c.l.b16 %v3529
    %v4893 = vunpack.c.h.b16 %v3529
    %v4894 = vunpack.c.l.b16 %v3530
    %v4895 = vunpack.c.l.b16 %v3531
    %v4896 = vunpack.c.h.b16 %v3531
    %v4897 = vunpack.c.l.b16 %v3532
    %v4898 = vunpack.c.h.b16 %v3532
    %v4899 = vunpack.c.l.b16 %v3533
    %v4900 = vunpack.c.h.b16 %v3533
    %v4901 = vunpack.c.l.b16 %v3534
    %v4902 = vunpack.c.l.b16 %v3535
    %v4903 = vunpack.c.h.b16 %v3535
    %v4904 = vunpack.c.l.b16 %v3536
    %v4905 = vunpack.c.h.b16 %v3536
    %v4906 = vunpack.c.l.b16 %v3537
    %v4907 = vunpack.c.h.b16 %v3537
    %v4908 = vunpack.c.l.b16 %v3538
    %v4909 = vunpack.c.l.b16 %v3539
    %v4910 = vunpack.c.h.b16 %v3539
    %v4911 = vunpack.c.l.b16 %v3540
    %v4912 = vunpack.c.h.b16 %v3540
    %v4913 = vunpack.c.l.b16 %v3541
    %v4914 = vunpack.c.h.b16 %v3541
    %v4915 = vunpack.c.l.b16 %v3542
    %v4916 = vunpack.c.l.b16 %v3543
    %v4917 = vunpack.c.h.b16 %v3543
    %v4918 = vunpack.c.l.b16 %v3544
    %v4919 = vunpack.c.h.b16 %v3544
    %v4920 = vunpack.c.l.b16 %v3545
    %v4921 = vunpack.c.h.b16 %v3545
    %v4922 = vunpack.c.l.b16 %v3546
    %v4923 = vunpack.c.l.b16 %v3547
    %v4924 = vunpack.c.h.b16 %v3547
    %v4925 = vunpack.c.l.b16 %v3548
    %v4926 = vunpack.c.h.b16 %v3548
    %v4927 = vunpack.c.l.b16 %v3549
    %v4928 = vunpack.c.h.b16 %v3549
    %v4929 = vunpack.c.l.b16 %v3550
    %v4930 = vunpack.c.l.b16 %v3551
    %v4931 = vunpack.c.h.b16 %v3551
    %v4932 = vunpack.c.l.b16 %v3552
    %v4933 = vunpack.c.h.b16 %v3552
    %v4934 = vunpack.c.l.b16 %v3553
    %v4935 = vunpack.c.h.b16 %v3553
    %v4936 = vunpack.c.l.b16 %v3554
    %v4937 = vunpack.c.l.b16 %v3555
    %v4938 = vunpack.c.h.b16 %v3555
    %v4939 = vunpack.c.l.b16 %v3556
    %v4940 = vunpack.c.h.b16 %v3556
    %v4941 = vunpack.c.l.b16 %v3557
    %v4942 = vunpack.c.h.b16 %v3557
    %v4943 = vunpack.c.l.b16 %v3558
    %v4944 = vunpack.c.l.b16 %v3559
    %v4945 = vunpack.c.h.b16 %v3559
    %v4946 = vunpack.c.l.b16 %v3560
    %v4947 = vunpack.c.h.b16 %v3560
    %v4948 = vunpack.c.l.b16 %v3561
    %v4949 = vunpack.c.h.b16 %v3561
    %v4950 = vunpack.c.l.b16 %v3562
    %v4951 = vunpack.c.l.b16 %v3563
    %v4952 = vunpack.c.h.b16 %v3563
    %v4953 = vunpack.c.l.b16 %v3564
    %v4954 = vunpack.c.h.b16 %v3564
    %v4955 = vunpack.c.l.b16 %v3565
    %v4956 = vunpack.c.h.b16 %v3565
    %v4957 = vunpack.c.l.b16 %v3566
    %v4958 = vunpack.c.l.b16 %v3567
    %v4959 = vunpack.c.h.b16 %v3567
    %v4960 = vunpack.c.l.b16 %v3568
    %v4961 = vunpack.c.h.b16 %v3568
    %v4962 = vunpack.c.l.b16 %v3569
    %v4963 = vunpack.c.h.b16 %v3569
    %v4964 = vunpack.c.l.b16 %v3570
    %v4965 = vunpack.c.l.b16 %v3571
    %v4966 = vunpack.c.h.b16 %v3571
    %v4967 = vunpack.c.l.b16 %v3572
    %v4968 = vunpack.c.h.b16 %v3572
    %v4969 = vunpack.c.l.b16 %v3573
    %v4970 = vunpack.c.h.b16 %v3573
    %v4971 = vunpack.c.l.b16 %v3574
    %v4972 = vunpack.c.l.b16 %v3575
    %v4973 = vunpack.c.h.b16 %v3575
    %v4974 = vunpack.c.l.b16 %v3576
    %v4975 = vunpack.c.h.b16 %v3576
    %v4976 = vunpack.c.l.b16 %v3577
    %v4977 = vunpack.c.h.b16 %v3577
    %v4978 = vunpack.c.l.b16 %v3578
    %v4979 = vunpack.c.l.b16 %v3579
    %v4980 = vunpack.c.h.b16 %v3579
    %v4981 = vunpack.c.l.b16 %v3580
    %v4982 = vunpack.c.h.b16 %v3580
    %v4983 = vunpack.c.l.b16 %v3581
    %v4984 = vunpack.c.h.b16 %v3581
    %v4985 = vunpack.c.l.b16 %v3582
    %v4986 = vunpack.c.l.b16 %v3583
    %v4987 = vunpack.c.h.b16 %v3583
    %v4988 = vunpack.c.l.b16 %v3584
    %v4989 = vunpack.c.h.b16 %v3584
    %v4990 = vunpack.c.l.b16 %v3585
    %v4991 = vunpack.c.h.b16 %v3585
    %v4992 = vunpack.c.l.b16 %v3586
    %v4993 = vunpack.c.l.b16 %v3587
    %v4994 = vunpack.c.h.b16 %v3587
    %v4995 = vunpack.c.l.b16 %v3588
    %v4996 = vunpack.c.h.b16 %v3588
    %v4997 = vunpack.c.l.b16 %v3589
    %v4998 = vunpack.c.h.b16 %v3589
    %v4999 = vunpack.c.l.b16 %v3590
    %v5000 = vunpack.c.l.b16 %v3591
    %v5001 = vunpack.c.h.b16 %v3591
    %v5002 = vunpack.c.l.b16 %v3592
    %v5003 = vunpack.c.h.b16 %v3592
    %v5004 = vunpack.c.l.b16 %v3593
    %v5005 = vunpack.c.h.b16 %v3593
    %v5006 = vunpack.c.l.b16 %v3594
    %v5007 = vunpack.c.l.b16 %v3595
    %v5008 = vunpack.c.h.b16 %v3595
    %v5009 = vunpack.c.l.b16 %v3596
    %v5010 = vunpack.c.h.b16 %v3596
    %v5011 = vunpack.c.l.b16 %v3597
    %v5012 = vunpack.c.h.b16 %v3597
    %v5013 = vunpack.c.l.b16 %v3598
    %v5014 = vunpack.c.l.b16 %v3599
    %v5015 = vunpack.c.h.b16 %v3599
    %v5016 = vunpack.c.l.b16 %v3600
    %v5017 = vunpack.c.h.b16 %v3600
    %v5018 = vunpack.c.l.b16 %v3601
    %v5019 = vunpack.c.h.b16 %v3601
    %v5020 = vunpack.c.l.b16 %v3602
    %v5021 = vunpack.c.l.b16 %v3603
    %v5022 = vunpack.c.h.b16 %v3603
    %v5023 = vunpack.c.l.b16 %v3604
    %v5024 = vunpack.c.h.b16 %v3604
    %v5025 = vunpack.c.l.b16 %v3605
    %v5026 = vunpack.c.h.b16 %v3605
    %v5027 = vunpack.c.l.b16 %v3606
    %v5028 = vunpack.c.l.b16 %v3607
    %v5029 = vunpack.c.h.b16 %v3607
    %v5030 = vunpack.c.l.b16 %v3608
    %v5031 = vunpack.c.h.b16 %v3608
    %v5032 = vunpack.c.l.b16 %v3609
    %v5033 = vunpack.c.h.b16 %v3609
    %v5034 = vunpack.c.l.b16 %v3610
    %v5035 = vpack.c.b16 %v4146, %v4139
    %v5036 = vpack.c.b16 %v4147, %v4140
    %v5037 = vpack.c.b16 %v4148, %v4141
    %v5038 = vpack.c.b16 %v4149, %v4142
    %v5039 = vpack.c.b16 %v4150, %v4143
    %v5040 = vpack.c.b16 %v4151, %v4144
    %v5041 = vpack.c.b16 %v4152, %v4145
    %v5042 = vpack.c.b16 %v4160, %v4153
    %v5043 = vpack.c.b16 %v4161, %v4154
    %v5044 = vpack.c.b16 %v4162, %v4155
    %v5045 = vpack.c.b16 %v4163, %v4156
    %v5046 = vpack.c.b16 %v4164, %v4157
    %v5047 = vpack.c.b16 %v4165, %v4158
    %v5048 = vpack.c.b16 %v4166, %v4159
    %v5049 = vpack.c.b16 %v4174, %v4167
    %v5050 = vpack.c.b16 %v4175, %v4168
    %v5051 = vpack.c.b16 %v4176, %v4169
    %v5052 = vpack.c.b16 %v4177, %v4170
    %v5053 = vpack.c.b16 %v4178, %v4171
    %v5054 = vpack.c.b16 %v4179, %v4172
    %v5055 = vpack.c.b16 %v4180, %v4173
    %v5056 = vpack.c.b16 %v4188, %v4181
    %v5057 = vpack.c.b16 %v4189, %v4182
    %v5058 = vpack.c.b16 %v4190, %v4183
    %v5059 = vpack.c.b16 %v4191, %v4184
    %v5060 = vpack.c.b16 %v4192, %v4185
    %v5061 = vpack.c.b16 %v4193, %v4186
    %v5062 = vpack.c.b16 %v4194, %v4187
    %v5063 = vpack.c.b16 %v4202, %v4195
    %v5064 = vpack.c.b16 %v4203, %v4196
    %v5065 = vpack.c.b16 %v4204, %v4197
    %v5066 = vpack.c.b16 %v4205, %v4198
    %v5067 = vpack.c.b16 %v4206, %v4199
    %v5068 = vpack.c.b16 %v4207, %v4200
    %v5069 = vpack.c.b16 %v4208, %v4201
    %v5070 = vpack.c.b16 %v4216, %v4209
    %v5071 = vpack.c.b16 %v4217, %v4210
    %v5072 = vpack.c.b16 %v4218, %v4211
    %v5073 = vpack.c.b16 %v4219, %v4212
    %v5074 = vpack.c.b16 %v4220, %v4213
    %v5075 = vpack.c.b16 %v4221, %v4214
    %v5076 = vpack.c.b16 %v4222, %v4215
    %v5077 = vpack.c.b16 %v4230, %v4223
    %v5078 = vpack.c.b16 %v4231, %v4224
    %v5079 = vpack.c.b16 %v4232, %v4225
    %v5080 = vpack.c.b16 %v4233, %v4226
    %v5081 = vpack.c.b16 %v4234, %v4227
    %v5082 = vpack.c.b16 %v4235, %v4228
    %v5083 = vpack.c.b16 %v4236, %v4229
    %v5084 = vpack.c.b16 %v4244, %v4237
    %v5085 = vpack.c.b16 %v4245, %v4238
    %v5086 = vpack.c.b16 %v4246, %v4239
    %v5087 = vpack.c.b16 %v4247, %v4240
    %v5088 = vpack.c.b16 %v4248, %v4241
    %v5089 = vpack.c.b16 %v4249, %v4242
    %v5090 = vpack.c.b16 %v4250, %v4243
    %v5091 = vpack.c.b16 %v4258, %v4251
    %v5092 = vpack.c.b16 %v4259, %v4252
    %v5093 = vpack.c.b16 %v4260, %v4253
    %v5094 = vpack.c.b16 %v4261, %v4254
    %v5095 = vpack.c.b16 %v4262, %v4255
    %v5096 = vpack.c.b16 %v4263, %v4256
    %v5097 = vpack.c.b16 %v4264, %v4257
    %v5098 = vpack.c.b16 %v4272, %v4265
    %v5099 = vpack.c.b16 %v4273, %v4266
    %v5100 = vpack.c.b16 %v4274, %v4267
    %v5101 = vpack.c.b16 %v4275, %v4268
    %v5102 = vpack.c.b16 %v4276, %v4269
    %v5103 = vpack.c.b16 %v4277, %v4270
    %v5104 = vpack.c.b16 %v4278, %v4271
    %v5105 = vpack.c.b16 %v4286, %v4279
    %v5106 = vpack.c.b16 %v4287, %v4280
    %v5107 = vpack.c.b16 %v4288, %v4281
    %v5108 = vpack.c.b16 %v4289, %v4282
    %v5109 = vpack.c.b16 %v4290, %v4283
    %v5110 = vpack.c.b16 %v4291, %v4284
    %v5111 = vpack.c.b16 %v4292, %v4285
    %v5112 = vpack.c.b16 %v4300, %v4293
    %v5113 = vpack.c.b16 %v4301, %v4294
    %v5114 = vpack.c.b16 %v4302, %v4295
    %v5115 = vpack.c.b16 %v4303, %v4296
    %v5116 = vpack.c.b16 %v4304, %v4297
    %v5117 = vpack.c.b16 %v4305, %v4298
    %v5118 = vpack.c.b16 %v4306, %v4299
    %v5119 = vpack.c.b16 %v4314, %v4307
    %v5120 = vpack.c.b16 %v4315, %v4308
    %v5121 = vpack.c.b16 %v4316, %v4309
    %v5122 = vpack.c.b16 %v4317, %v4310
    %v5123 = vpack.c.b16 %v4318, %v4311
    %v5124 = vpack.c.b16 %v4319, %v4312
    %v5125 = vpack.c.b16 %v4320, %v4313
    %v5126 = vpack.c.b16 %v4328, %v4321
    %v5127 = vpack.c.b16 %v4329, %v4322
    %v5128 = vpack.c.b16 %v4330, %v4323
    %v5129 = vpack.c.b16 %v4331, %v4324
    %v5130 = vpack.c.b16 %v4332, %v4325
    %v5131 = vpack.c.b16 %v4333, %v4326
    %v5132 = vpack.c.b16 %v4334, %v4327
    %v5133 = vpack.c.b16 %v4342, %v4335
    %v5134 = vpack.c.b16 %v4343, %v4336
    %v5135 = vpack.c.b16 %v4344, %v4337
    %v5136 = vpack.c.b16 %v4345, %v4338
    %v5137 = vpack.c.b16 %v4346, %v4339
    %v5138 = vpack.c.b16 %v4347, %v4340
    %v5139 = vpack.c.b16 %v4348, %v4341
    %v5140 = vpack.c.b16 %v4356, %v4349
    %v5141 = vpack.c.b16 %v4357, %v4350
    %v5142 = vpack.c.b16 %v4358, %v4351
    %v5143 = vpack.c.b16 %v4359, %v4352
    %v5144 = vpack.c.b16 %v4360, %v4353
    %v5145 = vpack.c.b16 %v4361, %v4354
    %v5146 = vpack.c.b16 %v4362, %v4355
    %v5147 = vpack.c.b16 %v4370, %v4363
    %v5148 = vpack.c.b16 %v4371, %v4364
    %v5149 = vpack.c.b16 %v4372, %v4365
    %v5150 = vpack.c.b16 %v4373, %v4366
    %v5151 = vpack.c.b16 %v4374, %v4367
    %v5152 = vpack.c.b16 %v4375, %v4368
    %v5153 = vpack.c.b16 %v4376, %v4369
    %v5154 = vpack.c.b16 %v4384, %v4377
    %v5155 = vpack.c.b16 %v4385, %v4378
    %v5156 = vpack.c.b16 %v4386, %v4379
    %v5157 = vpack.c.b16 %v4387, %v4380
    %v5158 = vpack.c.b16 %v4388, %v4381
    %v5159 = vpack.c.b16 %v4389, %v4382
    %v5160 = vpack.c.b16 %v4390, %v4383
    %v5161 = vpack.c.b16 %v4398, %v4391
    %v5162 = vpack.c.b16 %v4399, %v4392
    %v5163 = vpack.c.b16 %v4400, %v4393
    %v5164 = vpack.c.b16 %v4401, %v4394
    %v5165 = vpack.c.b16 %v4402, %v4395
    %v5166 = vpack.c.b16 %v4403, %v4396
    %v5167 = vpack.c.b16 %v4404, %v4397
    %v5168 = vpack.c.b16 %v4412, %v4405
    %v5169 = vpack.c.b16 %v4413, %v4406
    %v5170 = vpack.c.b16 %v4414, %v4407
    %v5171 = vpack.c.b16 %v4415, %v4408
    %v5172 = vpack.c.b16 %v4416, %v4409
    %v5173 = vpack.c.b16 %v4417, %v4410
    %v5174 = vpack.c.b16 %v4418, %v4411
    %v5175 = vpack.c.b16 %v4426, %v4419
    %v5176 = vpack.c.b16 %v4427, %v4420
    %v5177 = vpack.c.b16 %v4428, %v4421
    %v5178 = vpack.c.b16 %v4429, %v4422
    %v5179 = vpack.c.b16 %v4430, %v4423
    %v5180 = vpack.c.b16 %v4431, %v4424
    %v5181 = vpack.c.b16 %v4432, %v4425
    %v5182 = vpack.c.b16 %v4440, %v4433
    %v5183 = vpack.c.b16 %v4441, %v4434
    %v5184 = vpack.c.b16 %v4442, %v4435
    %v5185 = vpack.c.b16 %v4443, %v4436
    %v5186 = vpack.c.b16 %v4444, %v4437
    %v5187 = vpack.c.b16 %v4445, %v4438
    %v5188 = vpack.c.b16 %v4446, %v4439
    %v5189 = vpack.c.b16 %v4454, %v4447
    %v5190 = vpack.c.b16 %v4455, %v4448
    %v5191 = vpack.c.b16 %v4456, %v4449
    %v5192 = vpack.c.b16 %v4457, %v4450
    %v5193 = vpack.c.b16 %v4458, %v4451
    %v5194 = vpack.c.b16 %v4459, %v4452
    %v5195 = vpack.c.b16 %v4460, %v4453
    %v5196 = vpack.c.b16 %v4468, %v4461
    %v5197 = vpack.c.b16 %v4469, %v4462
    %v5198 = vpack.c.b16 %v4470, %v4463
    %v5199 = vpack.c.b16 %v4471, %v4464
    %v5200 = vpack.c.b16 %v4472, %v4465
    %v5201 = vpack.c.b16 %v4473, %v4466
    %v5202 = vpack.c.b16 %v4474, %v4467
    %v5203 = vpack.c.b16 %v4482, %v4475
    %v5204 = vpack.c.b16 %v4483, %v4476
    %v5205 = vpack.c.b16 %v4484, %v4477
    %v5206 = vpack.c.b16 %v4485, %v4478
    %v5207 = vpack.c.b16 %v4486, %v4479
    %v5208 = vpack.c.b16 %v4487, %v4480
    %v5209 = vpack.c.b16 %v4488, %v4481
    %v5210 = vpack.c.b16 %v4496, %v4489
    %v5211 = vpack.c.b16 %v4497, %v4490
    %v5212 = vpack.c.b16 %v4498, %v4491
    %v5213 = vpack.c.b16 %v4499, %v4492
    %v5214 = vpack.c.b16 %v4500, %v4493
    %v5215 = vpack.c.b16 %v4501, %v4494
    %v5216 = vpack.c.b16 %v4502, %v4495
    %v5217 = vpack.c.b16 %v4510, %v4503
    %v5218 = vpack.c.b16 %v4511, %v4504
    %v5219 = vpack.c.b16 %v4512, %v4505
    %v5220 = vpack.c.b16 %v4513, %v4506
    %v5221 = vpack.c.b16 %v4514, %v4507
    %v5222 = vpack.c.b16 %v4515, %v4508
    %v5223 = vpack.c.b16 %v4516, %v4509
    %v5224 = vpack.c.b16 %v4524, %v4517
    %v5225 = vpack.c.b16 %v4525, %v4518
    %v5226 = vpack.c.b16 %v4526, %v4519
    %v5227 = vpack.c.b16 %v4527, %v4520
    %v5228 = vpack.c.b16 %v4528, %v4521
    %v5229 = vpack.c.b16 %v4529, %v4522
    %v5230 = vpack.c.b16 %v4530, %v4523
    %v5231 = vpack.c.b16 %v4538, %v4531
    %v5232 = vpack.c.b16 %v4539, %v4532
    %v5233 = vpack.c.b16 %v4540, %v4533
    %v5234 = vpack.c.b16 %v4541, %v4534
    %v5235 = vpack.c.b16 %v4542, %v4535
    %v5236 = vpack.c.b16 %v4543, %v4536
    %v5237 = vpack.c.b16 %v4544, %v4537
    %v5238 = vpack.c.b16 %v4552, %v4545
    %v5239 = vpack.c.b16 %v4553, %v4546
    %v5240 = vpack.c.b16 %v4554, %v4547
    %v5241 = vpack.c.b16 %v4555, %v4548
    %v5242 = vpack.c.b16 %v4556, %v4549
    %v5243 = vpack.c.b16 %v4557, %v4550
    %v5244 = vpack.c.b16 %v4558, %v4551
    %v5245 = vpack.c.b16 %v4566, %v4559
    %v5246 = vpack.c.b16 %v4567, %v4560
    %v5247 = vpack.c.b16 %v4568, %v4561
    %v5248 = vpack.c.b16 %v4569, %v4562
    %v5249 = vpack.c.b16 %v4570, %v4563
    %v5250 = vpack.c.b16 %v4571, %v4564
    %v5251 = vpack.c.b16 %v4572, %v4565
    %v5252 = vpack.c.b16 %v4580, %v4573
    %v5253 = vpack.c.b16 %v4581, %v4574
    %v5254 = vpack.c.b16 %v4582, %v4575
    %v5255 = vpack.c.b16 %v4583, %v4576
    %v5256 = vpack.c.b16 %v4584, %v4577
    %v5257 = vpack.c.b16 %v4585, %v4578
    %v5258 = vpack.c.b16 %v4586, %v4579
    %v5259 = vpack.c.b16 %v4594, %v4587
    %v5260 = vpack.c.b16 %v4595, %v4588
    %v5261 = vpack.c.b16 %v4596, %v4589
    %v5262 = vpack.c.b16 %v4597, %v4590
    %v5263 = vpack.c.b16 %v4598, %v4591
    %v5264 = vpack.c.b16 %v4599, %v4592
    %v5265 = vpack.c.b16 %v4600, %v4593
    %v5266 = vpack.c.b16 %v4608, %v4601
    %v5267 = vpack.c.b16 %v4609, %v4602
    %v5268 = vpack.c.b16 %v4610, %v4603
    %v5269 = vpack.c.b16 %v4611, %v4604
    %v5270 = vpack.c.b16 %v4612, %v4605
    %v5271 = vpack.c.b16 %v4613, %v4606
    %v5272 = vpack.c.b16 %v4614, %v4607
    %v5273 = vpack.c.b16 %v4622, %v4615
    %v5274 = vpack.c.b16 %v4623, %v4616
    %v5275 = vpack.c.b16 %v4624, %v4617
    %v5276 = vpack.c.b16 %v4625, %v4618
    %v5277 = vpack.c.b16 %v4626, %v4619
    %v5278 = vpack.c.b16 %v4627, %v4620
    %v5279 = vpack.c.b16 %v4628, %v4621
    %v5280 = vpack.c.b16 %v4636, %v4629
    %v5281 = vpack.c.b16 %v4637, %v4630
    %v5282 = vpack.c.b16 %v4638, %v4631
    %v5283 = vpack.c.b16 %v4639, %v4632
    %v5284 = vpack.c.b16 %v4640, %v4633
    %v5285 = vpack.c.b16 %v4641, %v4634
    %v5286 = vpack.c.b16 %v4642, %v4635
    %v5287 = vpack.c.b16 %v4650, %v4643
    %v5288 = vpack.c.b16 %v4651, %v4644
    %v5289 = vpack.c.b16 %v4652, %v4645
    %v5290 = vpack.c.b16 %v4653, %v4646
    %v5291 = vpack.c.b16 %v4654, %v4647
    %v5292 = vpack.c.b16 %v4655, %v4648
    %v5293 = vpack.c.b16 %v4656, %v4649
    %v5294 = vpack.c.b16 %v4664, %v4657
    %v5295 = vpack.c.b16 %v4665, %v4658
    %v5296 = vpack.c.b16 %v4666, %v4659
    %v5297 = vpack.c.b16 %v4667, %v4660
    %v5298 = vpack.c.b16 %v4668, %v4661
    %v5299 = vpack.c.b16 %v4669, %v4662
    %v5300 = vpack.c.b16 %v4670, %v4663
    %v5301 = vpack.c.b16 %v4678, %v4671
    %v5302 = vpack.c.b16 %v4679, %v4672
    %v5303 = vpack.c.b16 %v4680, %v4673
    %v5304 = vpack.c.b16 %v4681, %v4674
    %v5305 = vpack.c.b16 %v4682, %v4675
    %v5306 = vpack.c.b16 %v4683, %v4676
    %v5307 = vpack.c.b16 %v4684, %v4677
    %v5308 = vpack.c.b16 %v4692, %v4685
    %v5309 = vpack.c.b16 %v4693, %v4686
    %v5310 = vpack.c.b16 %v4694, %v4687
    %v5311 = vpack.c.b16 %v4695, %v4688
    %v5312 = vpack.c.b16 %v4696, %v4689
    %v5313 = vpack.c.b16 %v4697, %v4690
    %v5314 = vpack.c.b16 %v4698, %v4691
    %v5315 = vpack.c.b16 %v4706, %v4699
    %v5316 = vpack.c.b16 %v4707, %v4700
    %v5317 = vpack.c.b16 %v4708, %v4701
    %v5318 = vpack.c.b16 %v4709, %v4702
    %v5319 = vpack.c.b16 %v4710, %v4703
    %v5320 = vpack.c.b16 %v4711, %v4704
    %v5321 = vpack.c.b16 %v4712, %v4705
    %v5322 = vpack.c.b16 %v4720, %v4713
    %v5323 = vpack.c.b16 %v4721, %v4714
    %v5324 = vpack.c.b16 %v4722, %v4715
    %v5325 = vpack.c.b16 %v4723, %v4716
    %v5326 = vpack.c.b16 %v4724, %v4717
    %v5327 = vpack.c.b16 %v4725, %v4718
    %v5328 = vpack.c.b16 %v4726, %v4719
    %v5329 = vpack.c.b16 %v4734, %v4727
    %v5330 = vpack.c.b16 %v4735, %v4728
    %v5331 = vpack.c.b16 %v4736, %v4729
    %v5332 = vpack.c.b16 %v4737, %v4730
    %v5333 = vpack.c.b16 %v4738, %v4731
    %v5334 = vpack.c.b16 %v4739, %v4732
    %v5335 = vpack.c.b16 %v4740, %v4733
    %v5336 = vpack.c.b16 %v4748, %v4741
    %v5337 = vpack.c.b16 %v4749, %v4742
    %v5338 = vpack.c.b16 %v4750, %v4743
    %v5339 = vpack.c.b16 %v4751, %v4744
    %v5340 = vpack.c.b16 %v4752, %v4745
    %v5341 = vpack.c.b16 %v4753, %v4746
    %v5342 = vpack.c.b16 %v4754, %v4747
    %v5343 = vpack.c.b16 %v4762, %v4755
    %v5344 = vpack.c.b16 %v4763, %v4756
    %v5345 = vpack.c.b16 %v4764, %v4757
    %v5346 = vpack.c.b16 %v4765, %v4758
    %v5347 = vpack.c.b16 %v4766, %v4759
    %v5348 = vpack.c.b16 %v4767, %v4760
    %v5349 = vpack.c.b16 %v4768, %v4761
    %v5350 = vpack.c.b16 %v4776, %v4769
    %v5351 = vpack.c.b16 %v4777, %v4770
    %v5352 = vpack.c.b16 %v4778, %v4771
    %v5353 = vpack.c.b16 %v4779, %v4772
    %v5354 = vpack.c.b16 %v4780, %v4773
    %v5355 = vpack.c.b16 %v4781, %v4774
    %v5356 = vpack.c.b16 %v4782, %v4775
    %v5357 = vpack.c.b16 %v4790, %v4783
    %v5358 = vpack.c.b16 %v4791, %v4784
    %v5359 = vpack.c.b16 %v4792, %v4785
    %v5360 = vpack.c.b16 %v4793, %v4786
    %v5361 = vpack.c.b16 %v4794, %v4787
    %v5362 = vpack.c.b16 %v4795, %v4788
    %v5363 = vpack.c.b16 %v4796, %v4789
    %v5364 = vpack.c.b16 %v4804, %v4797
    %v5365 = vpack.c.b16 %v4805, %v4798
    %v5366 = vpack.c.b16 %v4806, %v4799
    %v5367 = vpack.c.b16 %v4807, %v4800
    %v5368 = vpack.c.b16 %v4808, %v4801
    %v5369 = vpack.c.b16 %v4809, %v4802
    %v5370 = vpack.c.b16 %v4810, %v4803
    %v5371 = vpack.c.b16 %v4818, %v4811
    %v5372 = vpack.c.b16 %v4819, %v4812
    %v5373 = vpack.c.b16 %v4820, %v4813
    %v5374 = vpack.c.b16 %v4821, %v4814
    %v5375 = vpack.c.b16 %v4822, %v4815
    %v5376 = vpack.c.b16 %v4823, %v4816
    %v5377 = vpack.c.b16 %v4824, %v4817
    %v5378 = vpack.c.b16 %v4832, %v4825
    %v5379 = vpack.c.b16 %v4833, %v4826
    %v5380 = vpack.c.b16 %v4834, %v4827
    %v5381 = vpack.c.b16 %v4835, %v4828
    %v5382 = vpack.c.b16 %v4836, %v4829
    %v5383 = vpack.c.b16 %v4837, %v4830
    %v5384 = vpack.c.b16 %v4838, %v4831
    %v5385 = vpack.c.b16 %v4846, %v4839
    %v5386 = vpack.c.b16 %v4847, %v4840
    %v5387 = vpack.c.b16 %v4848, %v4841
    %v5388 = vpack.c.b16 %v4849, %v4842
    %v5389 = vpack.c.b16 %v4850, %v4843
    %v5390 = vpack.c.b16 %v4851, %v4844
    %v5391 = vpack.c.b16 %v4852, %v4845
    %v5392 = vpack.c.b16 %v4860, %v4853
    %v5393 = vpack.c.b16 %v4861, %v4854
    %v5394 = vpack.c.b16 %v4862, %v4855
    %v5395 = vpack.c.b16 %v4863, %v4856
    %v5396 = vpack.c.b16 %v4864, %v4857
    %v5397 = vpack.c.b16 %v4865, %v4858
    %v5398 = vpack.c.b16 %v4866, %v4859
    %v5399 = vpack.c.b16 %v4874, %v4867
    %v5400 = vpack.c.b16 %v4875, %v4868
    %v5401 = vpack.c.b16 %v4876, %v4869
    %v5402 = vpack.c.b16 %v4877, %v4870
    %v5403 = vpack.c.b16 %v4878, %v4871
    %v5404 = vpack.c.b16 %v4879, %v4872
    %v5405 = vpack.c.b16 %v4880, %v4873
    %v5406 = vpack.c.b16 %v4888, %v4881
    %v5407 = vpack.c.b16 %v4889, %v4882
    %v5408 = vpack.c.b16 %v4890, %v4883
    %v5409 = vpack.c.b16 %v4891, %v4884
    %v5410 = vpack.c.b16 %v4892, %v4885
    %v5411 = vpack.c.b16 %v4893, %v4886
    %v5412 = vpack.c.b16 %v4894, %v4887
    %v5413 = vpack.c.b16 %v4902, %v4895
    %v5414 = vpack.c.b16 %v4903, %v4896
    %v5415 = vpack.c.b16 %v4904, %v4897
    %v5416 = vpack.c.b16 %v4905, %v4898
    %v5417 = vpack.c.b16 %v4906, %v4899
    %v5418 = vpack.c.b16 %v4907, %v4900
    %v5419 = vpack.c.b16 %v4908, %v4901
    %v5420 = vpack.c.b16 %v4916, %v4909
    %v5421 = vpack.c.b16 %v4917, %v4910
    %v5422 = vpack.c.b16 %v4918, %v4911
    %v5423 = vpack.c.b16 %v4919, %v4912
    %v5424 = vpack.c.b16 %v4920, %v4913
    %v5425 = vpack.c.b16 %v4921, %v4914
    %v5426 = vpack.c.b16 %v4922, %v4915
    %v5427 = vpack.c.b16 %v4930, %v4923
    %v5428 = vpack.c.b16 %v4931, %v4924
    %v5429 = vpack.c.b16 %v4932, %v4925
    %v5430 = vpack.c.b16 %v4933, %v4926
    %v5431 = vpack.c.b16 %v4934, %v4927
    %v5432 = vpack.c.b16 %v4935, %v4928
    %v5433 = vpack.c.b16 %v4936, %v4929
    %v5434 = vpack.c.b16 %v4944, %v4937
    %v5435 = vpack.c.b16 %v4945, %v4938
    %v5436 = vpack.c.b16 %v4946, %v4939
    %v5437 = vpack.c.b16 %v4947, %v4940
    %v5438 = vpack.c.b16 %v4948, %v4941
    %v5439 = vpack.c.b16 %v4949, %v4942
    %v5440 = vpack.c.b16 %v4950, %v4943
    %v5441 = vpack.c.b16 %v4958, %v4951
    %v5442 = vpack.c.b16 %v4959, %v4952
    %v5443 = vpack.c.b16 %v4960, %v4953
    %v5444 = vpack.c.b16 %v4961, %v4954
    %v5445 = vpack.c.b16 %v4962, %v4955
    %v5446 = vpack.c.b16 %v4963, %v4956
    %v5447 = vpack.c.b16 %v4964, %v4957
    %v5448 = vpack.c.b16 %v4972, %v4965
    %v5449 = vpack.c.b16 %v4973, %v4966
    %v5450 = vpack.c.b16 %v4974, %v4967
    %v5451 = vpack.c.b16 %v4975, %v4968
    %v5452 = vpack.c.b16 %v4976, %v4969
    %v5453 = vpack.c.b16 %v4977, %v4970
    %v5454 = vpack.c.b16 %v4978, %v4971
    %v5455 = vpack.c.b16 %v4986, %v4979
    %v5456 = vpack.c.b16 %v4987, %v4980
    %v5457 = vpack.c.b16 %v4988, %v4981
    %v5458 = vpack.c.b16 %v4989, %v4982
    %v5459 = vpack.c.b16 %v4990, %v4983
    %v5460 = vpack.c.b16 %v4991, %v4984
    %v5461 = vpack.c.b16 %v4992, %v4985
    %v5462 = vpack.c.b16 %v5000, %v4993
    %v5463 = vpack.c.b16 %v5001, %v4994
    %v5464 = vpack.c.b16 %v5002, %v4995
    %v5465 = vpack.c.b16 %v5003, %v4996
    %v5466 = vpack.c.b16 %v5004, %v4997
    %v5467 = vpack.c.b16 %v5005, %v4998
    %v5468 = vpack.c.b16 %v5006, %v4999
    %v5469 = vpack.c.b16 %v5014, %v5007
    %v5470 = vpack.c.b16 %v5015, %v5008
    %v5471 = vpack.c.b16 %v5016, %v5009
    %v5472 = vpack.c.b16 %v5017, %v5010
    %v5473 = vpack.c.b16 %v5018, %v5011
    %v5474 = vpack.c.b16 %v5019, %v5012
    %v5475 = vpack.c.b16 %v5020, %v5013
    %v5476 = vpack.c.b16 %v5028, %v5021
    %v5477 = vpack.c.b16 %v5029, %v5022
    %v5478 = vpack.c.b16 %v5030, %v5023
    %v5479 = vpack.c.b16 %v5031, %v5024
    %v5480 = vpack.c.b16 %v5032, %v5025
    %v5481 = vpack.c.b16 %v5033, %v5026
    %v5482 = vpack.c.b16 %v5034, %v5027
    %5931 = vmatpush.bf16.msra.mxu0 %v5084
    %5932 = vmatpush.bf16.msra.mxu0 %v5077
    %5933 = vmatpush.bf16.msra.mxu0 %v5070
    %5934 = vmatpush.bf16.msra.mxu0 %v5063
    %5935 = vmatpush.bf16.msra.mxu0 %v5056
    %5936 = vmatpush.bf16.msra.mxu0 %v5049
    %5937 = vmatpush.bf16.msra.mxu0 %v5042
    %5938 = vmatpush.bf16.msra.mxu0 %v5035
    %5939 = vmatmul.bf16.gmra.mxu0 %v3083
    %v5940 = vpop.f32.mrf.mxu0
    %v5941 = vadd.f32 %v3613, %v5940
    %v5942 = vpop.f32.mrf.mxu0
    %v5943 = vadd.f32 %v3613, %v5942
    %5944 = vmatmul.bf16.gmra.mxu0 %v3091
    %v5945 = vpop.f32.mrf.mxu0
    %v5946 = vadd.f32 %v3613, %v5945
    %v5947 = vpop.f32.mrf.mxu0
    %v5948 = vadd.f32 %v3613, %v5947
    %5949 = vdwg.mxu0
    %5950 = vmatpush.bf16.msra.mxu0 %v5140
    %5951 = vmatpush.bf16.msra.mxu0 %v5133
    %5952 = vmatpush.bf16.msra.mxu0 %v5126
    %5953 = vmatpush.bf16.msra.mxu0 %v5119
    %5954 = vmatpush.bf16.msra.mxu0 %v5112
    %5955 = vmatpush.bf16.msra.mxu0 %v5105
    %5956 = vmatpush.bf16.msra.mxu0 %v5098
    %5957 = vmatpush.bf16.msra.mxu0 %v5091
    %5958 = vmatmul.bf16.gmra.mxu0 %v3084
    %v5959 = vpop.f32.mrf.mxu0
    %v5960 = vadd.f32 %v5941, %v5959
    %v5961 = vpop.f32.mrf.mxu0
    %v5962 = vadd.f32 %v5943, %v5961
    %5963 = vmatmul.bf16.gmra.mxu0 %v3092
    %v5964 = vpop.f32.mrf.mxu0
    %v5965 = vadd.f32 %v5946, %v5964
    %v5966 = vpop.f32.mrf.mxu0
    %v5967 = vadd.f32 %v5948, %v5966
    %5968 = vdwg.mxu0
    %5969 = vmatpush.bf16.msra.mxu0 %v5196
    %5970 = vmatpush.bf16.msra.mxu0 %v5189
    %5971 = vmatpush.bf16.msra.mxu0 %v5182
    %5972 = vmatpush.bf16.msra.mxu0 %v5175
    %5973 = vmatpush.bf16.msra.mxu0 %v5168
    %5974 = vmatpush.bf16.msra.mxu0 %v5161
    %5975 = vmatpush.bf16.msra.mxu0 %v5154
    %5976 = vmatpush.bf16.msra.mxu0 %v5147
    %5977 = vmatmul.bf16.gmra.mxu0 %v3085
    %v5978 = vpop.f32.mrf.mxu0
    %v5979 = vadd.f32 %v5960, %v5978
    %v5980 = vpop.f32.mrf.mxu0
    %v5981 = vadd.f32 %v5962, %v5980
    %5982 = vmatmul.bf16.gmra.mxu0 %v3093
    %v5983 = vpop.f32.mrf.mxu0
    %v5984 = vadd.f32 %v5965, %v5983
    %v5985 = vpop.f32.mrf.mxu0
    %v5986 = vadd.f32 %v5967, %v5985
    %5987 = vdwg.mxu0
    %5988 = vmatpush.bf16.msra.mxu0 %v5252
    %5989 = vmatpush.bf16.msra.mxu0 %v5245
    %5990 = vmatpush.bf16.msra.mxu0 %v5238
    %5991 = vmatpush.bf16.msra.mxu0 %v5231
    %5992 = vmatpush.bf16.msra.mxu0 %v5224
    %5993 = vmatpush.bf16.msra.mxu0 %v5217
    %5994 = vmatpush.bf16.msra.mxu0 %v5210
    %5995 = vmatpush.bf16.msra.mxu0 %v5203
    %5996 = vmatmul.bf16.gmra.mxu0 %v3086
    %v5997 = vpop.f32.mrf.mxu0
    %v5998 = vadd.f32 %v5979, %v5997
    %v5999 = vpop.f32.mrf.mxu0
    %v6000 = vadd.f32 %v5981, %v5999
    %6001 = vmatmul.bf16.gmra.mxu0 %v3094
    %v6002 = vpop.f32.mrf.mxu0
    %v6003 = vadd.f32 %v5984, %v6002
    %v6004 = vpop.f32.mrf.mxu0
    %v6005 = vadd.f32 %v5986, %v6004
    %6006 = vdwg.mxu0
    %6007 = vmatpush.bf16.msra.mxu0 %v5308
    %6008 = vmatpush.bf16.msra.mxu0 %v5301
    %6009 = vmatpush.bf16.msra.mxu0 %v5294
    %6010 = vmatpush.bf16.msra.mxu0 %v5287
    %6011 = vmatpush.bf16.msra.mxu0 %v5280
    %6012 = vmatpush.bf16.msra.mxu0 %v5273
    %6013 = vmatpush.bf16.msra.mxu0 %v5266
    %6014 = vmatpush.bf16.msra.mxu0 %v5259
    %6015 = vmatmul.bf16.gmra.mxu0 %v3087
    %v6016 = vpop.f32.mrf.mxu0
    %v6017 = vadd.f32 %v5998, %v6016
    %v6018 = vpop.f32.mrf.mxu0
    %v6019 = vadd.f32 %v6000, %v6018
    %6020 = vmatmul.bf16.gmra.mxu0 %v3095
    %v6021 = vpop.f32.mrf.mxu0
    %v6022 = vadd.f32 %v6003, %v6021
    %v6023 = vpop.f32.mrf.mxu0
    %v6024 = vadd.f32 %v6005, %v6023
    %6025 = vdwg.mxu0
    %6026 = vmatpush.bf16.msra.mxu0 %v5364
    %6027 = vmatpush.bf16.msra.mxu0 %v5357
    %6028 = vmatpush.bf16.msra.mxu0 %v5350
    %6029 = vmatpush.bf16.msra.mxu0 %v5343
    %6030 = vmatpush.bf16.msra.mxu0 %v5336
    %6031 = vmatpush.bf16.msra.mxu0 %v5329
    %6032 = vmatpush.bf16.msra.mxu0 %v5322
    %6033 = vmatpush.bf16.msra.mxu0 %v5315
    %6034 = vmatmul.bf16.gmra.mxu0 %v3088
    %v6035 = vpop.f32.mrf.mxu0
    %v6036 = vadd.f32 %v6017, %v6035
    %v6037 = vpop.f32.mrf.mxu0
    %v6038 = vadd.f32 %v6019, %v6037
    %6039 = vmatmul.bf16.gmra.mxu0 %v3096
    %v6040 = vpop.f32.mrf.mxu0
    %v6041 = vadd.f32 %v6022, %v6040
    %v6042 = vpop.f32.mrf.mxu0
    %v6043 = vadd.f32 %v6024, %v6042
    %6044 = vdwg.mxu0
    %6045 = vmatpush.bf16.msra.mxu0 %v5420
    %6046 = vmatpush.bf16.msra.mxu0 %v5413
    %6047 = vmatpush.bf16.msra.mxu0 %v5406
    %6048 = vmatpush.bf16.msra.mxu0 %v5399
    %6049 = vmatpush.bf16.msra.mxu0 %v5392
    %6050 = vmatpush.bf16.msra.mxu0 %v5385
    %6051 = vmatpush.bf16.msra.mxu0 %v5378
    %6052 = vmatpush.bf16.msra.mxu0 %v5371
    %6053 = vmatmul.bf16.gmra.mxu0 %v3089
    %v6054 = vpop.f32.mrf.mxu0
    %v6055 = vadd.f32 %v6036, %v6054
    %v6056 = vpop.f32.mrf.mxu0
    %v6057 = vadd.f32 %v6038, %v6056
    %6058 = vmatmul.bf16.gmra.mxu0 %v3097
    %v6059 = vpop.f32.mrf.mxu0
    %v6060 = vadd.f32 %v6041, %v6059
    %v6061 = vpop.f32.mrf.mxu0
    %v6062 = vadd.f32 %v6043, %v6061
    %6063 = vdwg.mxu0
    %6064 = vmatpush.bf16.msra.mxu0 %v5476
    %6065 = vmatpush.bf16.msra.mxu0 %v5469
    %6066 = vmatpush.bf16.msra.mxu0 %v5462
    %6067 = vmatpush.bf16.msra.mxu0 %v5455
    %6068 = vmatpush.bf16.msra.mxu0 %v5448
    %6069 = vmatpush.bf16.msra.mxu0 %v5441
    %6070 = vmatpush.bf16.msra.mxu0 %v5434
    %6071 = vmatpush.bf16.msra.mxu0 %v5427
    %6072 = vmatmul.bf16.gmra.mxu0 %v3090
    %v6073 = vpop.f32.mrf.mxu0
    %v6074 = vadd.f32 %v6055, %v6073
    %v6075 = vpop.f32.mrf.mxu0
    %v6076 = vadd.f32 %v6057, %v6075
    %6077 = vmatmul.bf16.gmra.mxu0 %v3098
    %v6078 = vpop.f32.mrf.mxu0
    %v6079 = vadd.f32 %v6060, %v6078
    %v6080 = vpop.f32.mrf.mxu0
    %v6081 = vadd.f32 %v6062, %v6080
    %6082 = vdwg.mxu0
    %6083 = vmatpush.bf16.msra.mxu0 %v5085
    %6084 = vmatpush.bf16.msra.mxu0 %v5078
    %6085 = vmatpush.bf16.msra.mxu0 %v5071
    %6086 = vmatpush.bf16.msra.mxu0 %v5064
    %6087 = vmatpush.bf16.msra.mxu0 %v5057
    %6088 = vmatpush.bf16.msra.mxu0 %v5050
    %6089 = vmatpush.bf16.msra.mxu0 %v5043
    %6090 = vmatpush.bf16.msra.mxu0 %v5036
    %6091 = vmatmul.bf16.gmra.mxu0 %v3083
    %v6092 = vpop.f32.mrf.mxu0
    %v6093 = vadd.f32 %v3614, %v6092
    %v6094 = vpop.f32.mrf.mxu0
    %v6095 = vadd.f32 %v3614, %v6094
    %6096 = vmatmul.bf16.gmra.mxu0 %v3091
    %v6097 = vpop.f32.mrf.mxu0
    %v6098 = vadd.f32 %v3614, %v6097
    %v6099 = vpop.f32.mrf.mxu0
    %v6100 = vadd.f32 %v3614, %v6099
    %6101 = vdwg.mxu0
    %6102 = vmatpush.bf16.msra.mxu0 %v5141
    %6103 = vmatpush.bf16.msra.mxu0 %v5134
    %6104 = vmatpush.bf16.msra.mxu0 %v5127
    %6105 = vmatpush.bf16.msra.mxu0 %v5120
    %6106 = vmatpush.bf16.msra.mxu0 %v5113
    %6107 = vmatpush.bf16.msra.mxu0 %v5106
    %6108 = vmatpush.bf16.msra.mxu0 %v5099
    %6109 = vmatpush.bf16.msra.mxu0 %v5092
    %6110 = vmatmul.bf16.gmra.mxu0 %v3084
    %v6111 = vpop.f32.mrf.mxu0
    %v6112 = vadd.f32 %v6093, %v6111
    %v6113 = vpop.f32.mrf.mxu0
    %v6114 = vadd.f32 %v6095, %v6113
    %6115 = vmatmul.bf16.gmra.mxu0 %v3092
    %v6116 = vpop.f32.mrf.mxu0
    %v6117 = vadd.f32 %v6098, %v6116
    %v6118 = vpop.f32.mrf.mxu0
    %v6119 = vadd.f32 %v6100, %v6118
    %6120 = vdwg.mxu0
    %6121 = vmatpush.bf16.msra.mxu0 %v5197
    %6122 = vmatpush.bf16.msra.mxu0 %v5190
    %6123 = vmatpush.bf16.msra.mxu0 %v5183
    %6124 = vmatpush.bf16.msra.mxu0 %v5176
    %6125 = vmatpush.bf16.msra.mxu0 %v5169
    %6126 = vmatpush.bf16.msra.mxu0 %v5162
    %6127 = vmatpush.bf16.msra.mxu0 %v5155
    %6128 = vmatpush.bf16.msra.mxu0 %v5148
    %6129 = vmatmul.bf16.gmra.mxu0 %v3085
    %v6130 = vpop.f32.mrf.mxu0
    %v6131 = vadd.f32 %v6112, %v6130
    %v6132 = vpop.f32.mrf.mxu0
    %v6133 = vadd.f32 %v6114, %v6132
    %6134 = vmatmul.bf16.gmra.mxu0 %v3093
    %v6135 = vpop.f32.mrf.mxu0
    %v6136 = vadd.f32 %v6117, %v6135
    %v6137 = vpop.f32.mrf.mxu0
    %v6138 = vadd.f32 %v6119, %v6137
    %6139 = vdwg.mxu0
    %6140 = vmatpush.bf16.msra.mxu0 %v5253
    %6141 = vmatpush.bf16.msra.mxu0 %v5246
    %6142 = vmatpush.bf16.msra.mxu0 %v5239
    %6143 = vmatpush.bf16.msra.mxu0 %v5232
    %6144 = vmatpush.bf16.msra.mxu0 %v5225
    %6145 = vmatpush.bf16.msra.mxu0 %v5218
    %6146 = vmatpush.bf16.msra.mxu0 %v5211
    %6147 = vmatpush.bf16.msra.mxu0 %v5204
    %6148 = vmatmul.bf16.gmra.mxu0 %v3086
    %v6149 = vpop.f32.mrf.mxu0
    %v6150 = vadd.f32 %v6131, %v6149
    %v6151 = vpop.f32.mrf.mxu0
    %v6152 = vadd.f32 %v6133, %v6151
    %6153 = vmatmul.bf16.gmra.mxu0 %v3094
    %v6154 = vpop.f32.mrf.mxu0
    %v6155 = vadd.f32 %v6136, %v6154
    %v6156 = vpop.f32.mrf.mxu0
    %v6157 = vadd.f32 %v6138, %v6156
    %6158 = vdwg.mxu0
    %6159 = vmatpush.bf16.msra.mxu0 %v5309
    %6160 = vmatpush.bf16.msra.mxu0 %v5302
    %6161 = vmatpush.bf16.msra.mxu0 %v5295
    %6162 = vmatpush.bf16.msra.mxu0 %v5288
    %6163 = vmatpush.bf16.msra.mxu0 %v5281
    %6164 = vmatpush.bf16.msra.mxu0 %v5274
    %6165 = vmatpush.bf16.msra.mxu0 %v5267
    %6166 = vmatpush.bf16.msra.mxu0 %v5260
    %6167 = vmatmul.bf16.gmra.mxu0 %v3087
    %v6168 = vpop.f32.mrf.mxu0
    %v6169 = vadd.f32 %v6150, %v6168
    %v6170 = vpop.f32.mrf.mxu0
    %v6171 = vadd.f32 %v6152, %v6170
    %6172 = vmatmul.bf16.gmra.mxu0 %v3095
    %v6173 = vpop.f32.mrf.mxu0
    %v6174 = vadd.f32 %v6155, %v6173
    %v6175 = vpop.f32.mrf.mxu0
    %v6176 = vadd.f32 %v6157, %v6175
    %6177 = vdwg.mxu0
    %6178 = vmatpush.bf16.msra.mxu0 %v5365
    %6179 = vmatpush.bf16.msra.mxu0 %v5358
    %6180 = vmatpush.bf16.msra.mxu0 %v5351
    %6181 = vmatpush.bf16.msra.mxu0 %v5344
    %6182 = vmatpush.bf16.msra.mxu0 %v5337
    %6183 = vmatpush.bf16.msra.mxu0 %v5330
    %6184 = vmatpush.bf16.msra.mxu0 %v5323
    %6185 = vmatpush.bf16.msra.mxu0 %v5316
    %6186 = vmatmul.bf16.gmra.mxu0 %v3088
    %v6187 = vpop.f32.mrf.mxu0
    %v6188 = vadd.f32 %v6169, %v6187
    %v6189 = vpop.f32.mrf.mxu0
    %v6190 = vadd.f32 %v6171, %v6189
    %6191 = vmatmul.bf16.gmra.mxu0 %v3096
    %v6192 = vpop.f32.mrf.mxu0
    %v6193 = vadd.f32 %v6174, %v6192
    %v6194 = vpop.f32.mrf.mxu0
    %v6195 = vadd.f32 %v6176, %v6194
    %6196 = vdwg.mxu0
    %6197 = vmatpush.bf16.msra.mxu0 %v5421
    %6198 = vmatpush.bf16.msra.mxu0 %v5414
    %6199 = vmatpush.bf16.msra.mxu0 %v5407
    %6200 = vmatpush.bf16.msra.mxu0 %v5400
    %6201 = vmatpush.bf16.msra.mxu0 %v5393
    %6202 = vmatpush.bf16.msra.mxu0 %v5386
    %6203 = vmatpush.bf16.msra.mxu0 %v5379
    %6204 = vmatpush.bf16.msra.mxu0 %v5372
    %6205 = vmatmul.bf16.gmra.mxu0 %v3089
    %v6206 = vpop.f32.mrf.mxu0
    %v6207 = vadd.f32 %v6188, %v6206
    %v6208 = vpop.f32.mrf.mxu0
    %v6209 = vadd.f32 %v6190, %v6208
    %6210 = vmatmul.bf16.gmra.mxu0 %v3097
    %v6211 = vpop.f32.mrf.mxu0
    %v6212 = vadd.f32 %v6193, %v6211
    %v6213 = vpop.f32.mrf.mxu0
    %v6214 = vadd.f32 %v6195, %v6213
    %6215 = vdwg.mxu0
    %6216 = vmatpush.bf16.msra.mxu0 %v5477
    %6217 = vmatpush.bf16.msra.mxu0 %v5470
    %6218 = vmatpush.bf16.msra.mxu0 %v5463
    %6219 = vmatpush.bf16.msra.mxu0 %v5456
    %6220 = vmatpush.bf16.msra.mxu0 %v5449
    %6221 = vmatpush.bf16.msra.mxu0 %v5442
    %6222 = vmatpush.bf16.msra.mxu0 %v5435
    %6223 = vmatpush.bf16.msra.mxu0 %v5428
    %6224 = vmatmul.bf16.gmra.mxu0 %v3090
    %v6225 = vpop.f32.mrf.mxu0
    %v6226 = vadd.f32 %v6207, %v6225
    %v6227 = vpop.f32.mrf.mxu0
    %v6228 = vadd.f32 %v6209, %v6227
    %6229 = vmatmul.bf16.gmra.mxu0 %v3098
    %v6230 = vpop.f32.mrf.mxu0
    %v6231 = vadd.f32 %v6212, %v6230
    %v6232 = vpop.f32.mrf.mxu0
    %v6233 = vadd.f32 %v6214, %v6232
    %6234 = vdwg.mxu0
    %6235 = vmatpush.bf16.msra.mxu0 %v5086
    %6236 = vmatpush.bf16.msra.mxu0 %v5079
    %6237 = vmatpush.bf16.msra.mxu0 %v5072
    %6238 = vmatpush.bf16.msra.mxu0 %v5065
    %6239 = vmatpush.bf16.msra.mxu0 %v5058
    %6240 = vmatpush.bf16.msra.mxu0 %v5051
    %6241 = vmatpush.bf16.msra.mxu0 %v5044
    %6242 = vmatpush.bf16.msra.mxu0 %v5037
    %6243 = vmatmul.bf16.gmra.mxu0 %v3083
    %v6244 = vpop.f32.mrf.mxu0
    %v6245 = vadd.f32 %v3615, %v6244
    %v6246 = vpop.f32.mrf.mxu0
    %v6247 = vadd.f32 %v3615, %v6246
    %6248 = vmatmul.bf16.gmra.mxu0 %v3091
    %v6249 = vpop.f32.mrf.mxu0
    %v6250 = vadd.f32 %v3615, %v6249
    %v6251 = vpop.f32.mrf.mxu0
    %v6252 = vadd.f32 %v3615, %v6251
    %6253 = vdwg.mxu0
    %6254 = vmatpush.bf16.msra.mxu0 %v5142
    %6255 = vmatpush.bf16.msra.mxu0 %v5135
    %6256 = vmatpush.bf16.msra.mxu0 %v5128
    %6257 = vmatpush.bf16.msra.mxu0 %v5121
    %6258 = vmatpush.bf16.msra.mxu0 %v5114
    %6259 = vmatpush.bf16.msra.mxu0 %v5107
    %6260 = vmatpush.bf16.msra.mxu0 %v5100
    %6261 = vmatpush.bf16.msra.mxu0 %v5093
    %6262 = vmatmul.bf16.gmra.mxu0 %v3084
    %v6263 = vpop.f32.mrf.mxu0
    %v6264 = vadd.f32 %v6245, %v6263
    %v6265 = vpop.f32.mrf.mxu0
    %v6266 = vadd.f32 %v6247, %v6265
    %6267 = vmatmul.bf16.gmra.mxu0 %v3092
    %v6268 = vpop.f32.mrf.mxu0
    %v6269 = vadd.f32 %v6250, %v6268
    %v6270 = vpop.f32.mrf.mxu0
    %v6271 = vadd.f32 %v6252, %v6270
    %6272 = vdwg.mxu0
    %6273 = vmatpush.bf16.msra.mxu0 %v5198
    %6274 = vmatpush.bf16.msra.mxu0 %v5191
    %6275 = vmatpush.bf16.msra.mxu0 %v5184
    %6276 = vmatpush.bf16.msra.mxu0 %v5177
    %6277 = vmatpush.bf16.msra.mxu0 %v5170
    %6278 = vmatpush.bf16.msra.mxu0 %v5163
    %6279 = vmatpush.bf16.msra.mxu0 %v5156
    %6280 = vmatpush.bf16.msra.mxu0 %v5149
    %6281 = vmatmul.bf16.gmra.mxu0 %v3085
    %v6282 = vpop.f32.mrf.mxu0
    %v6283 = vadd.f32 %v6264, %v6282
    %v6284 = vpop.f32.mrf.mxu0
    %v6285 = vadd.f32 %v6266, %v6284
    %6286 = vmatmul.bf16.gmra.mxu0 %v3093
    %v6287 = vpop.f32.mrf.mxu0
    %v6288 = vadd.f32 %v6269, %v6287
    %v6289 = vpop.f32.mrf.mxu0
    %v6290 = vadd.f32 %v6271, %v6289
    %6291 = vdwg.mxu0
    %6292 = vmatpush.bf16.msra.mxu0 %v5254
    %6293 = vmatpush.bf16.msra.mxu0 %v5247
    %6294 = vmatpush.bf16.msra.mxu0 %v5240
    %6295 = vmatpush.bf16.msra.mxu0 %v5233
    %6296 = vmatpush.bf16.msra.mxu0 %v5226
    %6297 = vmatpush.bf16.msra.mxu0 %v5219
    %6298 = vmatpush.bf16.msra.mxu0 %v5212
    %6299 = vmatpush.bf16.msra.mxu0 %v5205
    %6300 = vmatmul.bf16.gmra.mxu0 %v3086
    %v6301 = vpop.f32.mrf.mxu0
    %v6302 = vadd.f32 %v6283, %v6301
    %v6303 = vpop.f32.mrf.mxu0
    %v6304 = vadd.f32 %v6285, %v6303
    %6305 = vmatmul.bf16.gmra.mxu0 %v3094
    %v6306 = vpop.f32.mrf.mxu0
    %v6307 = vadd.f32 %v6288, %v6306
    %v6308 = vpop.f32.mrf.mxu0
    %v6309 = vadd.f32 %v6290, %v6308
    %6310 = vdwg.mxu0
    %6311 = vmatpush.bf16.msra.mxu0 %v5310
    %6312 = vmatpush.bf16.msra.mxu0 %v5303
    %6313 = vmatpush.bf16.msra.mxu0 %v5296
    %6314 = vmatpush.bf16.msra.mxu0 %v5289
    %6315 = vmatpush.bf16.msra.mxu0 %v5282
    %6316 = vmatpush.bf16.msra.mxu0 %v5275
    %6317 = vmatpush.bf16.msra.mxu0 %v5268
    %6318 = vmatpush.bf16.msra.mxu0 %v5261
    %6319 = vmatmul.bf16.gmra.mxu0 %v3087
    %v6320 = vpop.f32.mrf.mxu0
    %v6321 = vadd.f32 %v6302, %v6320
    %v6322 = vpop.f32.mrf.mxu0
    %v6323 = vadd.f32 %v6304, %v6322
    %6324 = vmatmul.bf16.gmra.mxu0 %v3095
    %v6325 = vpop.f32.mrf.mxu0
    %v6326 = vadd.f32 %v6307, %v6325
    %v6327 = vpop.f32.mrf.mxu0
    %v6328 = vadd.f32 %v6309, %v6327
    %6329 = vdwg.mxu0
    %6330 = vmatpush.bf16.msra.mxu0 %v5366
    %6331 = vmatpush.bf16.msra.mxu0 %v5359
    %6332 = vmatpush.bf16.msra.mxu0 %v5352
    %6333 = vmatpush.bf16.msra.mxu0 %v5345
    %6334 = vmatpush.bf16.msra.mxu0 %v5338
    %6335 = vmatpush.bf16.msra.mxu0 %v5331
    %6336 = vmatpush.bf16.msra.mxu0 %v5324
    %6337 = vmatpush.bf16.msra.mxu0 %v5317
    %6338 = vmatmul.bf16.gmra.mxu0 %v3088
    %v6339 = vpop.f32.mrf.mxu0
    %v6340 = vadd.f32 %v6321, %v6339
    %v6341 = vpop.f32.mrf.mxu0
    %v6342 = vadd.f32 %v6323, %v6341
    %6343 = vmatmul.bf16.gmra.mxu0 %v3096
    %v6344 = vpop.f32.mrf.mxu0
    %v6345 = vadd.f32 %v6326, %v6344
    %v6346 = vpop.f32.mrf.mxu0
    %v6347 = vadd.f32 %v6328, %v6346
    %6348 = vdwg.mxu0
    %6349 = vmatpush.bf16.msra.mxu0 %v5422
    %6350 = vmatpush.bf16.msra.mxu0 %v5415
    %6351 = vmatpush.bf16.msra.mxu0 %v5408
    %6352 = vmatpush.bf16.msra.mxu0 %v5401
    %6353 = vmatpush.bf16.msra.mxu0 %v5394
    %6354 = vmatpush.bf16.msra.mxu0 %v5387
    %6355 = vmatpush.bf16.msra.mxu0 %v5380
    %6356 = vmatpush.bf16.msra.mxu0 %v5373
    %6357 = vmatmul.bf16.gmra.mxu0 %v3089
    %v6358 = vpop.f32.mrf.mxu0
    %v6359 = vadd.f32 %v6340, %v6358
    %v6360 = vpop.f32.mrf.mxu0
    %v6361 = vadd.f32 %v6342, %v6360
    %6362 = vmatmul.bf16.gmra.mxu0 %v3097
    %v6363 = vpop.f32.mrf.mxu0
    %v6364 = vadd.f32 %v6345, %v6363
    %v6365 = vpop.f32.mrf.mxu0
    %v6366 = vadd.f32 %v6347, %v6365
    %6367 = vdwg.mxu0
    %6368 = vmatpush.bf16.msra.mxu0 %v5478
    %6369 = vmatpush.bf16.msra.mxu0 %v5471
    %6370 = vmatpush.bf16.msra.mxu0 %v5464
    %6371 = vmatpush.bf16.msra.mxu0 %v5457
    %6372 = vmatpush.bf16.msra.mxu0 %v5450
    %6373 = vmatpush.bf16.msra.mxu0 %v5443
    %6374 = vmatpush.bf16.msra.mxu0 %v5436
    %6375 = vmatpush.bf16.msra.mxu0 %v5429
    %6376 = vmatmul.bf16.gmra.mxu0 %v3090
    %v6377 = vpop.f32.mrf.mxu0
    %v6378 = vadd.f32 %v6359, %v6377
    %v6379 = vpop.f32.mrf.mxu0
    %v6380 = vadd.f32 %v6361, %v6379
    %6381 = vmatmul.bf16.gmra.mxu0 %v3098
    %v6382 = vpop.f32.mrf.mxu0
    %v6383 = vadd.f32 %v6364, %v6382
    %v6384 = vpop.f32.mrf.mxu0
    %v6385 = vadd.f32 %v6366, %v6384
    %6386 = vdwg.mxu0
    %6387 = vmatpush.bf16.msra.mxu0 %v5087
    %6388 = vmatpush.bf16.msra.mxu0 %v5080
    %6389 = vmatpush.bf16.msra.mxu0 %v5073
    %6390 = vmatpush.bf16.msra.mxu0 %v5066
    %6391 = vmatpush.bf16.msra.mxu0 %v5059
    %6392 = vmatpush.bf16.msra.mxu0 %v5052
    %6393 = vmatpush.bf16.msra.mxu0 %v5045
    %6394 = vmatpush.bf16.msra.mxu0 %v5038
    %6395 = vmatmul.bf16.gmra.mxu0 %v3083
    %v6396 = vpop.f32.mrf.mxu0
    %v6397 = vadd.f32 %v3616, %v6396
    %v6398 = vpop.f32.mrf.mxu0
    %v6399 = vadd.f32 %v3616, %v6398
    %6400 = vmatmul.bf16.gmra.mxu0 %v3091
    %v6401 = vpop.f32.mrf.mxu0
    %v6402 = vadd.f32 %v3616, %v6401
    %v6403 = vpop.f32.mrf.mxu0
    %v6404 = vadd.f32 %v3616, %v6403
    %6405 = vdwg.mxu0
    %6406 = vmatpush.bf16.msra.mxu0 %v5143
    %6407 = vmatpush.bf16.msra.mxu0 %v5136
    %6408 = vmatpush.bf16.msra.mxu0 %v5129
    %6409 = vmatpush.bf16.msra.mxu0 %v5122
    %6410 = vmatpush.bf16.msra.mxu0 %v5115
    %6411 = vmatpush.bf16.msra.mxu0 %v5108
    %6412 = vmatpush.bf16.msra.mxu0 %v5101
    %6413 = vmatpush.bf16.msra.mxu0 %v5094
    %6414 = vmatmul.bf16.gmra.mxu0 %v3084
    %v6415 = vpop.f32.mrf.mxu0
    %v6416 = vadd.f32 %v6397, %v6415
    %v6417 = vpop.f32.mrf.mxu0
    %v6418 = vadd.f32 %v6399, %v6417
    %6419 = vmatmul.bf16.gmra.mxu0 %v3092
    %v6420 = vpop.f32.mrf.mxu0
    %v6421 = vadd.f32 %v6402, %v6420
    %v6422 = vpop.f32.mrf.mxu0
    %v6423 = vadd.f32 %v6404, %v6422
    %6424 = vdwg.mxu0
    %6425 = vmatpush.bf16.msra.mxu0 %v5199
    %6426 = vmatpush.bf16.msra.mxu0 %v5192
    %6427 = vmatpush.bf16.msra.mxu0 %v5185
    %6428 = vmatpush.bf16.msra.mxu0 %v5178
    %6429 = vmatpush.bf16.msra.mxu0 %v5171
    %6430 = vmatpush.bf16.msra.mxu0 %v5164
    %6431 = vmatpush.bf16.msra.mxu0 %v5157
    %6432 = vmatpush.bf16.msra.mxu0 %v5150
    %6433 = vmatmul.bf16.gmra.mxu0 %v3085
    %v6434 = vpop.f32.mrf.mxu0
    %v6435 = vadd.f32 %v6416, %v6434
    %v6436 = vpop.f32.mrf.mxu0
    %v6437 = vadd.f32 %v6418, %v6436
    %6438 = vmatmul.bf16.gmra.mxu0 %v3093
    %v6439 = vpop.f32.mrf.mxu0
    %v6440 = vadd.f32 %v6421, %v6439
    %v6441 = vpop.f32.mrf.mxu0
    %v6442 = vadd.f32 %v6423, %v6441
    %6443 = vdwg.mxu0
    %6444 = vmatpush.bf16.msra.mxu0 %v5255
    %6445 = vmatpush.bf16.msra.mxu0 %v5248
    %6446 = vmatpush.bf16.msra.mxu0 %v5241
    %6447 = vmatpush.bf16.msra.mxu0 %v5234
    %6448 = vmatpush.bf16.msra.mxu0 %v5227
    %6449 = vmatpush.bf16.msra.mxu0 %v5220
    %6450 = vmatpush.bf16.msra.mxu0 %v5213
    %6451 = vmatpush.bf16.msra.mxu0 %v5206
    %6452 = vmatmul.bf16.gmra.mxu0 %v3086
    %v6453 = vpop.f32.mrf.mxu0
    %v6454 = vadd.f32 %v6435, %v6453
    %v6455 = vpop.f32.mrf.mxu0
    %v6456 = vadd.f32 %v6437, %v6455
    %6457 = vmatmul.bf16.gmra.mxu0 %v3094
    %v6458 = vpop.f32.mrf.mxu0
    %v6459 = vadd.f32 %v6440, %v6458
    %v6460 = vpop.f32.mrf.mxu0
    %v6461 = vadd.f32 %v6442, %v6460
    %6462 = vdwg.mxu0
    %6463 = vmatpush.bf16.msra.mxu0 %v5311
    %6464 = vmatpush.bf16.msra.mxu0 %v5304
    %6465 = vmatpush.bf16.msra.mxu0 %v5297
    %6466 = vmatpush.bf16.msra.mxu0 %v5290
    %6467 = vmatpush.bf16.msra.mxu0 %v5283
    %6468 = vmatpush.bf16.msra.mxu0 %v5276
    %6469 = vmatpush.bf16.msra.mxu0 %v5269
    %6470 = vmatpush.bf16.msra.mxu0 %v5262
    %6471 = vmatmul.bf16.gmra.mxu0 %v3087
    %v6472 = vpop.f32.mrf.mxu0
    %v6473 = vadd.f32 %v6454, %v6472
    %v6474 = vpop.f32.mrf.mxu0
    %v6475 = vadd.f32 %v6456, %v6474
    %6476 = vmatmul.bf16.gmra.mxu0 %v3095
    %v6477 = vpop.f32.mrf.mxu0
    %v6478 = vadd.f32 %v6459, %v6477
    %v6479 = vpop.f32.mrf.mxu0
    %v6480 = vadd.f32 %v6461, %v6479
    %6481 = vdwg.mxu0
    %6482 = vmatpush.bf16.msra.mxu0 %v5367
    %6483 = vmatpush.bf16.msra.mxu0 %v5360
    %6484 = vmatpush.bf16.msra.mxu0 %v5353
    %6485 = vmatpush.bf16.msra.mxu0 %v5346
    %6486 = vmatpush.bf16.msra.mxu0 %v5339
    %6487 = vmatpush.bf16.msra.mxu0 %v5332
    %6488 = vmatpush.bf16.msra.mxu0 %v5325
    %6489 = vmatpush.bf16.msra.mxu0 %v5318
    %6490 = vmatmul.bf16.gmra.mxu0 %v3088
    %v6491 = vpop.f32.mrf.mxu0
    %v6492 = vadd.f32 %v6473, %v6491
    %v6493 = vpop.f32.mrf.mxu0
    %v6494 = vadd.f32 %v6475, %v6493
    %6495 = vmatmul.bf16.gmra.mxu0 %v3096
    %v6496 = vpop.f32.mrf.mxu0
    %v6497 = vadd.f32 %v6478, %v6496
    %v6498 = vpop.f32.mrf.mxu0
    %v6499 = vadd.f32 %v6480, %v6498
    %6500 = vdwg.mxu0
    %6501 = vmatpush.bf16.msra.mxu0 %v5423
    %6502 = vmatpush.bf16.msra.mxu0 %v5416
    %6503 = vmatpush.bf16.msra.mxu0 %v5409
    %6504 = vmatpush.bf16.msra.mxu0 %v5402
    %6505 = vmatpush.bf16.msra.mxu0 %v5395
    %6506 = vmatpush.bf16.msra.mxu0 %v5388
    %6507 = vmatpush.bf16.msra.mxu0 %v5381
    %6508 = vmatpush.bf16.msra.mxu0 %v5374
    %6509 = vmatmul.bf16.gmra.mxu0 %v3089
    %v6510 = vpop.f32.mrf.mxu0
    %v6511 = vadd.f32 %v6492, %v6510
    %v6512 = vpop.f32.mrf.mxu0
    %v6513 = vadd.f32 %v6494, %v6512
    %6514 = vmatmul.bf16.gmra.mxu0 %v3097
    %v6515 = vpop.f32.mrf.mxu0
    %v6516 = vadd.f32 %v6497, %v6515
    %v6517 = vpop.f32.mrf.mxu0
    %v6518 = vadd.f32 %v6499, %v6517
    %6519 = vdwg.mxu0
    %6520 = vmatpush.bf16.msra.mxu0 %v5479
    %6521 = vmatpush.bf16.msra.mxu0 %v5472
    %6522 = vmatpush.bf16.msra.mxu0 %v5465
    %6523 = vmatpush.bf16.msra.mxu0 %v5458
    %6524 = vmatpush.bf16.msra.mxu0 %v5451
    %6525 = vmatpush.bf16.msra.mxu0 %v5444
    %6526 = vmatpush.bf16.msra.mxu0 %v5437
    %6527 = vmatpush.bf16.msra.mxu0 %v5430
    %6528 = vmatmul.bf16.gmra.mxu0 %v3090
    %v6529 = vpop.f32.mrf.mxu0
    %v6530 = vadd.f32 %v6511, %v6529
    %v6531 = vpop.f32.mrf.mxu0
    %v6532 = vadd.f32 %v6513, %v6531
    %6533 = vmatmul.bf16.gmra.mxu0 %v3098
    %v6534 = vpop.f32.mrf.mxu0
    %v6535 = vadd.f32 %v6516, %v6534
    %v6536 = vpop.f32.mrf.mxu0
    %v6537 = vadd.f32 %v6518, %v6536
    %6538 = vdwg.mxu0
    %6539 = vmatpush.bf16.msra.mxu0 %v5088
    %6540 = vmatpush.bf16.msra.mxu0 %v5081
    %6541 = vmatpush.bf16.msra.mxu0 %v5074
    %6542 = vmatpush.bf16.msra.mxu0 %v5067
    %6543 = vmatpush.bf16.msra.mxu0 %v5060
    %6544 = vmatpush.bf16.msra.mxu0 %v5053
    %6545 = vmatpush.bf16.msra.mxu0 %v5046
    %6546 = vmatpush.bf16.msra.mxu0 %v5039
    %6547 = vmatmul.bf16.gmra.mxu0 %v3083
    %v6548 = vpop.f32.mrf.mxu0
    %v6549 = vadd.f32 %v3617, %v6548
    %v6550 = vpop.f32.mrf.mxu0
    %v6551 = vadd.f32 %v3617, %v6550
    %6552 = vmatmul.bf16.gmra.mxu0 %v3091
    %v6553 = vpop.f32.mrf.mxu0
    %v6554 = vadd.f32 %v3617, %v6553
    %v6555 = vpop.f32.mrf.mxu0
    %v6556 = vadd.f32 %v3617, %v6555
    %6557 = vdwg.mxu0
    %6558 = vmatpush.bf16.msra.mxu0 %v5144
    %6559 = vmatpush.bf16.msra.mxu0 %v5137
    %6560 = vmatpush.bf16.msra.mxu0 %v5130
    %6561 = vmatpush.bf16.msra.mxu0 %v5123
    %6562 = vmatpush.bf16.msra.mxu0 %v5116
    %6563 = vmatpush.bf16.msra.mxu0 %v5109
    %6564 = vmatpush.bf16.msra.mxu0 %v5102
    %6565 = vmatpush.bf16.msra.mxu0 %v5095
    %6566 = vmatmul.bf16.gmra.mxu0 %v3084
    %v6567 = vpop.f32.mrf.mxu0
    %v6568 = vadd.f32 %v6549, %v6567
    %v6569 = vpop.f32.mrf.mxu0
    %v6570 = vadd.f32 %v6551, %v6569
    %6571 = vmatmul.bf16.gmra.mxu0 %v3092
    %v6572 = vpop.f32.mrf.mxu0
    %v6573 = vadd.f32 %v6554, %v6572
    %v6574 = vpop.f32.mrf.mxu0
    %v6575 = vadd.f32 %v6556, %v6574
    %6576 = vdwg.mxu0
    %6577 = vmatpush.bf16.msra.mxu0 %v5200
    %6578 = vmatpush.bf16.msra.mxu0 %v5193
    %6579 = vmatpush.bf16.msra.mxu0 %v5186
    %6580 = vmatpush.bf16.msra.mxu0 %v5179
    %6581 = vmatpush.bf16.msra.mxu0 %v5172
    %6582 = vmatpush.bf16.msra.mxu0 %v5165
    %6583 = vmatpush.bf16.msra.mxu0 %v5158
    %6584 = vmatpush.bf16.msra.mxu0 %v5151
    %6585 = vmatmul.bf16.gmra.mxu0 %v3085
    %v6586 = vpop.f32.mrf.mxu0
    %v6587 = vadd.f32 %v6568, %v6586
    %v6588 = vpop.f32.mrf.mxu0
    %v6589 = vadd.f32 %v6570, %v6588
    %6590 = vmatmul.bf16.gmra.mxu0 %v3093
    %v6591 = vpop.f32.mrf.mxu0
    %v6592 = vadd.f32 %v6573, %v6591
    %v6593 = vpop.f32.mrf.mxu0
    %v6594 = vadd.f32 %v6575, %v6593
    %6595 = vdwg.mxu0
    %6596 = vmatpush.bf16.msra.mxu0 %v5256
    %6597 = vmatpush.bf16.msra.mxu0 %v5249
    %6598 = vmatpush.bf16.msra.mxu0 %v5242
    %6599 = vmatpush.bf16.msra.mxu0 %v5235
    %6600 = vmatpush.bf16.msra.mxu0 %v5228
    %6601 = vmatpush.bf16.msra.mxu0 %v5221
    %6602 = vmatpush.bf16.msra.mxu0 %v5214
    %6603 = vmatpush.bf16.msra.mxu0 %v5207
    %6604 = vmatmul.bf16.gmra.mxu0 %v3086
    %v6605 = vpop.f32.mrf.mxu0
    %v6606 = vadd.f32 %v6587, %v6605
    %v6607 = vpop.f32.mrf.mxu0
    %v6608 = vadd.f32 %v6589, %v6607
    %6609 = vmatmul.bf16.gmra.mxu0 %v3094
    %v6610 = vpop.f32.mrf.mxu0
    %v6611 = vadd.f32 %v6592, %v6610
    %v6612 = vpop.f32.mrf.mxu0
    %v6613 = vadd.f32 %v6594, %v6612
    %6614 = vdwg.mxu0
    %6615 = vmatpush.bf16.msra.mxu0 %v5312
    %6616 = vmatpush.bf16.msra.mxu0 %v5305
    %6617 = vmatpush.bf16.msra.mxu0 %v5298
    %6618 = vmatpush.bf16.msra.mxu0 %v5291
    %6619 = vmatpush.bf16.msra.mxu0 %v5284
    %6620 = vmatpush.bf16.msra.mxu0 %v5277
    %6621 = vmatpush.bf16.msra.mxu0 %v5270
    %6622 = vmatpush.bf16.msra.mxu0 %v5263
    %6623 = vmatmul.bf16.gmra.mxu0 %v3087
    %v6624 = vpop.f32.mrf.mxu0
    %v6625 = vadd.f32 %v6606, %v6624
    %v6626 = vpop.f32.mrf.mxu0
    %v6627 = vadd.f32 %v6608, %v6626
    %6628 = vmatmul.bf16.gmra.mxu0 %v3095
    %v6629 = vpop.f32.mrf.mxu0
    %v6630 = vadd.f32 %v6611, %v6629
    %v6631 = vpop.f32.mrf.mxu0
    %v6632 = vadd.f32 %v6613, %v6631
    %6633 = vdwg.mxu0
    %6634 = vmatpush.bf16.msra.mxu0 %v5368
    %6635 = vmatpush.bf16.msra.mxu0 %v5361
    %6636 = vmatpush.bf16.msra.mxu0 %v5354
    %6637 = vmatpush.bf16.msra.mxu0 %v5347
    %6638 = vmatpush.bf16.msra.mxu0 %v5340
    %6639 = vmatpush.bf16.msra.mxu0 %v5333
    %6640 = vmatpush.bf16.msra.mxu0 %v5326
    %6641 = vmatpush.bf16.msra.mxu0 %v5319
    %6642 = vmatmul.bf16.gmra.mxu0 %v3088
    %v6643 = vpop.f32.mrf.mxu0
    %v6644 = vadd.f32 %v6625, %v6643
    %v6645 = vpop.f32.mrf.mxu0
    %v6646 = vadd.f32 %v6627, %v6645
    %6647 = vmatmul.bf16.gmra.mxu0 %v3096
    %v6648 = vpop.f32.mrf.mxu0
    %v6649 = vadd.f32 %v6630, %v6648
    %v6650 = vpop.f32.mrf.mxu0
    %v6651 = vadd.f32 %v6632, %v6650
    %6652 = vdwg.mxu0
    %6653 = vmatpush.bf16.msra.mxu0 %v5424
    %6654 = vmatpush.bf16.msra.mxu0 %v5417
    %6655 = vmatpush.bf16.msra.mxu0 %v5410
    %6656 = vmatpush.bf16.msra.mxu0 %v5403
    %6657 = vmatpush.bf16.msra.mxu0 %v5396
    %6658 = vmatpush.bf16.msra.mxu0 %v5389
    %6659 = vmatpush.bf16.msra.mxu0 %v5382
    %6660 = vmatpush.bf16.msra.mxu0 %v5375
    %6661 = vmatmul.bf16.gmra.mxu0 %v3089
    %v6662 = vpop.f32.mrf.mxu0
    %v6663 = vadd.f32 %v6644, %v6662
    %v6664 = vpop.f32.mrf.mxu0
    %v6665 = vadd.f32 %v6646, %v6664
    %6666 = vmatmul.bf16.gmra.mxu0 %v3097
    %v6667 = vpop.f32.mrf.mxu0
    %v6668 = vadd.f32 %v6649, %v6667
    %v6669 = vpop.f32.mrf.mxu0
    %v6670 = vadd.f32 %v6651, %v6669
    %6671 = vdwg.mxu0
    %6672 = vmatpush.bf16.msra.mxu0 %v5480
    %6673 = vmatpush.bf16.msra.mxu0 %v5473
    %6674 = vmatpush.bf16.msra.mxu0 %v5466
    %6675 = vmatpush.bf16.msra.mxu0 %v5459
    %6676 = vmatpush.bf16.msra.mxu0 %v5452
    %6677 = vmatpush.bf16.msra.mxu0 %v5445
    %6678 = vmatpush.bf16.msra.mxu0 %v5438
    %6679 = vmatpush.bf16.msra.mxu0 %v5431
    %6680 = vmatmul.bf16.gmra.mxu0 %v3090
    %v6681 = vpop.f32.mrf.mxu0
    %v6682 = vadd.f32 %v6663, %v6681
    %v6683 = vpop.f32.mrf.mxu0
    %v6684 = vadd.f32 %v6665, %v6683
    %6685 = vmatmul.bf16.gmra.mxu0 %v3098
    %v6686 = vpop.f32.mrf.mxu0
    %v6687 = vadd.f32 %v6668, %v6686
    %v6688 = vpop.f32.mrf.mxu0
    %v6689 = vadd.f32 %v6670, %v6688
    %6690 = vdwg.mxu0
    %6691 = vmatpush.bf16.msra.mxu0 %v5089
    %6692 = vmatpush.bf16.msra.mxu0 %v5082
    %6693 = vmatpush.bf16.msra.mxu0 %v5075
    %6694 = vmatpush.bf16.msra.mxu0 %v5068
    %6695 = vmatpush.bf16.msra.mxu0 %v5061
    %6696 = vmatpush.bf16.msra.mxu0 %v5054
    %6697 = vmatpush.bf16.msra.mxu0 %v5047
    %6698 = vmatpush.bf16.msra.mxu0 %v5040
    %6699 = vmatmul.bf16.gmra.mxu0 %v3083
    %v6700 = vpop.f32.mrf.mxu0
    %v6701 = vadd.f32 %v3618, %v6700
    %v6702 = vpop.f32.mrf.mxu0
    %v6703 = vadd.f32 %v3618, %v6702
    %6704 = vmatmul.bf16.gmra.mxu0 %v3091
    %v6705 = vpop.f32.mrf.mxu0
    %v6706 = vadd.f32 %v3618, %v6705
    %v6707 = vpop.f32.mrf.mxu0
    %v6708 = vadd.f32 %v3618, %v6707
    %6709 = vdwg.mxu0
    %6710 = vmatpush.bf16.msra.mxu0 %v5145
    %6711 = vmatpush.bf16.msra.mxu0 %v5138
    %6712 = vmatpush.bf16.msra.mxu0 %v5131
    %6713 = vmatpush.bf16.msra.mxu0 %v5124
    %6714 = vmatpush.bf16.msra.mxu0 %v5117
    %6715 = vmatpush.bf16.msra.mxu0 %v5110
    %6716 = vmatpush.bf16.msra.mxu0 %v5103
    %6717 = vmatpush.bf16.msra.mxu0 %v5096
    %6718 = vmatmul.bf16.gmra.mxu0 %v3084
    %v6719 = vpop.f32.mrf.mxu0
    %v6720 = vadd.f32 %v6701, %v6719
    %v6721 = vpop.f32.mrf.mxu0
    %v6722 = vadd.f32 %v6703, %v6721
    %6723 = vmatmul.bf16.gmra.mxu0 %v3092
    %v6724 = vpop.f32.mrf.mxu0
    %v6725 = vadd.f32 %v6706, %v6724
    %v6726 = vpop.f32.mrf.mxu0
    %v6727 = vadd.f32 %v6708, %v6726
    %6728 = vdwg.mxu0
    %6729 = vmatpush.bf16.msra.mxu0 %v5201
    %6730 = vmatpush.bf16.msra.mxu0 %v5194
    %6731 = vmatpush.bf16.msra.mxu0 %v5187
    %6732 = vmatpush.bf16.msra.mxu0 %v5180
    %6733 = vmatpush.bf16.msra.mxu0 %v5173
    %6734 = vmatpush.bf16.msra.mxu0 %v5166
    %6735 = vmatpush.bf16.msra.mxu0 %v5159
    %6736 = vmatpush.bf16.msra.mxu0 %v5152
    %6737 = vmatmul.bf16.gmra.mxu0 %v3085
    %v6738 = vpop.f32.mrf.mxu0
    %v6739 = vadd.f32 %v6720, %v6738
    %v6740 = vpop.f32.mrf.mxu0
    %v6741 = vadd.f32 %v6722, %v6740
    %6742 = vmatmul.bf16.gmra.mxu0 %v3093
    %v6743 = vpop.f32.mrf.mxu0
    %v6744 = vadd.f32 %v6725, %v6743
    %v6745 = vpop.f32.mrf.mxu0
    %v6746 = vadd.f32 %v6727, %v6745
    %6747 = vdwg.mxu0
    %6748 = vmatpush.bf16.msra.mxu0 %v5257
    %6749 = vmatpush.bf16.msra.mxu0 %v5250
    %6750 = vmatpush.bf16.msra.mxu0 %v5243
    %6751 = vmatpush.bf16.msra.mxu0 %v5236
    %6752 = vmatpush.bf16.msra.mxu0 %v5229
    %6753 = vmatpush.bf16.msra.mxu0 %v5222
    %6754 = vmatpush.bf16.msra.mxu0 %v5215
    %6755 = vmatpush.bf16.msra.mxu0 %v5208
    %6756 = vmatmul.bf16.gmra.mxu0 %v3086
    %v6757 = vpop.f32.mrf.mxu0
    %v6758 = vadd.f32 %v6739, %v6757
    %v6759 = vpop.f32.mrf.mxu0
    %v6760 = vadd.f32 %v6741, %v6759
    %6761 = vmatmul.bf16.gmra.mxu0 %v3094
    %v6762 = vpop.f32.mrf.mxu0
    %v6763 = vadd.f32 %v6744, %v6762
    %v6764 = vpop.f32.mrf.mxu0
    %v6765 = vadd.f32 %v6746, %v6764
    %6766 = vdwg.mxu0
    %6767 = vmatpush.bf16.msra.mxu0 %v5313
    %6768 = vmatpush.bf16.msra.mxu0 %v5306
    %6769 = vmatpush.bf16.msra.mxu0 %v5299
    %6770 = vmatpush.bf16.msra.mxu0 %v5292
    %6771 = vmatpush.bf16.msra.mxu0 %v5285
    %6772 = vmatpush.bf16.msra.mxu0 %v5278
    %6773 = vmatpush.bf16.msra.mxu0 %v5271
    %6774 = vmatpush.bf16.msra.mxu0 %v5264
    %6775 = vmatmul.bf16.gmra.mxu0 %v3087
    %v6776 = vpop.f32.mrf.mxu0
    %v6777 = vadd.f32 %v6758, %v6776
    %v6778 = vpop.f32.mrf.mxu0
    %v6779 = vadd.f32 %v6760, %v6778
    %6780 = vmatmul.bf16.gmra.mxu0 %v3095
    %v6781 = vpop.f32.mrf.mxu0
    %v6782 = vadd.f32 %v6763, %v6781
    %v6783 = vpop.f32.mrf.mxu0
    %v6784 = vadd.f32 %v6765, %v6783
    %6785 = vdwg.mxu0
    %6786 = vmatpush.bf16.msra.mxu0 %v5369
    %6787 = vmatpush.bf16.msra.mxu0 %v5362
    %6788 = vmatpush.bf16.msra.mxu0 %v5355
    %6789 = vmatpush.bf16.msra.mxu0 %v5348
    %6790 = vmatpush.bf16.msra.mxu0 %v5341
    %6791 = vmatpush.bf16.msra.mxu0 %v5334
    %6792 = vmatpush.bf16.msra.mxu0 %v5327
    %6793 = vmatpush.bf16.msra.mxu0 %v5320
    %6794 = vmatmul.bf16.gmra.mxu0 %v3088
    %v6795 = vpop.f32.mrf.mxu0
    %v6796 = vadd.f32 %v6777, %v6795
    %v6797 = vpop.f32.mrf.mxu0
    %v6798 = vadd.f32 %v6779, %v6797
    %6799 = vmatmul.bf16.gmra.mxu0 %v3096
    %v6800 = vpop.f32.mrf.mxu0
    %v6801 = vadd.f32 %v6782, %v6800
    %v6802 = vpop.f32.mrf.mxu0
    %v6803 = vadd.f32 %v6784, %v6802
    %6804 = vdwg.mxu0
    %6805 = vmatpush.bf16.msra.mxu0 %v5425
    %6806 = vmatpush.bf16.msra.mxu0 %v5418
    %6807 = vmatpush.bf16.msra.mxu0 %v5411
    %6808 = vmatpush.bf16.msra.mxu0 %v5404
    %6809 = vmatpush.bf16.msra.mxu0 %v5397
    %6810 = vmatpush.bf16.msra.mxu0 %v5390
    %6811 = vmatpush.bf16.msra.mxu0 %v5383
    %6812 = vmatpush.bf16.msra.mxu0 %v5376
    %6813 = vmatmul.bf16.gmra.mxu0 %v3089
    %v6814 = vpop.f32.mrf.mxu0
    %v6815 = vadd.f32 %v6796, %v6814
    %v6816 = vpop.f32.mrf.mxu0
    %v6817 = vadd.f32 %v6798, %v6816
    %6818 = vmatmul.bf16.gmra.mxu0 %v3097
    %v6819 = vpop.f32.mrf.mxu0
    %v6820 = vadd.f32 %v6801, %v6819
    %v6821 = vpop.f32.mrf.mxu0
    %v6822 = vadd.f32 %v6803, %v6821
    %6823 = vdwg.mxu0
    %6824 = vmatpush.bf16.msra.mxu0 %v5481
    %6825 = vmatpush.bf16.msra.mxu0 %v5474
    %6826 = vmatpush.bf16.msra.mxu0 %v5467
    %6827 = vmatpush.bf16.msra.mxu0 %v5460
    %6828 = vmatpush.bf16.msra.mxu0 %v5453
    %6829 = vmatpush.bf16.msra.mxu0 %v5446
    %6830 = vmatpush.bf16.msra.mxu0 %v5439
    %6831 = vmatpush.bf16.msra.mxu0 %v5432
    %6832 = vmatmul.bf16.gmra.mxu0 %v3090
    %v6833 = vpop.f32.mrf.mxu0
    %v6834 = vadd.f32 %v6815, %v6833
    %v6835 = vpop.f32.mrf.mxu0
    %v6836 = vadd.f32 %v6817, %v6835
    %6837 = vmatmul.bf16.gmra.mxu0 %v3098
    %v6838 = vpop.f32.mrf.mxu0
    %v6839 = vadd.f32 %v6820, %v6838
    %v6840 = vpop.f32.mrf.mxu0
    %v6841 = vadd.f32 %v6822, %v6840
    %6842 = vdwg.mxu0
    %6843 = vmatpush.bf16.msra.mxu0 %v5090
    %6844 = vmatpush.bf16.msra.mxu0 %v5083
    %6845 = vmatpush.bf16.msra.mxu0 %v5076
    %6846 = vmatpush.bf16.msra.mxu0 %v5069
    %6847 = vmatpush.bf16.msra.mxu0 %v5062
    %6848 = vmatpush.bf16.msra.mxu0 %v5055
    %6849 = vmatpush.bf16.msra.mxu0 %v5048
    %6850 = vmatpush.bf16.msra.mxu0 %v5041
    %6851 = vmatmul.bf16.gmra.mxu0 %v3083
    %v6852 = vpop.f32.mrf.mxu0
    %v6853 = vadd.f32 %v3619, %v6852
    %v6854 = vpop.f32.mrf.mxu0
    %v6855 = vadd.f32 %v3619, %v6854
    %6856 = vmatmul.bf16.gmra.mxu0 %v3091
    %v6857 = vpop.f32.mrf.mxu0
    %v6858 = vadd.f32 %v3619, %v6857
    %v6859 = vpop.f32.mrf.mxu0
    %v6860 = vadd.f32 %v3619, %v6859
    %6861 = vdwg.mxu0
    %6862 = vmatpush.bf16.msra.mxu0 %v5146
    %6863 = vmatpush.bf16.msra.mxu0 %v5139
    %6864 = vmatpush.bf16.msra.mxu0 %v5132
    %6865 = vmatpush.bf16.msra.mxu0 %v5125
    %6866 = vmatpush.bf16.msra.mxu0 %v5118
    %6867 = vmatpush.bf16.msra.mxu0 %v5111
    %6868 = vmatpush.bf16.msra.mxu0 %v5104
    %6869 = vmatpush.bf16.msra.mxu0 %v5097
    %6870 = vmatmul.bf16.gmra.mxu0 %v3084
    %v6871 = vpop.f32.mrf.mxu0
    %v6872 = vadd.f32 %v6853, %v6871
    %v6873 = vpop.f32.mrf.mxu0
    %v6874 = vadd.f32 %v6855, %v6873
    %6875 = vmatmul.bf16.gmra.mxu0 %v3092
    %v6876 = vpop.f32.mrf.mxu0
    %v6877 = vadd.f32 %v6858, %v6876
    %v6878 = vpop.f32.mrf.mxu0
    %v6879 = vadd.f32 %v6860, %v6878
    %6880 = vdwg.mxu0
    %6881 = vmatpush.bf16.msra.mxu0 %v5202
    %6882 = vmatpush.bf16.msra.mxu0 %v5195
    %6883 = vmatpush.bf16.msra.mxu0 %v5188
    %6884 = vmatpush.bf16.msra.mxu0 %v5181
    %6885 = vmatpush.bf16.msra.mxu0 %v5174
    %6886 = vmatpush.bf16.msra.mxu0 %v5167
    %6887 = vmatpush.bf16.msra.mxu0 %v5160
    %6888 = vmatpush.bf16.msra.mxu0 %v5153
    %6889 = vmatmul.bf16.gmra.mxu0 %v3085
    %v6890 = vpop.f32.mrf.mxu0
    %v6891 = vadd.f32 %v6872, %v6890
    %v6892 = vpop.f32.mrf.mxu0
    %v6893 = vadd.f32 %v6874, %v6892
    %6894 = vmatmul.bf16.gmra.mxu0 %v3093
    %v6895 = vpop.f32.mrf.mxu0
    %v6896 = vadd.f32 %v6877, %v6895
    %v6897 = vpop.f32.mrf.mxu0
    %v6898 = vadd.f32 %v6879, %v6897
    %6899 = vdwg.mxu0
    %6900 = vmatpush.bf16.msra.mxu0 %v5258
    %6901 = vmatpush.bf16.msra.mxu0 %v5251
    %6902 = vmatpush.bf16.msra.mxu0 %v5244
    %6903 = vmatpush.bf16.msra.mxu0 %v5237
    %6904 = vmatpush.bf16.msra.mxu0 %v5230
    %6905 = vmatpush.bf16.msra.mxu0 %v5223
    %6906 = vmatpush.bf16.msra.mxu0 %v5216
    %6907 = vmatpush.bf16.msra.mxu0 %v5209
    %6908 = vmatmul.bf16.gmra.mxu0 %v3086
    %v6909 = vpop.f32.mrf.mxu0
    %v6910 = vadd.f32 %v6891, %v6909
    %v6911 = vpop.f32.mrf.mxu0
    %v6912 = vadd.f32 %v6893, %v6911
    %6913 = vmatmul.bf16.gmra.mxu0 %v3094
    %v6914 = vpop.f32.mrf.mxu0
    %v6915 = vadd.f32 %v6896, %v6914
    %v6916 = vpop.f32.mrf.mxu0
    %v6917 = vadd.f32 %v6898, %v6916
    %6918 = vdwg.mxu0
    %6919 = vmatpush.bf16.msra.mxu0 %v5314
    %6920 = vmatpush.bf16.msra.mxu0 %v5307
    %6921 = vmatpush.bf16.msra.mxu0 %v5300
    %6922 = vmatpush.bf16.msra.mxu0 %v5293
    %6923 = vmatpush.bf16.msra.mxu0 %v5286
    %6924 = vmatpush.bf16.msra.mxu0 %v5279
    %6925 = vmatpush.bf16.msra.mxu0 %v5272
    %6926 = vmatpush.bf16.msra.mxu0 %v5265
    %6927 = vmatmul.bf16.gmra.mxu0 %v3087
    %v6928 = vpop.f32.mrf.mxu0
    %v6929 = vadd.f32 %v6910, %v6928
    %v6930 = vpop.f32.mrf.mxu0
    %v6931 = vadd.f32 %v6912, %v6930
    %6932 = vmatmul.bf16.gmra.mxu0 %v3095
    %v6933 = vpop.f32.mrf.mxu0
    %v6934 = vadd.f32 %v6915, %v6933
    %v6935 = vpop.f32.mrf.mxu0
    %v6936 = vadd.f32 %v6917, %v6935
    %6937 = vdwg.mxu0
    %6938 = vmatpush.bf16.msra.mxu0 %v5370
    %6939 = vmatpush.bf16.msra.mxu0 %v5363
    %6940 = vmatpush.bf16.msra.mxu0 %v5356
    %6941 = vmatpush.bf16.msra.mxu0 %v5349
    %6942 = vmatpush.bf16.msra.mxu0 %v5342
    %6943 = vmatpush.bf16.msra.mxu0 %v5335
    %6944 = vmatpush.bf16.msra.mxu0 %v5328
    %6945 = vmatpush.bf16.msra.mxu0 %v5321
    %6946 = vmatmul.bf16.gmra.mxu0 %v3088
    %v6947 = vpop.f32.mrf.mxu0
    %v6948 = vadd.f32 %v6929, %v6947
    %v6949 = vpop.f32.mrf.mxu0
    %v6950 = vadd.f32 %v6931, %v6949
    %6951 = vmatmul.bf16.gmra.mxu0 %v3096
    %v6952 = vpop.f32.mrf.mxu0
    %v6953 = vadd.f32 %v6934, %v6952
    %v6954 = vpop.f32.mrf.mxu0
    %v6955 = vadd.f32 %v6936, %v6954
    %6956 = vdwg.mxu0
    %6957 = vmatpush.bf16.msra.mxu0 %v5426
    %6958 = vmatpush.bf16.msra.mxu0 %v5419
    %6959 = vmatpush.bf16.msra.mxu0 %v5412
    %6960 = vmatpush.bf16.msra.mxu0 %v5405
    %6961 = vmatpush.bf16.msra.mxu0 %v5398
    %6962 = vmatpush.bf16.msra.mxu0 %v5391
    %6963 = vmatpush.bf16.msra.mxu0 %v5384
    %6964 = vmatpush.bf16.msra.mxu0 %v5377
    %6965 = vmatmul.bf16.gmra.mxu0 %v3089
    %v6966 = vpop.f32.mrf.mxu0
    %v6967 = vadd.f32 %v6948, %v6966
    %v6968 = vpop.f32.mrf.mxu0
    %v6969 = vadd.f32 %v6950, %v6968
    %6970 = vmatmul.bf16.gmra.mxu0 %v3097
    %v6971 = vpop.f32.mrf.mxu0
    %v6972 = vadd.f32 %v6953, %v6971
    %v6973 = vpop.f32.mrf.mxu0
    %v6974 = vadd.f32 %v6955, %v6973
    %6975 = vdwg.mxu0
    %6976 = vmatpush.bf16.msra.mxu0 %v5482
    %6977 = vmatpush.bf16.msra.mxu0 %v5475
    %6978 = vmatpush.bf16.msra.mxu0 %v5468
    %6979 = vmatpush.bf16.msra.mxu0 %v5461
    %6980 = vmatpush.bf16.msra.mxu0 %v5454
    %6981 = vmatpush.bf16.msra.mxu0 %v5447
    %6982 = vmatpush.bf16.msra.mxu0 %v5440
    %6983 = vmatpush.bf16.msra.mxu0 %v5433
    %6984 = vmatmul.bf16.gmra.mxu0 %v3090
    %v6985 = vpop.f32.mrf.mxu0
    %v6986 = vadd.f32 %v6967, %v6985
    %v6987 = vpop.f32.mrf.mxu0
    %v6988 = vadd.f32 %v6969, %v6987
    %6989 = vmatmul.bf16.gmra.mxu0 %v3098
    %v6990 = vpop.f32.mrf.mxu0
    %v6991 = vadd.f32 %v6972, %v6990
    %v6992 = vpop.f32.mrf.mxu0
    %v6993 = vadd.f32 %v6974, %v6992
    %6994 = vdwg.mxu0
    %v6995 = vtanh.pop %v6074
    %v6996 = vtanh.pop %v6226
    %v6997 = vtanh.pop %v6378
    %v6998 = vtanh.pop %v6530
    %v6999 = vtanh.pop %v6682
    %v7000 = vtanh.pop %v6834
    %v7001 = vtanh.pop %v6986
    %v7002 = vtanh.pop %v6076
    %v7003 = vtanh.pop %v6228
    %v7004 = vtanh.pop %v6380
    %v7005 = vtanh.pop %v6532
    %v7006 = vtanh.pop %v6684
    %v7007 = vtanh.pop %v6836
    %v7008 = vtanh.pop %v6988
    %v7009 = vtanh.pop %v6079
    %v7010 = vtanh.pop %v6231
    %v7011 = vtanh.pop %v6383
    %v7012 = vtanh.pop %v6535
    %v7013 = vtanh.pop %v6687
    %v7014 = vtanh.pop %v6839
    %v7015 = vtanh.pop %v6991
    %v7016 = vtanh.pop %v6081
    %v7017 = vtanh.pop %v6233
    %v7018 = vtanh.pop %v6385
    %v7019 = vtanh.pop %v6537
    %v7020 = vtanh.pop %v6689
    %v7021 = vtanh.pop %v6841
    %v7022 = vtanh.pop %v6993
    %7023 = vst [vmem:[%s9] sm:$0xff] %v6995
    %7024 = vst [vmem:[%s9 + $0x8] sm:$0xff] %v6996
    %7025 = vst [vmem:[%s9 + $0x10] sm:$0xff] %v6997
    %7026 = vst [vmem:[%s9 + $0x18] sm:$0xff] %v6998
    %7027 = vst [vmem:[%s9 + $0x20] sm:$0xff] %v6999
    %7028 = vst [vmem:[%s9 + $0x28] sm:$0xff] %v7000
    %vm7029 = vcmask 130048
    %7030 = vst.msk [vmem:[%s9 + $0x30] sm:$0xff] %vm7029, %v7001
    %7031 = vst [vmem:[%s9 + $0x38] sm:$0xff] %v7002
    %7032 = vst [vmem:[%s9 + $0x40] sm:$0xff] %v7003
    %7033 = vst [vmem:[%s9 + $0x48] sm:$0xff] %v7004
    %7034 = vst [vmem:[%s9 + $0x50] sm:$0xff] %v7005
    %7035 = vst [vmem:[%s9 + $0x58] sm:$0xff] %v7006
    %7036 = vst [vmem:[%s9 + $0x60] sm:$0xff] %v7007
    %7037 = vst.msk [vmem:[%s9 + $0x68] sm:$0xff] %vm7029, %v7008
    %7038 = vst [vmem:[%s9 + $0x70] sm:$0xff] %v7009
    %7039 = vst [vmem:[%s9 + $0x78] sm:$0xff] %v7010
    %7040 = vst [vmem:[%s9 + $0x80] sm:$0xff] %v7011
    %7041 = vst [vmem:[%s9 + $0x88] sm:$0xff] %v7012
    %7042 = vst [vmem:[%s9 + $0x90] sm:$0xff] %v7013
    %7043 = vst [vmem:[%s9 + $0x98] sm:$0xff] %v7014
    %7044 = vst.msk [vmem:[%s9 + $0xa0] sm:$0xff] %vm7029, %v7015
    %7045 = vst [vmem:[%s9 + $0xa8] sm:$0xff] %v7016
    %7046 = vst [vmem:[%s9 + $0xb0] sm:$0xff] %v7017
    %7047 = vst [vmem:[%s9 + $0xb8] sm:$0xff] %v7018
    %7048 = vst [vmem:[%s9 + $0xc0] sm:$0xff] %v7019
    %7049 = vst [vmem:[%s9 + $0xc8] sm:$0xff] %v7020
    %7050 = vst [vmem:[%s9 + $0xd0] sm:$0xff] %v7021
    %7051 = vst.msk [vmem:[%s9 + $0xd8] sm:$0xff] %vm7029, %v7022
    // Predicated region
    $region74: #{_lambda_.1} parent=1 // pred_check
      _
    $region75: #{_lambda_.1} parent=1 // pred_check_branch
      %7053 = sbr.rel (0) target = $region77
    $region76: #{_lambda_.1} parent=1 // pred_region
      _
    $region77: #{_lambda_.1} parent=1 // pred_fallthru
      _
    // Predicated region
    $region78: #{_lambda_.1} parent=1 // pred_check
      _
    $region79: #{_lambda_.1} parent=1 // pred_check_branch
      %7055 = sbr.rel (0) target = $region81
    $region80: #{_lambda_.1} parent=1 // pred_region
      _
    $region81: #{_lambda_.1} parent=1 // pred_fallthru
      _
    %7056 = vsyncpa [#allocation3], 1
    %7057 = vsyncpa [#allocation5], 1
    %7058 = vsyncpa [#allocation8], 1
    %7059 = vsyncpa [#allocation11], 1
    %7060 = vsyncpa [#allocation14], 1

</llo_original>
